<compile_context>
chip_gen: v5e
topology: v5e:2x2
jax: 0.10.0
libtpu: 0.0.40
codegen_flags: <defaults>
</compile_context>

<pallas_src>
import functools

import numpy as np
import jax
import jax.numpy as jnp
from jax.experimental import pallas as pl
from jax.experimental.pallas import tpu as pltpu

_VMEM = pl.BlockSpec(memory_space=pltpu.MemorySpace.VMEM)
_BN_EPS = 1e-5
# Raise the scoped VMEM limit (v5e defaults to 16 MiB); safe on v6e/v7x as well.
_COMPILER_PARAMS = pltpu.CompilerParams(vmem_limit_bytes=32 * 1024 * 1024)


# ----------------------------------------------------------------------------
# In-kernel helpers (traced inside Pallas kernel bodies)
# ----------------------------------------------------------------------------
def _renorm(w, max_norm=1.0):
    """nn.Embedding(max_norm=True) lookup-time renorm (all rows are looked up)."""
    n = jnp.sqrt(jnp.sum(w * w, axis=1, keepdims=True))
    return w * jnp.where(n > max_norm, max_norm / (n + 1e-7), 1.0)


def _bn_train(x, gamma, beta):
    """BatchNorm1d in training mode (biased batch statistics)."""
    mu = jnp.mean(x, axis=0, keepdims=True)
    var = jnp.mean(jnp.square(x - mu), axis=0, keepdims=True)
    return (x - mu) * jax.lax.rsqrt(var + _BN_EPS) * gamma + beta


def _bn_train_2block(z0, z1, rep, gamma, beta):
    """Training BatchNorm over a batch made of block z0 (x1) and block z1 (x rep).

    Exactly reproduces the full-batch statistics over the (1 + rep)*N duplicated
    rows without materializing them (rep = num_graphs - 1, a static int)."""
    total = float(z0.shape[0] + rep * z1.shape[0])
    mu = (jnp.sum(z0, axis=0, keepdims=True)
          + rep * jnp.sum(z1, axis=0, keepdims=True)) / total
    var = (jnp.sum(jnp.square(z0 - mu), axis=0, keepdims=True)
           + rep * jnp.sum(jnp.square(z1 - mu), axis=0, keepdims=True)) / total
    scale = jax.lax.rsqrt(var + _BN_EPS) * gamma
    return (z0 - mu) * scale + beta, (z1 - mu) * scale + beta


def _mlp2(x, w1, b1, g1, be1, w2, b2, g2, be2):
    """MLP([a, b, c]) == Linear -> BN -> ReLU -> Linear -> BN (training BN)."""
    h = jnp.dot(x, w1, preferred_element_type=jnp.float32) + b1
    h = jnp.maximum(_bn_train(h, g1, be1), 0.0)
    h = jnp.dot(h, w2, preferred_element_type=jnp.float32) + b2
    return _bn_train(h, g2, be2)


# ----------------------------------------------------------------------------
# Pallas kernels (full-array VMEM single-block at these shapes)
# ----------------------------------------------------------------------------
def _branches_kernel(*refs, num_graphs, n_pos_layers, n_sim_layers):
    """Both graph branches fused into one launch, two outputs.

    Output 0: the two distinct (N, H) row blocks of the (G*N, H) base embedding
      after emb_trans_v2.  Block 0 = rows of graph 0 (sees coexpression edges);
      block 1 = rows of graphs >= 1 (gcn_norm self-loops only -> identity
      aggregation), exactly as the reference's unbatched edge_index implies.
    Output 1: pert_fuse(per-tracked-graph pert sum) of shape (T2, H)."""
    (gene_ref, pos_ref, ac_ref, sgw_ref, sgb_ref, bng_ref, bnb_ref,
     mw1, mb1, mg1, mbe1, mw2, mb2, mg2, mbe2,
     pert_ref, ago_ref, simw_ref, simb_ref, sel_ref,
     fw1, fb1, fg1, fbe1, fw2, fb2, fg2, fbe2,
     base_out_ref, etot_out_ref) = refs
    rep = num_graphs - 1

    # --- gene / coexpression branch ---------------------------------------
    # bn_emb + ReLU: the reference batch is G identical copies of the gene
    # table, so its batch statistics equal the stats over the N distinct rows.
    base = jnp.maximum(
        _bn_train(_renorm(gene_ref[...]), bng_ref[...], bnb_ref[...]), 0.0)

    # SGConv(K=1) stack: (A_norm @ X) @ W + b, ReLU between layers.
    p0 = _renorm(pos_ref[...])
    p1 = p0
    a = ac_ref[...]
    for l in range(n_pos_layers):
        w, b = sgw_ref[l], sgb_ref[l]
        p0 = jnp.dot(jnp.dot(a, p0, preferred_element_type=jnp.float32), w,
                     preferred_element_type=jnp.float32) + b
        p1 = jnp.dot(p1, w, preferred_element_type=jnp.float32) + b
        if l < n_pos_layers - 1:
            p0 = jnp.maximum(p0, 0.0)
            p1 = jnp.maximum(p1, 0.0)

    b0 = base + 0.2 * p0
    b1 = base + 0.2 * p1

    # emb_trans_v2 with exact full-batch (G*N-row) BN statistics.
    z0 = jnp.dot(b0, mw1[...], preferred_element_type=jnp.float32) + mb1[...]
    z1 = jnp.dot(b1, mw1[...], preferred_element_type=jnp.float32) + mb1[...]
    z0, z1 = _bn_train_2block(z0, z1, rep, mg1[...], mbe1[...])
    z0, z1 = jnp.maximum(z0, 0.0), jnp.maximum(z1, 0.0)
    z0 = jnp.dot(z0, mw2[...], preferred_element_type=jnp.float32) + mb2[...]
    z1 = jnp.dot(z1, mw2[...], preferred_element_type=jnp.float32) + mb2[...]
    z0, z1 = _bn_train_2block(z0, z1, rep, mg2[...], mbe2[...])
    base_out_ref[0] = z0
    base_out_ref[1] = z1

    # --- perturbation / GO branch ------------------------------------------
    p = _renorm(pert_ref[...])
    ago = ago_ref[...]
    for l in range(n_sim_layers):
        p = jnp.dot(jnp.dot(ago, p, preferred_element_type=jnp.float32),
                    simw_ref[l], preferred_element_type=jnp.float32) + simb_ref[l]
        if l < n_sim_layers - 1:
            p = jnp.maximum(p, 0.0)
    # `sel` already encodes the reference's torch.stack(values * 2) duplication
    # for the single-tracked-graph case and the per-graph summation of perts.
    s = jnp.dot(sel_ref[...], p, preferred_element_type=jnp.float32)
    etot_out_ref[...] = _mlp2(s, fw1[...], fb1[...], fg1[...], fbe1[...],
                              fw2[...], fb2[...], fg2[...], fbe2[...])


def _head_kernel(*refs, num_graphs, num_genes):
    """Back end fused into one launch.

    pert add + bn_pert_base/ReLU + recovery_w MLP + per-gene decoder-1 +
    cross_gene_state MLP + per-gene decoder-2 + residual.  The (G*N, 2H)/(G*N, H)
    recovery activations and the decoder-1 result never leave VMEM."""
    (base2_ref, place_ref, etot_ref, pbg_ref, pbb_ref,
     rw1, rb1, rg1, rbe1, rw2, rb2, rg2, rbe2,
     iw1t_ref, ib1r_ref,
     cw1, cb1, cg1, cbe1, cw2, cb2, cg2, cbe2,
     wg_ref, wc_ref, ib2_ref, x_ref, o_ref) = refs
    G, N = num_graphs, num_genes

    # Per-graph perturbation additions: pert_add = place @ pert_fuse(...).
    padd = jnp.dot(place_ref[...], etot_ref[...],
                   preferred_element_type=jnp.float32)               # (G, H)
    blk0 = base2_ref[0]
    blk1 = base2_ref[1] if G > 1 else blk0
    rows = [(blk0 if g == 0 else blk1) + padd[g:g + 1, :] for g in range(G)]
    z = rows[0] if G == 1 else jnp.concatenate(rows, axis=0)         # (G*N, H)

    # bn_pert_base (full G*N-row batch statistics) + transform(ReLU).
    z = jnp.maximum(_bn_train(z, pbg_ref[...], pbb_ref[...]), 0.0)

    # recovery_w MLP.
    rec = _mlp2(z, rw1[...], rb1[...], rg1[...], rbe1[...],
                rw2[...], rb2[...], rg2[...], rbe2[...])             # (G*N, H)

    # Per-gene decoder 1, produced lane-dense (genes on the lane axis):
    #   out1[g, n] = sum_h rec[g*N+n, h] * indv_w1[n, h, 0] + indv_b1[n, 0].
    w1t = iw1t_ref[...]                                              # (H, N)
    b1r = ib1r_ref[...]                                              # (1, N)
    out_rows = []
    for g in range(G):
        m = rec[g * N:(g + 1) * N, :].T                              # (H, N)
        out_rows.append(jnp.sum(m * w1t, axis=0, keepdims=True) + b1r)
    out1 = out_rows[0] if G == 1 else jnp.concatenate(out_rows, axis=0)  # (G, N)

    # cross_gene_state MLP + per-gene decoder 2 + residual with the input.
    cross = _mlp2(out1, cw1[...], cb1[...], cg1[...], cbe1[...],
                  cw2[...], cb2[...], cg2[...], cbe2[...])           # (G, H)
    o_ref[...] = (out1 * wg_ref[...]
                  + jnp.dot(cross, wc_ref[...], preferred_element_type=jnp.float32)
                  + ib2_ref[...] + x_ref[...])                       # (G, N)


# ----------------------------------------------------------------------------
# pallas_call wrapper and parameter plumbing
# ----------------------------------------------------------------------------
def _pcall(kernel, out_shape, *args, **static):
    fn = functools.partial(kernel, **static) if static else kernel
    multi = isinstance(out_shape, (tuple, list))
    out_specs = tuple(_VMEM for _ in out_shape) if multi else _VMEM
    return pl.pallas_call(
        fn,
        out_shape=out_shape,
        in_specs=[_VMEM] * len(args),
        out_specs=out_specs,
        compiler_params=_COMPILER_PARAMS,
    )(*args)


def _row(v):
    return v.reshape(1, -1)


def _mlp_args(p):
    return (p['w1'], _row(p['b1']), _row(p['g1']), _row(p['be1']),
            p['w2'], _row(p['b2']), _row(p['g2']), _row(p['be2']))


# ----------------------------------------------------------------------------
# Jitted forward (2 pallas_calls, all glue fused by XLA)
# ----------------------------------------------------------------------------
@jax.jit
def _gears_forward_jit(params, x, sel, place):
    N, H = params['gene_emb'].shape
    G = place.shape[0]
    T2 = sel.shape[0]

    # (1) both graph branches -> 2 distinct base-emb blocks + pert_fuse output.
    base2, emb_total = _pcall(
        _branches_kernel,
        (jax.ShapeDtypeStruct((2, N, H), jnp.float32),
         jax.ShapeDtypeStruct((T2, H), jnp.float32)),
        params['gene_emb'], params['emb_pos'], params['A_coex'],
        params['sgc_pos_w'], params['sgc_pos_b'],
        _row(params['bn_emb_g']), _row(params['bn_emb_b']),
        *_mlp_args(params['emb_trans_v2']),
        params['pert_emb'], params['A_go'],
        params['sgc_sim_w'], params['sgc_sim_b'], sel,
        *_mlp_args(params['pert_fuse']),
        num_graphs=G,
        n_pos_layers=params['sgc_pos_w'].shape[0],
        n_sim_layers=params['sgc_sim_w'].shape[0])

    # (2) pert add + bn_pert_base + recovery_w + both per-gene decoders +
    #     cross_gene_state + residual -> final (G, N), genes on the lane axis.
    w2 = params['indv_w2'][0]                                        # (N, H+1)
    final = _pcall(
        _head_kernel, jax.ShapeDtypeStruct((G, N), jnp.float32),
        base2, place, emb_total,
        _row(params['bn_pert_base_g']), _row(params['bn_pert_base_b']),
        *_mlp_args(params['recovery_w']),
        params['indv_w1'][:, :, 0].T,                                # (H, N)
        params['indv_b1'].T,                                         # (1, N)
        *_mlp_args(params['cross_gene_state']),
        w2[:, :1].T, w2[:, 1:].T, params['indv_b2'],
        x.reshape(G, N).astype(jnp.float32),
        num_graphs=G, num_genes=N)
    return final
    # TODO(synk): uncertainty head (uncertainty_w MLP) disabled (uncertainty=False).


# ----------------------------------------------------------------------------
# Host-side glue (graph normalization, pert_idx dict bookkeeping)
# ----------------------------------------------------------------------------
def gcn_norm_dense(edge_index, edge_weight, num_nodes):
    """torch_geometric gcn_norm (add_self_loops=True) as dense adjacency with
    out = A @ x (A[target, source] = norm)."""
    row = jnp.concatenate([edge_index[0], jnp.arange(num_nodes, dtype=jnp.int32)])
    col = jnp.concatenate([edge_index[1], jnp.arange(num_nodes, dtype=jnp.int32)])
    w = jnp.concatenate([edge_weight.astype(jnp.float32),
                         jnp.ones((num_nodes,), jnp.float32)])
    deg = jnp.zeros((num_nodes,), jnp.float32).at[col].add(w)
    dinv = jnp.where(deg > 0, 1.0 / jnp.sqrt(deg), 0.0)
    norm = dinv[row] * w * dinv[col]
    return jnp.zeros((num_nodes, num_nodes), jnp.float32).at[col, row].add(norm)


def prepare_graphs(params):
    """Precompute the gcn-normalized adjacencies once (not per forward step).
    TODO(synk): at real GEARS sizes keep these sparse (CSR) and gather rows in
    the SGConv kernels via PrefetchScalarGridSpec instead of dense matmuls."""
    params = dict(params)
    params['A_coex'] = gcn_norm_dense(
        params['G_coexpress'], params['G_coexpress_weight'],
        params['gene_emb'].shape[0])
    params['A_go'] = gcn_norm_dense(
        params['G_go'], params['G_go_weight'], params['pert_emb'].shape[0])
    return params


def _build_pert_selection(pert_idx, num_graphs, num_perts):
    """Mirror the reference's pert_index / pert_track dict bookkeeping.

    sel   (T2, P): row t sums the pert embeddings of tracked graph t (row 0 is
                   duplicated when only one graph is perturbed, matching
                   torch.stack(values * 2) feeding the pert_fuse BatchNorm).
    place (G, T2): place[g, t] = 1 if tracked graph t == g, so that
                   pert_add = place @ pert_fuse(sel @ pert_global_emb)."""
    keys, rows = [], {}
    for gi, plist in enumerate(pert_idx):
        for pj in plist:
            if pj == -1:
                continue
            if gi not in rows:
                rows[gi] = np.zeros((num_perts,), np.float32)
                keys.append(gi)
            rows[gi][pj] += 1.0
    t = len(keys)
    t2 = max(t, 2)
    sel = np.zeros((t2, num_perts), np.float32)
    place = np.zeros((num_graphs, t2), np.float32)
    for i, k in enumerate(keys):
        sel[i] = rows[k]
        place[k, i] = 1.0
    if t == 1:
        sel[1] = sel[0]
    return sel, place


def gears_forward(params, x, pert_idx, batch):
    """GEARSNetwork.forward (train mode, uncertainty=False, no_perturb=False)."""
    num_graphs = int(np.unique(np.asarray(batch)).shape[0])
    num_perts = int(params['pert_emb'].shape[0])
    sel, place = _build_pert_selection(pert_idx, num_graphs, num_perts)
    return _gears_forward_jit(params, x, jnp.asarray(sel), jnp.asarray(place))


# ----------------------------------------------------------------------------
# Deterministic parameter construction
# ----------------------------------------------------------------------------
def init_params(key, H, N, P, *, n_pos_layers=1, n_sim_layers=1):
    keys = iter(jax.random.split(key, 64))

    def rnd(shape, scale=0.1):
        return scale * jax.random.normal(next(keys), shape, dtype=jnp.float32)

    def mlp(sizes):
        return {'w1': rnd((sizes[0], sizes[1])), 'b1': rnd((sizes[1],), 0.05),
                'g1': jnp.ones((sizes[1],), jnp.float32),
                'be1': jnp.zeros((sizes[1],), jnp.float32),
                'w2': rnd((sizes[1], sizes[2])), 'b2': rnd((sizes[2],), 0.05),
                'g2': jnp.ones((sizes[2],), jnp.float32),
                'be2': jnp.zeros((sizes[2],), jnp.float32)}

    params = {
        'gene_emb': jax.random.normal(next(keys), (N, H), jnp.float32),
        'emb_pos': jax.random.normal(next(keys), (N, H), jnp.float32),
        'pert_emb': jax.random.normal(next(keys), (P, H), jnp.float32),
        'bn_emb_g': jnp.ones((H,), jnp.float32),
        'bn_emb_b': jnp.zeros((H,), jnp.float32),
        'bn_pert_base_g': jnp.ones((H,), jnp.float32),
        'bn_pert_base_b': jnp.zeros((H,), jnp.float32),
        'emb_trans_v2': mlp([H, H, H]),
        'pert_fuse': mlp([H, H, H]),
        'recovery_w': mlp([H, 2 * H, H]),
        'cross_gene_state': mlp([N, H, H]),
        # SGConv linear weights stored pre-transposed (in, out); biases (1, out).
        'sgc_pos_w': rnd((n_pos_layers, H, H)),
        'sgc_pos_b': rnd((n_pos_layers, 1, H), 0.05),
        'sgc_sim_w': rnd((n_sim_layers, H, H)),
        'sgc_sim_b': rnd((n_sim_layers, 1, H), 0.05),
        'indv_w1': rnd((N, H, 1), 0.3),
        'indv_b1': rnd((N, 1), 0.3),
        'indv_w2': rnd((1, N, H + 1), 0.3),
        'indv_b2': rnd((1, N), 0.3),
    }

    # deterministic sparse graphs (edge_index (2,E) int32, weights (E,) f32)
    e_coex = np.array([[i, (i + 1) % N] for i in range(N)]
                      + [[i, (i + 5) % N] for i in range(N)], dtype=np.int32).T
    params['G_coexpress'] = jnp.asarray(e_coex)
    params['G_coexpress_weight'] = jax.random.uniform(
        next(keys), (e_coex.shape[1],), jnp.float32)

    e_go = np.array([[i, (i + 1) % P] for i in range(P)]
                    + [[i, (i + 3) % P] for i in range(P)], dtype=np.int32).T
    params['G_go'] = jnp.asarray(e_go)
    params['G_go_weight'] = jax.random.uniform(
        next(keys), (e_go.shape[1],), jnp.float32)
    return params


# ----------------------------------------------------------------------------
if __name__ == "__main__":
    H, N, P, G = 32, 16, 8, 2      # hidden, num_genes, num_perts, num_graphs
    key = jax.random.PRNGKey(0)
    kp, kx = jax.random.split(key)

    params = init_params(kp, H, N, P, n_pos_layers=1, n_sim_layers=1)
    params = prepare_graphs(params)                             # once, not per step

    x = jax.random.normal(kx, (G * N, 1), dtype=jnp.float32)    # gene expression
    batch = np.repeat(np.arange(G), N)                          # graph id per node
    pert_idx = [[1, -1], [3, 5]]                                # perts per graph

    out = gears_forward(params, x, pert_idx, batch)
    out = jax.block_until_ready(out)

    assert out.shape == (G, N), out.shape
    assert bool(jnp.all(jnp.isfinite(out)))
    print("KERNEL_OK")
</pallas_src>

<mosaic_0001>
module attributes {stable_mosaic.version = 11 : i64} {
  func.func @_branches_kernel(%arg0: memref<16x32xf32, #tpu.memory_space<vmem>>, %arg1: memref<16x32xf32, #tpu.memory_space<vmem>>, %arg2: memref<16x16xf32, #tpu.memory_space<vmem>>, %arg3: memref<1x32x32xf32, #tpu.memory_space<vmem>>, %arg4: memref<1x1x32xf32, #tpu.memory_space<vmem>>, %arg5: memref<1x32xf32, #tpu.memory_space<vmem>>, %arg6: memref<1x32xf32, #tpu.memory_space<vmem>>, %arg7: memref<32x32xf32, #tpu.memory_space<vmem>>, %arg8: memref<1x32xf32, #tpu.memory_space<vmem>>, %arg9: memref<1x32xf32, #tpu.memory_space<vmem>>, %arg10: memref<1x32xf32, #tpu.memory_space<vmem>>, %arg11: memref<32x32xf32, #tpu.memory_space<vmem>>, %arg12: memref<1x32xf32, #tpu.memory_space<vmem>>, %arg13: memref<1x32xf32, #tpu.memory_space<vmem>>, %arg14: memref<1x32xf32, #tpu.memory_space<vmem>>, %arg15: memref<8x32xf32, #tpu.memory_space<vmem>>, %arg16: memref<8x8xf32, #tpu.memory_space<vmem>>, %arg17: memref<1x32x32xf32, #tpu.memory_space<vmem>>, %arg18: memref<1x1x32xf32, #tpu.memory_space<vmem>>, %arg19: memref<2x8xf32, #tpu.memory_space<vmem>>, %arg20: memref<32x32xf32, #tpu.memory_space<vmem>>, %arg21: memref<1x32xf32, #tpu.memory_space<vmem>>, %arg22: memref<1x32xf32, #tpu.memory_space<vmem>>, %arg23: memref<1x32xf32, #tpu.memory_space<vmem>>, %arg24: memref<32x32xf32, #tpu.memory_space<vmem>>, %arg25: memref<1x32xf32, #tpu.memory_space<vmem>>, %arg26: memref<1x32xf32, #tpu.memory_space<vmem>>, %arg27: memref<1x32xf32, #tpu.memory_space<vmem>>, %arg28: memref<2x16x32xf32, #tpu.memory_space<vmem>>, %arg29: memref<2x32xf32, #tpu.memory_space<vmem>>) attributes {dimension_semantics = [], scalar_prefetch = 0 : i64, scratch_operands = 0 : i64, tpu.core_type = #tpu.core_type<tc>} {
    %c0 = arith.constant 0 : index
    %c0_0 = arith.constant 0 : index
    %0 = vector.load %arg0[%c0, %c0_0] : memref<16x32xf32, #tpu.memory_space<vmem>>, vector<16x32xf32>
    %1 = arith.mulf %0, %0 : vector<16x32xf32>
    %cst = arith.constant dense<0.000000e+00> : vector<16xf32>
    %2 = vector.multi_reduction <add>, %1, %cst [1] : vector<16x32xf32> to vector<16xf32>
    %3 = vector.shape_cast %2 : vector<16xf32> to vector<16x1xf32>
    %4 = math.sqrt %3 : vector<16x1xf32>
    %cst_1 = arith.constant 1.000000e+00 : f32
    %5 = vector.broadcast %cst_1 : f32 to vector<16x1xf32>
    %6 = arith.cmpf ogt, %4, %5 : vector<16x1xf32>
    %cst_2 = arith.constant 1.000000e-07 : f32
    %7 = vector.broadcast %cst_2 : f32 to vector<16x1xf32>
    %8 = arith.addf %4, %7 : vector<16x1xf32>
    %cst_3 = arith.constant 1.000000e+00 : f32
    %9 = vector.broadcast %cst_3 : f32 to vector<16x1xf32>
    %10 = arith.divf %9, %8 : vector<16x1xf32>
    %cst_4 = arith.constant 1.000000e+00 : f32
    %11 = vector.broadcast %cst_4 : f32 to vector<16x1xf32>
    %12 = arith.select %6, %10, %11 : vector<16x1xi1>, vector<16x1xf32>
    %13 = vector.broadcast %12 : vector<16x1xf32> to vector<16x32xf32>
    %14 = arith.mulf %0, %13 : vector<16x32xf32>
    %c0_5 = arith.constant 0 : index
    %c0_6 = arith.constant 0 : index
    %15 = vector.load %arg5[%c0_5, %c0_6] : memref<1x32xf32, #tpu.memory_space<vmem>>, vector<1x32xf32>
    %c0_7 = arith.constant 0 : index
    %c0_8 = arith.constant 0 : index
    %16 = vector.load %arg6[%c0_7, %c0_8] : memref<1x32xf32, #tpu.memory_space<vmem>>, vector<1x32xf32>
    %cst_9 = arith.constant dense<0.000000e+00> : vector<32xf32>
    %17 = vector.multi_reduction <add>, %14, %cst_9 [0] : vector<16x32xf32> to vector<32xf32>
    %18 = vector.shape_cast %17 : vector<32xf32> to vector<1x32xf32>
    %cst_10 = arith.constant 1.600000e+01 : f32
    %19 = vector.broadcast %cst_10 : f32 to vector<1x32xf32>
    %20 = arith.divf %18, %19 : vector<1x32xf32>
    %21 = vector.broadcast %20 : vector<1x32xf32> to vector<16x32xf32>
    %22 = arith.subf %14, %21 : vector<16x32xf32>
    %23 = arith.mulf %22, %22 : vector<16x32xf32>
    %cst_11 = arith.constant dense<0.000000e+00> : vector<32xf32>
    %24 = vector.multi_reduction <add>, %23, %cst_11 [0] : vector<16x32xf32> to vector<32xf32>
    %25 = vector.shape_cast %24 : vector<32xf32> to vector<1x32xf32>
    %cst_12 = arith.constant 1.600000e+01 : f32
    %26 = vector.broadcast %cst_12 : f32 to vector<1x32xf32>
    %27 = arith.divf %25, %26 : vector<1x32xf32>
    %28 = vector.broadcast %20 : vector<1x32xf32> to vector<16x32xf32>
    %29 = arith.subf %14, %28 : vector<16x32xf32>
    %cst_13 = arith.constant 9.99999974E-6 : f32
    %30 = vector.broadcast %cst_13 : f32 to vector<1x32xf32>
    %31 = arith.addf %27, %30 : vector<1x32xf32>
    %32 = math.rsqrt %31 : vector<1x32xf32>
    %33 = vector.broadcast %32 : vector<1x32xf32> to vector<16x32xf32>
    %34 = arith.mulf %29, %33 : vector<16x32xf32>
    %35 = vector.broadcast %15 : vector<1x32xf32> to vector<16x32xf32>
    %36 = arith.mulf %34, %35 : vector<16x32xf32>
    %37 = vector.broadcast %16 : vector<1x32xf32> to vector<16x32xf32>
    %38 = arith.addf %36, %37 : vector<16x32xf32>
    %cst_14 = arith.constant 0.000000e+00 : f32
    %39 = vector.broadcast %cst_14 : f32 to vector<16x32xf32>
    %40 = arith.maximumf %38, %39 : vector<16x32xf32>
    %c0_15 = arith.constant 0 : index
    %c0_16 = arith.constant 0 : index
    %41 = vector.load %arg1[%c0_15, %c0_16] : memref<16x32xf32, #tpu.memory_space<vmem>>, vector<16x32xf32>
    %42 = arith.mulf %41, %41 : vector<16x32xf32>
    %cst_17 = arith.constant dense<0.000000e+00> : vector<16xf32>
    %43 = vector.multi_reduction <add>, %42, %cst_17 [1] : vector<16x32xf32> to vector<16xf32>
    %44 = vector.shape_cast %43 : vector<16xf32> to vector<16x1xf32>
    %45 = math.sqrt %44 : vector<16x1xf32>
    %cst_18 = arith.constant 1.000000e+00 : f32
    %46 = vector.broadcast %cst_18 : f32 to vector<16x1xf32>
    %47 = arith.cmpf ogt, %45, %46 : vector<16x1xf32>
    %cst_19 = arith.constant 1.000000e-07 : f32
    %48 = vector.broadcast %cst_19 : f32 to vector<16x1xf32>
    %49 = arith.addf %45, %48 : vector<16x1xf32>
    %cst_20 = arith.constant 1.000000e+00 : f32
    %50 = vector.broadcast %cst_20 : f32 to vector<16x1xf32>
    %51 = arith.divf %50, %49 : vector<16x1xf32>
    %cst_21 = arith.constant 1.000000e+00 : f32
    %52 = vector.broadcast %cst_21 : f32 to vector<16x1xf32>
    %53 = arith.select %47, %51, %52 : vector<16x1xi1>, vector<16x1xf32>
    %54 = vector.broadcast %53 : vector<16x1xf32> to vector<16x32xf32>
    %55 = arith.mulf %41, %54 : vector<16x32xf32>
    %c0_22 = arith.constant 0 : index
    %c0_23 = arith.constant 0 : index
    %56 = vector.load %arg2[%c0_22, %c0_23] : memref<16x16xf32, #tpu.memory_space<vmem>>, vector<16x16xf32>
    %c0_24 = arith.constant 0 : index
    %c0_25 = arith.constant 0 : index
    %c0_26 = arith.constant 0 : index
    %57 = vector.load %arg3[%c0_24, %c0_25, %c0_26] : memref<1x32x32xf32, #tpu.memory_space<vmem>>, vector<1x32x32xf32>
    %58 = vector.shape_cast %57 : vector<1x32x32xf32> to vector<32x32xf32>
    %c0_27 = arith.constant 0 : index
    %c0_28 = arith.constant 0 : index
    %c0_29 = arith.constant 0 : index
    %59 = vector.load %arg4[%c0_27, %c0_28, %c0_29] : memref<1x1x32xf32, #tpu.memory_space<vmem>>, vector<1x1x32xf32>
    %60 = vector.shape_cast %59 : vector<1x1x32xf32> to vector<1x32xf32>
    %cst_30 = arith.constant dense<0.000000e+00> : vector<16x32xf32>
    %61 = tpu.matmul %56, %55, %cst_30 {dimension_numbers = #tpu.dot_dimension_numbers<[1], [0], [0], [1], [0, 0, 1, 1], [], []>} : vector<16x16xf32>, vector<16x32xf32>, vector<16x32xf32> -> vector<16x32xf32>
    %cst_31 = arith.constant dense<0.000000e+00> : vector<16x32xf32>
    %62 = tpu.matmul %61, %58, %cst_31 {dimension_numbers = #tpu.dot_dimension_numbers<[1], [0], [0], [1], [0, 0, 1, 1], [], []>} : vector<16x32xf32>, vector<32x32xf32>, vector<16x32xf32> -> vector<16x32xf32>
    %63 = vector.broadcast %60 : vector<1x32xf32> to vector<16x32xf32>
    %64 = arith.addf %62, %63 : vector<16x32xf32>
    %cst_32 = arith.constant dense<0.000000e+00> : vector<16x32xf32>
    %65 = tpu.matmul %55, %58, %cst_32 {dimension_numbers = #tpu.dot_dimension_numbers<[1], [0], [0], [1], [0, 0, 1, 1], [], []>} : vector<16x32xf32>, vector<32x32xf32>, vector<16x32xf32> -> vector<16x32xf32>
    %66 = vector.broadcast %60 : vector<1x32xf32> to vector<16x32xf32>
    %67 = arith.addf %65, %66 : vector<16x32xf32>
    %cst_33 = arith.constant 2.000000e-01 : f32
    %68 = vector.broadcast %cst_33 : f32 to vector<16x32xf32>
    %69 = arith.mulf %68, %64 : vector<16x32xf32>
    %70 = arith.addf %40, %69 : vector<16x32xf32>
    %cst_34 = arith.constant 2.000000e-01 : f32
    %71 = vector.broadcast %cst_34 : f32 to vector<16x32xf32>
    %72 = arith.mulf %71, %67 : vector<16x32xf32>
    %73 = arith.addf %40, %72 : vector<16x32xf32>
    %c0_35 = arith.constant 0 : index
    %c0_36 = arith.constant 0 : index
    %74 = vector.load %arg7[%c0_35, %c0_36] : memref<32x32xf32, #tpu.memory_space<vmem>>, vector<32x32xf32>
    %cst_37 = arith.constant dense<0.000000e+00> : vector<16x32xf32>
    %75 = tpu.matmul %70, %74, %cst_37 {dimension_numbers = #tpu.dot_dimension_numbers<[1], [0], [0], [1], [0, 0, 1, 1], [], []>} : vector<16x32xf32>, vector<32x32xf32>, vector<16x32xf32> -> vector<16x32xf32>
    %c0_38 = arith.constant 0 : index
    %c0_39 = arith.constant 0 : index
    %76 = vector.load %arg8[%c0_38, %c0_39] : memref<1x32xf32, #tpu.memory_space<vmem>>, vector<1x32xf32>
    %77 = vector.broadcast %76 : vector<1x32xf32> to vector<16x32xf32>
    %78 = arith.addf %75, %77 : vector<16x32xf32>
    %c0_40 = arith.constant 0 : index
    %c0_41 = arith.constant 0 : index
    %79 = vector.load %arg7[%c0_40, %c0_41] : memref<32x32xf32, #tpu.memory_space<vmem>>, vector<32x32xf32>
    %cst_42 = arith.constant dense<0.000000e+00> : vector<16x32xf32>
    %80 = tpu.matmul %73, %79, %cst_42 {dimension_numbers = #tpu.dot_dimension_numbers<[1], [0], [0], [1], [0, 0, 1, 1], [], []>} : vector<16x32xf32>, vector<32x32xf32>, vector<16x32xf32> -> vector<16x32xf32>
    %c0_43 = arith.constant 0 : index
    %c0_44 = arith.constant 0 : index
    %81 = vector.load %arg8[%c0_43, %c0_44] : memref<1x32xf32, #tpu.memory_space<vmem>>, vector<1x32xf32>
    %82 = vector.broadcast %81 : vector<1x32xf32> to vector<16x32xf32>
    %83 = arith.addf %80, %82 : vector<16x32xf32>
    %c0_45 = arith.constant 0 : index
    %c0_46 = arith.constant 0 : index
    %84 = vector.load %arg9[%c0_45, %c0_46] : memref<1x32xf32, #tpu.memory_space<vmem>>, vector<1x32xf32>
    %c0_47 = arith.constant 0 : index
    %c0_48 = arith.constant 0 : index
    %85 = vector.load %arg10[%c0_47, %c0_48] : memref<1x32xf32, #tpu.memory_space<vmem>>, vector<1x32xf32>
    %cst_49 = arith.constant dense<0.000000e+00> : vector<32xf32>
    %86 = vector.multi_reduction <add>, %78, %cst_49 [0] : vector<16x32xf32> to vector<32xf32>
    %87 = vector.shape_cast %86 : vector<32xf32> to vector<1x32xf32>
    %cst_50 = arith.constant dense<0.000000e+00> : vector<32xf32>
    %88 = vector.multi_reduction <add>, %83, %cst_50 [0] : vector<16x32xf32> to vector<32xf32>
    %89 = vector.shape_cast %88 : vector<32xf32> to vector<1x32xf32>
    %cst_51 = arith.constant 1.000000e+00 : f32
    %90 = vector.broadcast %cst_51 : f32 to vector<1x32xf32>
    %91 = arith.mulf %90, %89 : vector<1x32xf32>
    %92 = arith.addf %87, %91 : vector<1x32xf32>
    %cst_52 = arith.constant 3.200000e+01 : f32
    %93 = vector.broadcast %cst_52 : f32 to vector<1x32xf32>
    %94 = arith.divf %92, %93 : vector<1x32xf32>
    %95 = vector.broadcast %94 : vector<1x32xf32> to vector<16x32xf32>
    %96 = arith.subf %78, %95 : vector<16x32xf32>
    %97 = arith.mulf %96, %96 : vector<16x32xf32>
    %cst_53 = arith.constant dense<0.000000e+00> : vector<32xf32>
    %98 = vector.multi_reduction <add>, %97, %cst_53 [0] : vector<16x32xf32> to vector<32xf32>
    %99 = vector.shape_cast %98 : vector<32xf32> to vector<1x32xf32>
    %100 = vector.broadcast %94 : vector<1x32xf32> to vector<16x32xf32>
    %101 = arith.subf %83, %100 : vector<16x32xf32>
    %102 = arith.mulf %101, %101 : vector<16x32xf32>
    %cst_54 = arith.constant dense<0.000000e+00> : vector<32xf32>
    %103 = vector.multi_reduction <add>, %102, %cst_54 [0] : vector<16x32xf32> to vector<32xf32>
    %104 = vector.shape_cast %103 : vector<32xf32> to vector<1x32xf32>
    %cst_55 = arith.constant 1.000000e+00 : f32
    %105 = vector.broadcast %cst_55 : f32 to vector<1x32xf32>
    %106 = arith.mulf %105, %104 : vector<1x32xf32>
    %107 = arith.addf %99, %106 : vector<1x32xf32>
    %cst_56 = arith.constant 3.200000e+01 : f32
    %108 = vector.broadcast %cst_56 : f32 to vector<1x32xf32>
    %109 = arith.divf %107, %108 : vector<1x32xf32>
    %cst_57 = arith.constant 9.99999974E-6 : f32
    %110 = vector.broadcast %cst_57 : f32 to vector<1x32xf32>
    %111 = arith.addf %109, %110 : vector<1x32xf32>
    %112 = math.rsqrt %111 : vector<1x32xf32>
    %113 = arith.mulf %112, %84 : vector<1x32xf32>
    %114 = vector.broadcast %94 : vector<1x32xf32> to vector<16x32xf32>
    %115 = arith.subf %78, %114 : vector<16x32xf32>
    %116 = vector.broadcast %113 : vector<1x32xf32> to vector<16x32xf32>
    %117 = arith.mulf %115, %116 : vector<16x32xf32>
    %118 = vector.broadcast %85 : vector<1x32xf32> to vector<16x32xf32>
    %119 = arith.addf %117, %118 : vector<16x32xf32>
    %120 = vector.broadcast %94 : vector<1x32xf32> to vector<16x32xf32>
    %121 = arith.subf %83, %120 : vector<16x32xf32>
    %122 = vector.broadcast %113 : vector<1x32xf32> to vector<16x32xf32>
    %123 = arith.mulf %121, %122 : vector<16x32xf32>
    %124 = vector.broadcast %85 : vector<1x32xf32> to vector<16x32xf32>
    %125 = arith.addf %123, %124 : vector<16x32xf32>
    %cst_58 = arith.constant 0.000000e+00 : f32
    %126 = vector.broadcast %cst_58 : f32 to vector<16x32xf32>
    %127 = arith.maximumf %119, %126 : vector<16x32xf32>
    %cst_59 = arith.constant 0.000000e+00 : f32
    %128 = vector.broadcast %cst_59 : f32 to vector<16x32xf32>
    %129 = arith.maximumf %125, %128 : vector<16x32xf32>
    %c0_60 = arith.constant 0 : index
    %c0_61 = arith.constant 0 : index
    %130 = vector.load %arg11[%c0_60, %c0_61] : memref<32x32xf32, #tpu.memory_space<vmem>>, vector<32x32xf32>
    %cst_62 = arith.constant dense<0.000000e+00> : vector<16x32xf32>
    %131 = tpu.matmul %127, %130, %cst_62 {dimension_numbers = #tpu.dot_dimension_numbers<[1], [0], [0], [1], [0, 0, 1, 1], [], []>} : vector<16x32xf32>, vector<32x32xf32>, vector<16x32xf32> -> vector<16x32xf32>
    %c0_63 = arith.constant 0 : index
    %c0_64 = arith.constant 0 : index
    %132 = vector.load %arg12[%c0_63, %c0_64] : memref<1x32xf32, #tpu.memory_space<vmem>>, vector<1x32xf32>
    %133 = vector.broadcast %132 : vector<1x32xf32> to vector<16x32xf32>
    %134 = arith.addf %131, %133 : vector<16x32xf32>
    %c0_65 = arith.constant 0 : index
    %c0_66 = arith.constant 0 : index
    %135 = vector.load %arg11[%c0_65, %c0_66] : memref<32x32xf32, #tpu.memory_space<vmem>>, vector<32x32xf32>
    %cst_67 = arith.constant dense<0.000000e+00> : vector<16x32xf32>
    %136 = tpu.matmul %129, %135, %cst_67 {dimension_numbers = #tpu.dot_dimension_numbers<[1], [0], [0], [1], [0, 0, 1, 1], [], []>} : vector<16x32xf32>, vector<32x32xf32>, vector<16x32xf32> -> vector<16x32xf32>
    %c0_68 = arith.constant 0 : index
    %c0_69 = arith.constant 0 : index
    %137 = vector.load %arg12[%c0_68, %c0_69] : memref<1x32xf32, #tpu.memory_space<vmem>>, vector<1x32xf32>
    %138 = vector.broadcast %137 : vector<1x32xf32> to vector<16x32xf32>
    %139 = arith.addf %136, %138 : vector<16x32xf32>
    %c0_70 = arith.constant 0 : index
    %c0_71 = arith.constant 0 : index
    %140 = vector.load %arg13[%c0_70, %c0_71] : memref<1x32xf32, #tpu.memory_space<vmem>>, vector<1x32xf32>
    %c0_72 = arith.constant 0 : index
    %c0_73 = arith.constant 0 : index
    %141 = vector.load %arg14[%c0_72, %c0_73] : memref<1x32xf32, #tpu.memory_space<vmem>>, vector<1x32xf32>
    %cst_74 = arith.constant dense<0.000000e+00> : vector<32xf32>
    %142 = vector.multi_reduction <add>, %134, %cst_74 [0] : vector<16x32xf32> to vector<32xf32>
    %143 = vector.shape_cast %142 : vector<32xf32> to vector<1x32xf32>
    %cst_75 = arith.constant dense<0.000000e+00> : vector<32xf32>
    %144 = vector.multi_reduction <add>, %139, %cst_75 [0] : vector<16x32xf32> to vector<32xf32>
    %145 = vector.shape_cast %144 : vector<32xf32> to vector<1x32xf32>
    %cst_76 = arith.constant 1.000000e+00 : f32
    %146 = vector.broadcast %cst_76 : f32 to vector<1x32xf32>
    %147 = arith.mulf %146, %145 : vector<1x32xf32>
    %148 = arith.addf %143, %147 : vector<1x32xf32>
    %cst_77 = arith.constant 3.200000e+01 : f32
    %149 = vector.broadcast %cst_77 : f32 to vector<1x32xf32>
    %150 = arith.divf %148, %149 : vector<1x32xf32>
    %151 = vector.broadcast %150 : vector<1x32xf32> to vector<16x32xf32>
    %152 = arith.subf %134, %151 : vector<16x32xf32>
    %153 = arith.mulf %152, %152 : vector<16x32xf32>
    %cst_78 = arith.constant dense<0.000000e+00> : vector<32xf32>
    %154 = vector.multi_reduction <add>, %153, %cst_78 [0] : vector<16x32xf32> to vector<32xf32>
    %155 = vector.shape_cast %154 : vector<32xf32> to vector<1x32xf32>
    %156 = vector.broadcast %150 : vector<1x32xf32> to vector<16x32xf32>
    %157 = arith.subf %139, %156 : vector<16x32xf32>
    %158 = arith.mulf %157, %157 : vector<16x32xf32>
    %cst_79 = arith.constant dense<0.000000e+00> : vector<32xf32>
    %159 = vector.multi_reduction <add>, %158, %cst_79 [0] : vector<16x32xf32> to vector<32xf32>
    %160 = vector.shape_cast %159 : vector<32xf32> to vector<1x32xf32>
    %cst_80 = arith.constant 1.000000e+00 : f32
    %161 = vector.broadcast %cst_80 : f32 to vector<1x32xf32>
    %162 = arith.mulf %161, %160 : vector<1x32xf32>
    %163 = arith.addf %155, %162 : vector<1x32xf32>
    %cst_81 = arith.constant 3.200000e+01 : f32
    %164 = vector.broadcast %cst_81 : f32 to vector<1x32xf32>
    %165 = arith.divf %163, %164 : vector<1x32xf32>
    %cst_82 = arith.constant 9.99999974E-6 : f32
    %166 = vector.broadcast %cst_82 : f32 to vector<1x32xf32>
    %167 = arith.addf %165, %166 : vector<1x32xf32>
    %168 = math.rsqrt %167 : vector<1x32xf32>
    %169 = arith.mulf %168, %140 : vector<1x32xf32>
    %170 = vector.broadcast %150 : vector<1x32xf32> to vector<16x32xf32>
    %171 = arith.subf %134, %170 : vector<16x32xf32>
    %172 = vector.broadcast %169 : vector<1x32xf32> to vector<16x32xf32>
    %173 = arith.mulf %171, %172 : vector<16x32xf32>
    %174 = vector.broadcast %141 : vector<1x32xf32> to vector<16x32xf32>
    %175 = arith.addf %173, %174 : vector<16x32xf32>
    %176 = vector.broadcast %150 : vector<1x32xf32> to vector<16x32xf32>
    %177 = arith.subf %139, %176 : vector<16x32xf32>
    %178 = vector.broadcast %169 : vector<1x32xf32> to vector<16x32xf32>
    %179 = arith.mulf %177, %178 : vector<16x32xf32>
    %180 = vector.broadcast %141 : vector<1x32xf32> to vector<16x32xf32>
    %181 = arith.addf %179, %180 : vector<16x32xf32>
    %c0_83 = arith.constant 0 : index
    %c0_84 = arith.constant 0 : index
    %c0_85 = arith.constant 0 : index
    %182 = vector.load %arg28[%c0_83, %c0_84, %c0_85] : memref<2x16x32xf32, #tpu.memory_space<vmem>>, vector<1x16x32xf32>
    %183 = vector.shape_cast %182 : vector<1x16x32xf32> to vector<16x32xf32>
    %184 = vector.shape_cast %175 : vector<16x32xf32> to vector<1x16x32xf32>
    tpu.vector_store %arg28[%c0_83, %c0_84, %c0_85], %184 {strides = array<i32>} : memref<2x16x32xf32, #tpu.memory_space<vmem>>, vector<1x16x32xf32>,
    %c1 = arith.constant 1 : index
    %c0_86 = arith.constant 0 : index
    %c0_87 = arith.constant 0 : index
    %185 = vector.load %arg28[%c1, %c0_86, %c0_87] : memref<2x16x32xf32, #tpu.memory_space<vmem>>, vector<1x16x32xf32>
    %186 = vector.shape_cast %185 : vector<1x16x32xf32> to vector<16x32xf32>
    %187 = vector.shape_cast %181 : vector<16x32xf32> to vector<1x16x32xf32>
    tpu.vector_store %arg28[%c1, %c0_86, %c0_87], %187 {strides = array<i32>} : memref<2x16x32xf32, #tpu.memory_space<vmem>>, vector<1x16x32xf32>,
    %c0_88 = arith.constant 0 : index
    %c0_89 = arith.constant 0 : index
    %188 = vector.load %arg15[%c0_88, %c0_89] : memref<8x32xf32, #tpu.memory_space<vmem>>, vector<8x32xf32>
    %189 = arith.mulf %188, %188 : vector<8x32xf32>
    %cst_90 = arith.constant dense<0.000000e+00> : vector<8xf32>
    %190 = vector.multi_reduction <add>, %189, %cst_90 [1] : vector<8x32xf32> to vector<8xf32>
    %191 = vector.shape_cast %190 : vector<8xf32> to vector<8x1xf32>
    %192 = math.sqrt %191 : vector<8x1xf32>
    %cst_91 = arith.constant 1.000000e+00 : f32
    %193 = vector.broadcast %cst_91 : f32 to vector<8x1xf32>
    %194 = arith.cmpf ogt, %192, %193 : vector<8x1xf32>
    %cst_92 = arith.constant 1.000000e-07 : f32
    %195 = vector.broadcast %cst_92 : f32 to vector<8x1xf32>
    %196 = arith.addf %192, %195 : vector<8x1xf32>
    %cst_93 = arith.constant 1.000000e+00 : f32
    %197 = vector.broadcast %cst_93 : f32 to vector<8x1xf32>
    %198 = arith.divf %197, %196 : vector<8x1xf32>
    %cst_94 = arith.constant 1.000000e+00 : f32
    %199 = vector.broadcast %cst_94 : f32 to vector<8x1xf32>
    %200 = arith.select %194, %198, %199 : vector<8x1xi1>, vector<8x1xf32>
    %201 = vector.broadcast %200 : vector<8x1xf32> to vector<8x32xf32>
    %202 = arith.mulf %188, %201 : vector<8x32xf32>
    %c0_95 = arith.constant 0 : index
    %c0_96 = arith.constant 0 : index
    %203 = vector.load %arg16[%c0_95, %c0_96] : memref<8x8xf32, #tpu.memory_space<vmem>>, vector<8x8xf32>
    %cst_97 = arith.constant dense<0.000000e+00> : vector<8x32xf32>
    %204 = tpu.matmul %203, %202, %cst_97 {dimension_numbers = #tpu.dot_dimension_numbers<[1], [0], [0], [1], [0, 0, 1, 1], [], []>} : vector<8x8xf32>, vector<8x32xf32>, vector<8x32xf32> -> vector<8x32xf32>
    %c0_98 = arith.constant 0 : index
    %c0_99 = arith.constant 0 : index
    %c0_100 = arith.constant 0 : index
    %205 = vector.load %arg17[%c0_98, %c0_99, %c0_100] : memref<1x32x32xf32, #tpu.memory_space<vmem>>, vector<1x32x32xf32>
    %206 = vector.shape_cast %205 : vector<1x32x32xf32> to vector<32x32xf32>
    %cst_101 = arith.constant dense<0.000000e+00> : vector<8x32xf32>
    %207 = tpu.matmul %204, %206, %cst_101 {dimension_numbers = #tpu.dot_dimension_numbers<[1], [0], [0], [1], [0, 0, 1, 1], [], []>} : vector<8x32xf32>, vector<32x32xf32>, vector<8x32xf32> -> vector<8x32xf32>
    %c0_102 = arith.constant 0 : index
    %c0_103 = arith.constant 0 : index
    %c0_104 = arith.constant 0 : index
    %208 = vector.load %arg18[%c0_102, %c0_103, %c0_104] : memref<1x1x32xf32, #tpu.memory_space<vmem>>, vector<1x1x32xf32>
    %209 = vector.shape_cast %208 : vector<1x1x32xf32> to vector<1x32xf32>
    %210 = vector.broadcast %209 : vector<1x32xf32> to vector<8x32xf32>
    %211 = arith.addf %207, %210 : vector<8x32xf32>
    %c0_105 = arith.constant 0 : index
    %c0_106 = arith.constant 0 : index
    %212 = vector.load %arg19[%c0_105, %c0_106] : memref<2x8xf32, #tpu.memory_space<vmem>>, vector<2x8xf32>
    %cst_107 = arith.constant dense<0.000000e+00> : vector<2x32xf32>
    %213 = tpu.matmul %212, %211, %cst_107 {dimension_numbers = #tpu.dot_dimension_numbers<[1], [0], [0], [1], [0, 0, 1, 1], [], []>} : vector<2x8xf32>, vector<8x32xf32>, vector<2x32xf32> -> vector<2x32xf32>
    %c0_108 = arith.constant 0 : index
    %c0_109 = arith.constant 0 : index
    %214 = vector.load %arg20[%c0_108, %c0_109] : memref<32x32xf32, #tpu.memory_space<vmem>>, vector<32x32xf32>
    %c0_110 = arith.constant 0 : index
    %c0_111 = arith.constant 0 : index
    %215 = vector.load %arg21[%c0_110, %c0_111] : memref<1x32xf32, #tpu.memory_space<vmem>>, vector<1x32xf32>
    %c0_112 = arith.constant 0 : index
    %c0_113 = arith.constant 0 : index
    %216 = vector.load %arg22[%c0_112, %c0_113] : memref<1x32xf32, #tpu.memory_space<vmem>>, vector<1x32xf32>
    %c0_114 = arith.constant 0 : index
    %c0_115 = arith.constant 0 : index
    %217 = vector.load %arg23[%c0_114, %c0_115] : memref<1x32xf32, #tpu.memory_space<vmem>>, vector<1x32xf32>
    %c0_116 = arith.constant 0 : index
    %c0_117 = arith.constant 0 : index
    %218 = vector.load %arg24[%c0_116, %c0_117] : memref<32x32xf32, #tpu.memory_space<vmem>>, vector<32x32xf32>
    %c0_118 = arith.constant 0 : index
    %c0_119 = arith.constant 0 : index
    %219 = vector.load %arg25[%c0_118, %c0_119] : memref<1x32xf32, #tpu.memory_space<vmem>>, vector<1x32xf32>
    %c0_120 = arith.constant 0 : index
    %c0_121 = arith.constant 0 : index
    %220 = vector.load %arg26[%c0_120, %c0_121] : memref<1x32xf32, #tpu.memory_space<vmem>>, vector<1x32xf32>
    %c0_122 = arith.constant 0 : index
    %c0_123 = arith.constant 0 : index
    %221 = vector.load %arg27[%c0_122, %c0_123] : memref<1x32xf32, #tpu.memory_space<vmem>>, vector<1x32xf32>
    %cst_124 = arith.constant dense<0.000000e+00> : vector<2x32xf32>
    %222 = tpu.matmul %213, %214, %cst_124 {dimension_numbers = #tpu.dot_dimension_numbers<[1], [0], [0], [1], [0, 0, 1, 1], [], []>} : vector<2x32xf32>, vector<32x32xf32>, vector<2x32xf32> -> vector<2x32xf32>
    %223 = vector.broadcast %215 : vector<1x32xf32> to vector<2x32xf32>
    %224 = arith.addf %222, %223 : vector<2x32xf32>
    %cst_125 = arith.constant dense<0.000000e+00> : vector<32xf32>
    %225 = vector.multi_reduction <add>, %224, %cst_125 [0] : vector<2x32xf32> to vector<32xf32>
    %226 = vector.shape_cast %225 : vector<32xf32> to vector<1x32xf32>
    %cst_126 = arith.constant 2.000000e+00 : f32
    %227 = vector.broadcast %cst_126 : f32 to vector<1x32xf32>
    %228 = arith.divf %226, %227 : vector<1x32xf32>
    %229 = vector.broadcast %228 : vector<1x32xf32> to vector<2x32xf32>
    %230 = arith.subf %224, %229 : vector<2x32xf32>
    %231 = arith.mulf %230, %230 : vector<2x32xf32>
    %cst_127 = arith.constant dense<0.000000e+00> : vector<32xf32>
    %232 = vector.multi_reduction <add>, %231, %cst_127 [0] : vector<2x32xf32> to vector<32xf32>
    %233 = vector.shape_cast %232 : vector<32xf32> to vector<1x32xf32>
    %cst_128 = arith.constant 2.000000e+00 : f32
    %234 = vector.broadcast %cst_128 : f32 to vector<1x32xf32>
    %235 = arith.divf %233, %234 : vector<1x32xf32>
    %236 = vector.broadcast %228 : vector<1x32xf32> to vector<2x32xf32>
    %237 = arith.subf %224, %236 : vector<2x32xf32>
    %cst_129 = arith.constant 9.99999974E-6 : f32
    %238 = vector.broadcast %cst_129 : f32 to vector<1x32xf32>
    %239 = arith.addf %235, %238 : vector<1x32xf32>
    %240 = math.rsqrt %239 : vector<1x32xf32>
    %241 = vector.broadcast %240 : vector<1x32xf32> to vector<2x32xf32>
    %242 = arith.mulf %237, %241 : vector<2x32xf32>
    %243 = vector.broadcast %216 : vector<1x32xf32> to vector<2x32xf32>
    %244 = arith.mulf %242, %243 : vector<2x32xf32>
    %245 = vector.broadcast %217 : vector<1x32xf32> to vector<2x32xf32>
    %246 = arith.addf %244, %245 : vector<2x32xf32>
    %cst_130 = arith.constant 0.000000e+00 : f32
    %247 = vector.broadcast %cst_130 : f32 to vector<2x32xf32>
    %248 = arith.maximumf %246, %247 : vector<2x32xf32>
    %cst_131 = arith.constant dense<0.000000e+00> : vector<2x32xf32>
    %249 = tpu.matmul %248, %218, %cst_131 {dimension_numbers = #tpu.dot_dimension_numbers<[1], [0], [0], [1], [0, 0, 1, 1], [], []>} : vector<2x32xf32>, vector<32x32xf32>, vector<2x32xf32> -> vector<2x32xf32>
    %250 = vector.broadcast %219 : vector<1x32xf32> to vector<2x32xf32>
    %251 = arith.addf %249, %250 : vector<2x32xf32>
    %cst_132 = arith.constant dense<0.000000e+00> : vector<32xf32>
    %252 = vector.multi_reduction <add>, %251, %cst_132 [0] : vector<2x32xf32> to vector<32xf32>
    %253 = vector.shape_cast %252 : vector<32xf32> to vector<1x32xf32>
    %cst_133 = arith.constant 2.000000e+00 : f32
    %254 = vector.broadcast %cst_133 : f32 to vector<1x32xf32>
    %255 = arith.divf %253, %254 : vector<1x32xf32>
    %256 = vector.broadcast %255 : vector<1x32xf32> to vector<2x32xf32>
    %257 = arith.subf %251, %256 : vector<2x32xf32>
    %258 = arith.mulf %257, %257 : vector<2x32xf32>
    %cst_134 = arith.constant dense<0.000000e+00> : vector<32xf32>
    %259 = vector.multi_reduction <add>, %258, %cst_134 [0] : vector<2x32xf32> to vector<32xf32>
    %260 = vector.shape_cast %259 : vector<32xf32> to vector<1x32xf32>
    %cst_135 = arith.constant 2.000000e+00 : f32
    %261 = vector.broadcast %cst_135 : f32 to vector<1x32xf32>
    %262 = arith.divf %260, %261 : vector<1x32xf32>
    %263 = vector.broadcast %255 : vector<1x32xf32> to vector<2x32xf32>
    %264 = arith.subf %251, %263 : vector<2x32xf32>
    %cst_136 = arith.constant 9.99999974E-6 : f32
    %265 = vector.broadcast %cst_136 : f32 to vector<1x32xf32>
    %266 = arith.addf %262, %265 : vector<1x32xf32>
    %267 = math.rsqrt %266 : vector<1x32xf32>
    %268 = vector.broadcast %267 : vector<1x32xf32> to vector<2x32xf32>
    %269 = arith.mulf %264, %268 : vector<2x32xf32>
    %270 = vector.broadcast %220 : vector<1x32xf32> to vector<2x32xf32>
    %271 = arith.mulf %269, %270 : vector<2x32xf32>
    %272 = vector.broadcast %221 : vector<1x32xf32> to vector<2x32xf32>
    %273 = arith.addf %271, %272 : vector<2x32xf32>
    %c0_137 = arith.constant 0 : index
    %c0_138 = arith.constant 0 : index
    %274 = vector.load %arg29[%c0_137, %c0_138] : memref<2x32xf32, #tpu.memory_space<vmem>>, vector<2x32xf32>
    tpu.vector_store %arg29[%c0_137, %c0_138], %273 {strides = array<i32>} : memref<2x32xf32, #tpu.memory_space<vmem>>, vector<2x32xf32>,
    return
  }
}

module attributes {stable_mosaic.version = 11 : i64} {
  func.func @_head_kernel(%arg0: memref<2x16x32xf32, #tpu.memory_space<vmem>>, %arg1: memref<2x2xf32, #tpu.memory_space<vmem>>, %arg2: memref<2x32xf32, #tpu.memory_space<vmem>>, %arg3: memref<1x32xf32, #tpu.memory_space<vmem>>, %arg4: memref<1x32xf32, #tpu.memory_space<vmem>>, %arg5: memref<32x64xf32, #tpu.memory_space<vmem>>, %arg6: memref<1x64xf32, #tpu.memory_space<vmem>>, %arg7: memref<1x64xf32, #tpu.memory_space<vmem>>, %arg8: memref<1x64xf32, #tpu.memory_space<vmem>>, %arg9: memref<64x32xf32, #tpu.memory_space<vmem>>, %arg10: memref<1x32xf32, #tpu.memory_space<vmem>>, %arg11: memref<1x32xf32, #tpu.memory_space<vmem>>, %arg12: memref<1x32xf32, #tpu.memory_space<vmem>>, %arg13: memref<32x16xf32, #tpu.memory_space<vmem>>, %arg14: memref<1x16xf32, #tpu.memory_space<vmem>>, %arg15: memref<16x32xf32, #tpu.memory_space<vmem>>, %arg16: memref<1x32xf32, #tpu.memory_space<vmem>>, %arg17: memref<1x32xf32, #tpu.memory_space<vmem>>, %arg18: memref<1x32xf32, #tpu.memory_space<vmem>>, %arg19: memref<32x32xf32, #tpu.memory_space<vmem>>, %arg20: memref<1x32xf32, #tpu.memory_space<vmem>>, %arg21: memref<1x32xf32, #tpu.memory_space<vmem>>, %arg22: memref<1x32xf32, #tpu.memory_space<vmem>>, %arg23: memref<1x16xf32, #tpu.memory_space<vmem>>, %arg24: memref<32x16xf32, #tpu.memory_space<vmem>>, %arg25: memref<1x16xf32, #tpu.memory_space<vmem>>, %arg26: memref<2x16xf32, #tpu.memory_space<vmem>>, %arg27: memref<2x16xf32, #tpu.memory_space<vmem>>) attributes {dimension_semantics = [], scalar_prefetch = 0 : i64, scratch_operands = 0 : i64, tpu.core_type = #tpu.core_type<tc>} {
    %c0 = arith.constant 0 : index
    %c0_0 = arith.constant 0 : index
    %0 = vector.load %arg1[%c0, %c0_0] : memref<2x2xf32, #tpu.memory_space<vmem>>, vector<2x2xf32>
    %c0_1 = arith.constant 0 : index
    %c0_2 = arith.constant 0 : index
    %1 = vector.load %arg2[%c0_1, %c0_2] : memref<2x32xf32, #tpu.memory_space<vmem>>, vector<2x32xf32>
    %cst = arith.constant dense<0.000000e+00> : vector<2x32xf32>
    %2 = tpu.matmul %0, %1, %cst {dimension_numbers = #tpu.dot_dimension_numbers<[1], [0], [0], [1], [0, 0, 1, 1], [], []>} : vector<2x2xf32>, vector<2x32xf32>, vector<2x32xf32> -> vector<2x32xf32>
    %c0_3 = arith.constant 0 : index
    %c0_4 = arith.constant 0 : index
    %c0_5 = arith.constant 0 : index
    %3 = vector.load %arg0[%c0_3, %c0_4, %c0_5] : memref<2x16x32xf32, #tpu.memory_space<vmem>>, vector<1x16x32xf32>
    %4 = vector.shape_cast %3 : vector<1x16x32xf32> to vector<16x32xf32>
    %c1 = arith.constant 1 : index
    %c0_6 = arith.constant 0 : index
    %c0_7 = arith.constant 0 : index
    %5 = vector.load %arg0[%c1, %c0_6, %c0_7] : memref<2x16x32xf32, #tpu.memory_space<vmem>>, vector<1x16x32xf32>
    %6 = vector.shape_cast %5 : vector<1x16x32xf32> to vector<16x32xf32>
    %7 = vector.extract_strided_slice %2 {offsets = [0, 0], sizes = [1, 32], strides = [1, 1]} : vector<2x32xf32> to vector<1x32xf32>
    %8 = vector.broadcast %7 : vector<1x32xf32> to vector<16x32xf32>
    %9 = arith.addf %4, %8 : vector<16x32xf32>
    %10 = vector.extract_strided_slice %2 {offsets = [1, 0], sizes = [1, 32], strides = [1, 1]} : vector<2x32xf32> to vector<1x32xf32>
    %11 = vector.broadcast %10 : vector<1x32xf32> to vector<16x32xf32>
    %12 = arith.addf %6, %11 : vector<16x32xf32>
    %13 = tpu.concatenate %9, %12 in 0 : vector<16x32xf32>, vector<16x32xf32> -> vector<32x32xf32>
    %c0_8 = arith.constant 0 : index
    %c0_9 = arith.constant 0 : index
    %14 = vector.load %arg3[%c0_8, %c0_9] : memref<1x32xf32, #tpu.memory_space<vmem>>, vector<1x32xf32>
    %c0_10 = arith.constant 0 : index
    %c0_11 = arith.constant 0 : index
    %15 = vector.load %arg4[%c0_10, %c0_11] : memref<1x32xf32, #tpu.memory_space<vmem>>, vector<1x32xf32>
    %cst_12 = arith.constant dense<0.000000e+00> : vector<32xf32>
    %16 = vector.multi_reduction <add>, %13, %cst_12 [0] : vector<32x32xf32> to vector<32xf32>
    %17 = vector.shape_cast %16 : vector<32xf32> to vector<1x32xf32>
    %cst_13 = arith.constant 3.200000e+01 : f32
    %18 = vector.broadcast %cst_13 : f32 to vector<1x32xf32>
    %19 = arith.divf %17, %18 : vector<1x32xf32>
    %20 = vector.broadcast %19 : vector<1x32xf32> to vector<32x32xf32>
    %21 = arith.subf %13, %20 : vector<32x32xf32>
    %22 = arith.mulf %21, %21 : vector<32x32xf32>
    %cst_14 = arith.constant dense<0.000000e+00> : vector<32xf32>
    %23 = vector.multi_reduction <add>, %22, %cst_14 [0] : vector<32x32xf32> to vector<32xf32>
    %24 = vector.shape_cast %23 : vector<32xf32> to vector<1x32xf32>
    %cst_15 = arith.constant 3.200000e+01 : f32
    %25 = vector.broadcast %cst_15 : f32 to vector<1x32xf32>
    %26 = arith.divf %24, %25 : vector<1x32xf32>
    %27 = vector.broadcast %19 : vector<1x32xf32> to vector<32x32xf32>
    %28 = arith.subf %13, %27 : vector<32x32xf32>
    %cst_16 = arith.constant 9.99999974E-6 : f32
    %29 = vector.broadcast %cst_16 : f32 to vector<1x32xf32>
    %30 = arith.addf %26, %29 : vector<1x32xf32>
    %31 = math.rsqrt %30 : vector<1x32xf32>
    %32 = vector.broadcast %31 : vector<1x32xf32> to vector<32x32xf32>
    %33 = arith.mulf %28, %32 : vector<32x32xf32>
    %34 = vector.broadcast %14 : vector<1x32xf32> to vector<32x32xf32>
    %35 = arith.mulf %33, %34 : vector<32x32xf32>
    %36 = vector.broadcast %15 : vector<1x32xf32> to vector<32x32xf32>
    %37 = arith.addf %35, %36 : vector<32x32xf32>
    %cst_17 = arith.constant 0.000000e+00 : f32
    %38 = vector.broadcast %cst_17 : f32 to vector<32x32xf32>
    %39 = arith.maximumf %37, %38 : vector<32x32xf32>
    %c0_18 = arith.constant 0 : index
    %c0_19 = arith.constant 0 : index
    %40 = vector.load %arg5[%c0_18, %c0_19] : memref<32x64xf32, #tpu.memory_space<vmem>>, vector<32x64xf32>
    %c0_20 = arith.constant 0 : index
    %c0_21 = arith.constant 0 : index
    %41 = vector.load %arg6[%c0_20, %c0_21] : memref<1x64xf32, #tpu.memory_space<vmem>>, vector<1x64xf32>
    %c0_22 = arith.constant 0 : index
    %c0_23 = arith.constant 0 : index
    %42 = vector.load %arg7[%c0_22, %c0_23] : memref<1x64xf32, #tpu.memory_space<vmem>>, vector<1x64xf32>
    %c0_24 = arith.constant 0 : index
    %c0_25 = arith.constant 0 : index
    %43 = vector.load %arg8[%c0_24, %c0_25] : memref<1x64xf32, #tpu.memory_space<vmem>>, vector<1x64xf32>
    %c0_26 = arith.constant 0 : index
    %c0_27 = arith.constant 0 : index
    %44 = vector.load %arg9[%c0_26, %c0_27] : memref<64x32xf32, #tpu.memory_space<vmem>>, vector<64x32xf32>
    %c0_28 = arith.constant 0 : index
    %c0_29 = arith.constant 0 : index
    %45 = vector.load %arg10[%c0_28, %c0_29] : memref<1x32xf32, #tpu.memory_space<vmem>>, vector<1x32xf32>
    %c0_30 = arith.constant 0 : index
    %c0_31 = arith.constant 0 : index
    %46 = vector.load %arg11[%c0_30, %c0_31] : memref<1x32xf32, #tpu.memory_space<vmem>>, vector<1x32xf32>
    %c0_32 = arith.constant 0 : index
    %c0_33 = arith.constant 0 : index
    %47 = vector.load %arg12[%c0_32, %c0_33] : memref<1x32xf32, #tpu.memory_space<vmem>>, vector<1x32xf32>
    %cst_34 = arith.constant dense<0.000000e+00> : vector<32x64xf32>
    %48 = tpu.matmul %39, %40, %cst_34 {dimension_numbers = #tpu.dot_dimension_numbers<[1], [0], [0], [1], [0, 0, 1, 1], [], []>} : vector<32x32xf32>, vector<32x64xf32>, vector<32x64xf32> -> vector<32x64xf32>
    %49 = vector.broadcast %41 : vector<1x64xf32> to vector<32x64xf32>
    %50 = arith.addf %48, %49 : vector<32x64xf32>
    %cst_35 = arith.constant dense<0.000000e+00> : vector<64xf32>
    %51 = vector.multi_reduction <add>, %50, %cst_35 [0] : vector<32x64xf32> to vector<64xf32>
    %52 = vector.shape_cast %51 : vector<64xf32> to vector<1x64xf32>
    %cst_36 = arith.constant 3.200000e+01 : f32
    %53 = vector.broadcast %cst_36 : f32 to vector<1x64xf32>
    %54 = arith.divf %52, %53 : vector<1x64xf32>
    %55 = vector.broadcast %54 : vector<1x64xf32> to vector<32x64xf32>
    %56 = arith.subf %50, %55 : vector<32x64xf32>
    %57 = arith.mulf %56, %56 : vector<32x64xf32>
    %cst_37 = arith.constant dense<0.000000e+00> : vector<64xf32>
    %58 = vector.multi_reduction <add>, %57, %cst_37 [0] : vector<32x64xf32> to vector<64xf32>
    %59 = vector.shape_cast %58 : vector<64xf32> to vector<1x64xf32>
    %cst_38 = arith.constant 3.200000e+01 : f32
    %60 = vector.broadcast %cst_38 : f32 to vector<1x64xf32>
    %61 = arith.divf %59, %60 : vector<1x64xf32>
    %62 = vector.broadcast %54 : vector<1x64xf32> to vector<32x64xf32>
    %63 = arith.subf %50, %62 : vector<32x64xf32>
    %cst_39 = arith.constant 9.99999974E-6 : f32
    %64 = vector.broadcast %cst_39 : f32 to vector<1x64xf32>
    %65 = arith.addf %61, %64 : vector<1x64xf32>
    %66 = math.rsqrt %65 : vector<1x64xf32>
    %67 = vector.broadcast %66 : vector<1x64xf32> to vector<32x64xf32>
    %68 = arith.mulf %63, %67 : vector<32x64xf32>
    %69 = vector.broadcast %42 : vector<1x64xf32> to vector<32x64xf32>
    %70 = arith.mulf %68, %69 : vector<32x64xf32>
    %71 = vector.broadcast %43 : vector<1x64xf32> to vector<32x64xf32>
    %72 = arith.addf %70, %71 : vector<32x64xf32>
    %cst_40 = arith.constant 0.000000e+00 : f32
    %73 = vector.broadcast %cst_40 : f32 to vector<32x64xf32>
    %74 = arith.maximumf %72, %73 : vector<32x64xf32>
    %cst_41 = arith.constant dense<0.000000e+00> : vector<32x32xf32>
    %75 = tpu.matmul %74, %44, %cst_41 {dimension_numbers = #tpu.dot_dimension_numbers<[1], [0], [0], [1], [0, 0, 1, 1], [], []>} : vector<32x64xf32>, vector<64x32xf32>, vector<32x32xf32> -> vector<32x32xf32>
    %76 = vector.broadcast %45 : vector<1x32xf32> to vector<32x32xf32>
    %77 = arith.addf %75, %76 : vector<32x32xf32>
    %cst_42 = arith.constant dense<0.000000e+00> : vector<32xf32>
    %78 = vector.multi_reduction <add>, %77, %cst_42 [0] : vector<32x32xf32> to vector<32xf32>
    %79 = vector.shape_cast %78 : vector<32xf32> to vector<1x32xf32>
    %cst_43 = arith.constant 3.200000e+01 : f32
    %80 = vector.broadcast %cst_43 : f32 to vector<1x32xf32>
    %81 = arith.divf %79, %80 : vector<1x32xf32>
    %82 = vector.broadcast %81 : vector<1x32xf32> to vector<32x32xf32>
    %83 = arith.subf %77, %82 : vector<32x32xf32>
    %84 = arith.mulf %83, %83 : vector<32x32xf32>
    %cst_44 = arith.constant dense<0.000000e+00> : vector<32xf32>
    %85 = vector.multi_reduction <add>, %84, %cst_44 [0] : vector<32x32xf32> to vector<32xf32>
    %86 = vector.shape_cast %85 : vector<32xf32> to vector<1x32xf32>
    %cst_45 = arith.constant 3.200000e+01 : f32
    %87 = vector.broadcast %cst_45 : f32 to vector<1x32xf32>
    %88 = arith.divf %86, %87 : vector<1x32xf32>
    %89 = vector.broadcast %81 : vector<1x32xf32> to vector<32x32xf32>
    %90 = arith.subf %77, %89 : vector<32x32xf32>
    %cst_46 = arith.constant 9.99999974E-6 : f32
    %91 = vector.broadcast %cst_46 : f32 to vector<1x32xf32>
    %92 = arith.addf %88, %91 : vector<1x32xf32>
    %93 = math.rsqrt %92 : vector<1x32xf32>
    %94 = vector.broadcast %93 : vector<1x32xf32> to vector<32x32xf32>
    %95 = arith.mulf %90, %94 : vector<32x32xf32>
    %96 = vector.broadcast %46 : vector<1x32xf32> to vector<32x32xf32>
    %97 = arith.mulf %95, %96 : vector<32x32xf32>
    %98 = vector.broadcast %47 : vector<1x32xf32> to vector<32x32xf32>
    %99 = arith.addf %97, %98 : vector<32x32xf32>
    %c0_47 = arith.constant 0 : index
    %c0_48 = arith.constant 0 : index
    %100 = vector.load %arg13[%c0_47, %c0_48] : memref<32x16xf32, #tpu.memory_space<vmem>>, vector<32x16xf32>
    %c0_49 = arith.constant 0 : index
    %c0_50 = arith.constant 0 : index
    %101 = vector.load %arg14[%c0_49, %c0_50] : memref<1x16xf32, #tpu.memory_space<vmem>>, vector<1x16xf32>
    %102 = vector.extract_strided_slice %99 {offsets = [0, 0], sizes = [16, 32], strides = [1, 1]} : vector<32x32xf32> to vector<16x32xf32>
    %103 = tpu.transpose %102, [1, 0] : vector<16x32xf32> -> vector<32x16xf32>
    %104 = arith.mulf %103, %100 : vector<32x16xf32>
    %cst_51 = arith.constant dense<0.000000e+00> : vector<16xf32>
    %105 = vector.multi_reduction <add>, %104, %cst_51 [0] : vector<32x16xf32> to vector<16xf32>
    %106 = vector.shape_cast %105 : vector<16xf32> to vector<1x16xf32>
    %107 = arith.addf %106, %101 : vector<1x16xf32>
    %108 = vector.extract_strided_slice %99 {offsets = [16, 0], sizes = [16, 32], strides = [1, 1]} : vector<32x32xf32> to vector<16x32xf32>
    %109 = tpu.transpose %108, [1, 0] : vector<16x32xf32> -> vector<32x16xf32>
    %110 = arith.mulf %109, %100 : vector<32x16xf32>
    %cst_52 = arith.constant dense<0.000000e+00> : vector<16xf32>
    %111 = vector.multi_reduction <add>, %110, %cst_52 [0] : vector<32x16xf32> to vector<16xf32>
    %112 = vector.shape_cast %111 : vector<16xf32> to vector<1x16xf32>
    %113 = arith.addf %112, %101 : vector<1x16xf32>
    %114 = tpu.concatenate %107, %113 in 0 : vector<1x16xf32>, vector<1x16xf32> -> vector<2x16xf32>
    %c0_53 = arith.constant 0 : index
    %c0_54 = arith.constant 0 : index
    %115 = vector.load %arg15[%c0_53, %c0_54] : memref<16x32xf32, #tpu.memory_space<vmem>>, vector<16x32xf32>
    %c0_55 = arith.constant 0 : index
    %c0_56 = arith.constant 0 : index
    %116 = vector.load %arg16[%c0_55, %c0_56] : memref<1x32xf32, #tpu.memory_space<vmem>>, vector<1x32xf32>
    %c0_57 = arith.constant 0 : index
    %c0_58 = arith.constant 0 : index
    %117 = vector.load %arg17[%c0_57, %c0_58] : memref<1x32xf32, #tpu.memory_space<vmem>>, vector<1x32xf32>
    %c0_59 = arith.constant 0 : index
    %c0_60 = arith.constant 0 : index
    %118 = vector.load %arg18[%c0_59, %c0_60] : memref<1x32xf32, #tpu.memory_space<vmem>>, vector<1x32xf32>
    %c0_61 = arith.constant 0 : index
    %c0_62 = arith.constant 0 : index
    %119 = vector.load %arg19[%c0_61, %c0_62] : memref<32x32xf32, #tpu.memory_space<vmem>>, vector<32x32xf32>
    %c0_63 = arith.constant 0 : index
    %c0_64 = arith.constant 0 : index
    %120 = vector.load %arg20[%c0_63, %c0_64] : memref<1x32xf32, #tpu.memory_space<vmem>>, vector<1x32xf32>
    %c0_65 = arith.constant 0 : index
    %c0_66 = arith.constant 0 : index
    %121 = vector.load %arg21[%c0_65, %c0_66] : memref<1x32xf32, #tpu.memory_space<vmem>>, vector<1x32xf32>
    %c0_67 = arith.constant 0 : index
    %c0_68 = arith.constant 0 : index
    %122 = vector.load %arg22[%c0_67, %c0_68] : memref<1x32xf32, #tpu.memory_space<vmem>>, vector<1x32xf32>
    %cst_69 = arith.constant dense<0.000000e+00> : vector<2x32xf32>
    %123 = tpu.matmul %114, %115, %cst_69 {dimension_numbers = #tpu.dot_dimension_numbers<[1], [0], [0], [1], [0, 0, 1, 1], [], []>} : vector<2x16xf32>, vector<16x32xf32>, vector<2x32xf32> -> vector<2x32xf32>
    %124 = vector.broadcast %116 : vector<1x32xf32> to vector<2x32xf32>
    %125 = arith.addf %123, %124 : vector<2x32xf32>
    %cst_70 = arith.constant dense<0.000000e+00> : vector<32xf32>
    %126 = vector.multi_reduction <add>, %125, %cst_70 [0] : vector<2x32xf32> to vector<32xf32>
    %127 = vector.shape_cast %126 : vector<32xf32> to vector<1x32xf32>
    %cst_71 = arith.constant 2.000000e+00 : f32
    %128 = vector.broadcast %cst_71 : f32 to vector<1x32xf32>
    %129 = arith.divf %127, %128 : vector<1x32xf32>
    %130 = vector.broadcast %129 : vector<1x32xf32> to vector<2x32xf32>
    %131 = arith.subf %125, %130 : vector<2x32xf32>
    %132 = arith.mulf %131, %131 : vector<2x32xf32>
    %cst_72 = arith.constant dense<0.000000e+00> : vector<32xf32>
    %133 = vector.multi_reduction <add>, %132, %cst_72 [0] : vector<2x32xf32> to vector<32xf32>
    %134 = vector.shape_cast %133 : vector<32xf32> to vector<1x32xf32>
    %cst_73 = arith.constant 2.000000e+00 : f32
    %135 = vector.broadcast %cst_73 : f32 to vector<1x32xf32>
    %136 = arith.divf %134, %135 : vector<1x32xf32>
    %137 = vector.broadcast %129 : vector<1x32xf32> to vector<2x32xf32>
    %138 = arith.subf %125, %137 : vector<2x32xf32>
    %cst_74 = arith.constant 9.99999974E-6 : f32
    %139 = vector.broadcast %cst_74 : f32 to vector<1x32xf32>
    %140 = arith.addf %136, %139 : vector<1x32xf32>
    %141 = math.rsqrt %140 : vector<1x32xf32>
    %142 = vector.broadcast %141 : vector<1x32xf32> to vector<2x32xf32>
    %143 = arith.mulf %138, %142 : vector<2x32xf32>
    %144 = vector.broadcast %117 : vector<1x32xf32> to vector<2x32xf32>
    %145 = arith.mulf %143, %144 : vector<2x32xf32>
    %146 = vector.broadcast %118 : vector<1x32xf32> to vector<2x32xf32>
    %147 = arith.addf %145, %146 : vector<2x32xf32>
    %cst_75 = arith.constant 0.000000e+00 : f32
    %148 = vector.broadcast %cst_75 : f32 to vector<2x32xf32>
    %149 = arith.maximumf %147, %148 : vector<2x32xf32>
    %cst_76 = arith.constant dense<0.000000e+00> : vector<2x32xf32>
    %150 = tpu.matmul %149, %119, %cst_76 {dimension_numbers = #tpu.dot_dimension_numbers<[1], [0], [0], [1], [0, 0, 1, 1], [], []>} : vector<2x32xf32>, vector<32x32xf32>, vector<2x32xf32> -> vector<2x32xf32>
    %151 = vector.broadcast %120 : vector<1x32xf32> to vector<2x32xf32>
    %152 = arith.addf %150, %151 : vector<2x32xf32>
    %cst_77 = arith.constant dense<0.000000e+00> : vector<32xf32>
    %153 = vector.multi_reduction <add>, %152, %cst_77 [0] : vector<2x32xf32> to vector<32xf32>
    %154 = vector.shape_cast %153 : vector<32xf32> to vector<1x32xf32>
    %cst_78 = arith.constant 2.000000e+00 : f32
    %155 = vector.broadcast %cst_78 : f32 to vector<1x32xf32>
    %156 = arith.divf %154, %155 : vector<1x32xf32>
    %157 = vector.broadcast %156 : vector<1x32xf32> to vector<2x32xf32>
    %158 = arith.subf %152, %157 : vector<2x32xf32>
    %159 = arith.mulf %158, %158 : vector<2x32xf32>
    %cst_79 = arith.constant dense<0.000000e+00> : vector<32xf32>
    %160 = vector.multi_reduction <add>, %159, %cst_79 [0] : vector<2x32xf32> to vector<32xf32>
    %161 = vector.shape_cast %160 : vector<32xf32> to vector<1x32xf32>
    %cst_80 = arith.constant 2.000000e+00 : f32
    %162 = vector.broadcast %cst_80 : f32 to vector<1x32xf32>
    %163 = arith.divf %161, %162 : vector<1x32xf32>
    %164 = vector.broadcast %156 : vector<1x32xf32> to vector<2x32xf32>
    %165 = arith.subf %152, %164 : vector<2x32xf32>
    %cst_81 = arith.constant 9.99999974E-6 : f32
    %166 = vector.broadcast %cst_81 : f32 to vector<1x32xf32>
    %167 = arith.addf %163, %166 : vector<1x32xf32>
    %168 = math.rsqrt %167 : vector<1x32xf32>
    %169 = vector.broadcast %168 : vector<1x32xf32> to vector<2x32xf32>
    %170 = arith.mulf %165, %169 : vector<2x32xf32>
    %171 = vector.broadcast %121 : vector<1x32xf32> to vector<2x32xf32>
    %172 = arith.mulf %170, %171 : vector<2x32xf32>
    %173 = vector.broadcast %122 : vector<1x32xf32> to vector<2x32xf32>
    %174 = arith.addf %172, %173 : vector<2x32xf32>
    %c0_82 = arith.constant 0 : index
    %c0_83 = arith.constant 0 : index
    %175 = vector.load %arg23[%c0_82, %c0_83] : memref<1x16xf32, #tpu.memory_space<vmem>>, vector<1x16xf32>
    %176 = vector.broadcast %175 : vector<1x16xf32> to vector<2x16xf32>
    %177 = arith.mulf %114, %176 : vector<2x16xf32>
    %c0_84 = arith.constant 0 : index
    %c0_85 = arith.constant 0 : index
    %178 = vector.load %arg24[%c0_84, %c0_85] : memref<32x16xf32, #tpu.memory_space<vmem>>, vector<32x16xf32>
    %cst_86 = arith.constant dense<0.000000e+00> : vector<2x16xf32>
    %179 = tpu.matmul %174, %178, %cst_86 {dimension_numbers = #tpu.dot_dimension_numbers<[1], [0], [0], [1], [0, 0, 1, 1], [], []>} : vector<2x32xf32>, vector<32x16xf32>, vector<2x16xf32> -> vector<2x16xf32>
    %180 = arith.addf %177, %179 : vector<2x16xf32>
    %c0_87 = arith.constant 0 : index
    %c0_88 = arith.constant 0 : index
    %181 = vector.load %arg25[%c0_87, %c0_88] : memref<1x16xf32, #tpu.memory_space<vmem>>, vector<1x16xf32>
    %182 = vector.broadcast %181 : vector<1x16xf32> to vector<2x16xf32>
    %183 = arith.addf %180, %182 : vector<2x16xf32>
    %c0_89 = arith.constant 0 : index
    %c0_90 = arith.constant 0 : index
    %184 = vector.load %arg26[%c0_89, %c0_90] : memref<2x16xf32, #tpu.memory_space<vmem>>, vector<2x16xf32>
    %185 = arith.addf %183, %184 : vector<2x16xf32>
    %c0_91 = arith.constant 0 : index
    %c0_92 = arith.constant 0 : index
    %186 = vector.load %arg27[%c0_91, %c0_92] : memref<2x16xf32, #tpu.memory_space<vmem>>, vector<2x16xf32>
    tpu.vector_store %arg27[%c0_91, %c0_92], %185 {strides = array<i32>} : memref<2x16xf32, #tpu.memory_space<vmem>>, vector<2x16xf32>,
    return
  }
}

</mosaic_0001>

<llo_original>
// kernel: _gears_forward_jit.2
$region0: #{_gears_forward_jit.2}
  #allocation0 [shape = 'u32[]', space=smem, size = 0x4, offset = 0x4, fixed_abs, tag = 'smem constant byte address 0x4 - core index']
  #allocation1 [shape = 'u32[72,128]{1,0:T(1,128)}', space=vmem, size = 0x9000, scoped, tag = 'internal scratch']
  %s0 = inlined_call_operand.smem [shape: u32[30], index: -1, kind: input, shape index: {}]
  %s1 = sld [smem:[%s0]]
  %s2 = scalar_lea.smem %s0, 1
  %s3 = sld [smem:[%s2]]
  %s4 = scalar_lea.smem %s0, 2
  %s5 = sld [smem:[%s4]]
  %s6 = scalar_lea.smem %s0, 3
  %s7 = sld [smem:[%s6]]
  %s8 = scalar_lea.smem %s0, 4
  %s9 = sld [smem:[%s8]]
  %s10 = scalar_lea.smem %s0, 5
  %s11 = sld [smem:[%s10]]
  %s12 = scalar_lea.smem %s0, 6
  %s13 = sld [smem:[%s12]]
  %s14 = scalar_lea.smem %s0, 7
  %s15 = sld [smem:[%s14]]
  %s16 = scalar_lea.smem %s0, 8
  %s17 = sld [smem:[%s16]]
  %s18 = scalar_lea.smem %s0, 9
  %s19 = sld [smem:[%s18]]
  %s20 = scalar_lea.smem %s0, 10
  %s21 = sld [smem:[%s20]]
  %s22 = scalar_lea.smem %s0, 11
  %s23 = sld [smem:[%s22]]
  %s24 = scalar_lea.smem %s0, 12
  %s25 = sld [smem:[%s24]]
  %s26 = scalar_lea.smem %s0, 13
  %s27 = sld [smem:[%s26]]
  %s28 = scalar_lea.smem %s0, 14
  %s29 = sld [smem:[%s28]]
  %s30 = scalar_lea.smem %s0, 15
  %s31 = sld [smem:[%s30]]
  %s32 = scalar_lea.smem %s0, 16
  %s33 = sld [smem:[%s32]]
  %s34 = scalar_lea.smem %s0, 17
  %s35 = sld [smem:[%s34]]
  %s36 = scalar_lea.smem %s0, 18
  %s37 = sld [smem:[%s36]]
  %s38 = scalar_lea.smem %s0, 19
  %s39 = sld [smem:[%s38]]
  %s40 = scalar_lea.smem %s0, 20
  %s41 = sld [smem:[%s40]]
  %s42 = scalar_lea.smem %s0, 21
  %s43 = sld [smem:[%s42]]
  %s44 = scalar_lea.smem %s0, 22
  %s45 = sld [smem:[%s44]]
  %s46 = scalar_lea.smem %s0, 23
  %s47 = sld [smem:[%s46]]
  %s48 = scalar_lea.smem %s0, 24
  %s49 = sld [smem:[%s48]]
  %s50 = scalar_lea.smem %s0, 25
  %s51 = sld [smem:[%s50]]
  %s52 = scalar_lea.smem %s0, 26
  %s53 = sld [smem:[%s52]]
  %s54 = scalar_lea.smem %s0, 27
  %s55 = sld [smem:[%s54]]
  %s56 = scalar_lea.smem %s0, 28
  %s57 = sld [smem:[%s56]]
  %s58 = scalar_lea.smem %s0, 29
  %s59 = sld [smem:[%s58]]
  %60 = xla_tuple %s57, %s59
  %s61 = sld [smem:[#allocation0]]
  $region202: #{_gears_forward_jit.2} parent=0
    _
  %s63 = ssub.s32 1, %s61
  %s64 = scalar_select 0, %s63, %s61
  $region1: #{_gears_forward_jit.2} parent=0
    #allocation2 [shape = 'u8[8192]{0}', space=vmem, size = 0x2000, scoped, tag = 'input window, operand 1, single buffered']
    #allocation3 [shape = 's32[1]{0}', space=sflag, size = 0x4, scoped, tag = 'scoped memory for _gears_forward_jit.2']
    #allocation4 [shape = 'u8[8192]{0}', space=vmem, size = 0x2000, scoped, tag = 'input window, operand 2, single buffered']
    #allocation5 [shape = 's32[1]{0}', space=sflag, size = 0x4, scoped, tag = 'scoped memory for _gears_forward_jit.2']
    #allocation6 [shape = 'u8[16384]{0}', space=vmem, size = 0x4000, scoped, tag = 'input window, operand 7, single buffered']
    #allocation7 [shape = 'u8[512]{0}', space=vmem, size = 0x400, scoped, tag = 'input window, operand 10, single buffered']
    #allocation8 [shape = 's32[1]{0}', space=sflag, size = 0x4, scoped, tag = 'scoped memory for _gears_forward_jit.2']
    #allocation9 [shape = 'u8[16384]{0}', space=vmem, size = 0x4000, scoped, tag = 'input window, operand 11, single buffered']
    #allocation10 [shape = 'u8[512]{0}', space=vmem, size = 0x400, scoped, tag = 'input window, operand 12, single buffered']
    #allocation11 [shape = 's32[1]{0}', space=sflag, size = 0x4, scoped, tag = 'scoped memory for _gears_forward_jit.2']
    #allocation12 [shape = 'u8[512]{0}', space=vmem, size = 0x400, scoped, tag = 'input window, operand 13, single buffered']
    #allocation13 [shape = 'u8[512]{0}', space=vmem, size = 0x400, scoped, tag = 'input window, operand 14, single buffered']
    #allocation14 [shape = 's32[1]{0}', space=sflag, size = 0x4, scoped, tag = 'scoped memory for _gears_forward_jit.2']
    #allocation15 [shape = 'u8[4096]{0}', space=vmem, size = 0x1000, scoped, tag = 'input window, operand 15, single buffered']
    #allocation16 [shape = 'u8[4096]{0}', space=vmem, size = 0x1000, scoped, tag = 'input window, operand 16, single buffered']
    #allocation17 [shape = 's32[1]{0}', space=sflag, size = 0x4, scoped, tag = 'scoped memory for _gears_forward_jit.2']
    #allocation18 [shape = 'u8[16384]{0}', space=vmem, size = 0x4000, scoped, tag = 'input window, operand 20, single buffered']
    #allocation19 [shape = 'u8[512]{0}', space=vmem, size = 0x400, scoped, tag = 'input window, operand 21, single buffered']
    #allocation20 [shape = 's32[1]{0}', space=sflag, size = 0x4, scoped, tag = 'scoped memory for _gears_forward_jit.2']
    #allocation21 [shape = 'u8[512]{0}', space=vmem, size = 0x400, scoped, tag = 'input window, operand 22, single buffered']
    #allocation22 [shape = 'u8[512]{0}', space=vmem, size = 0x400, scoped, tag = 'input window, operand 23, single buffered']
    #allocation23 [shape = 's32[1]{0}', space=sflag, size = 0x4, scoped, tag = 'scoped memory for _gears_forward_jit.2']
    #allocation24 [shape = 'u8[16384]{0}', space=vmem, size = 0x4000, scoped, tag = 'input window, operand 24, single buffered']
    #allocation25 [shape = 'u8[512]{0}', space=vmem, size = 0x400, scoped, tag = 'input window, operand 25, single buffered']
    #allocation26 [shape = 's32[1]{0}', space=sflag, size = 0x4, scoped, tag = 'scoped memory for _gears_forward_jit.2']
    #allocation27 [shape = 'u8[512]{0}', space=vmem, size = 0x400, scoped, tag = 'input window, operand 26, single buffered']
    #allocation28 [shape = 'u8[512]{0}', space=vmem, size = 0x400, scoped, tag = 'input window, operand 27, single buffered']
    #allocation29 [shape = 's32[1]{0}', space=sflag, size = 0x4, scoped, tag = 'scoped memory for _gears_forward_jit.2']
    %65 = vsyncpa [#allocation3], 0
    %66 = vsyncpa [#allocation5], 0
    %67 = vsyncpa [#allocation8], 0
    %68 = vsyncpa [#allocation11], 0
    %69 = vsyncpa [#allocation14], 0
    %70 = vsyncpa [#allocation17], 0
    %71 = vsyncpa [#allocation20], 0
    %72 = vsyncpa [#allocation23], 0
    %73 = vsyncpa [#allocation26], 0
    %74 = vsyncpa [#allocation29], 0
    // Predicated region
    $region2: #{_gears_forward_jit.2} parent=1 // pred_check
      _
    $region3: #{_gears_forward_jit.2} parent=1 // pred_check_branch
      %76 = sbr.rel (0) target = $region5
    $region4: #{_gears_forward_jit.2} parent=1 // pred_region
      _
    $region5: #{_gears_forward_jit.2} parent=1 // pred_fallthru
      _
    // Predicated region
    $region6: #{_gears_forward_jit.2} parent=1 // pred_check
      _
    $region7: #{_gears_forward_jit.2} parent=1 // pred_check_branch
      %78 = sbr.rel (0) target = $region9
    $region8: #{_gears_forward_jit.2} parent=1 // pred_region
      %80 = vsyncadd [#allocation3], 0
      %s81 = sshll.u32 %s3, 4
      %s82 = int_to_ptr.hbm [resolvable:$true] %s81
      %s83 = sshll.u32 [#allocation2], 4
      %s84 = int_to_ptr.vmem [resolvable:$true] %s83
      %89 = dma.hbm_to_vmem [thread:$0]  %s82, 256, %s84, [#allocation3], 128, 128, 8
    $region9: #{_gears_forward_jit.2} parent=1 // pred_fallthru
      _
    // Predicated region
    $region10: #{_gears_forward_jit.2} parent=1 // pred_check
      _
    $region11: #{_gears_forward_jit.2} parent=1 // pred_check_branch
      %91 = sbr.rel (0) target = $region13
    $region12: #{_gears_forward_jit.2} parent=1 // pred_region
      %93 = vsyncadd [#allocation5], 0
      %s94 = sshll.u32 %s5, 4
      %s95 = int_to_ptr.hbm [resolvable:$true] %s94
      %s96 = sshll.u32 [#allocation4], 4
      %s97 = int_to_ptr.vmem [resolvable:$true] %s96
      %102 = dma.hbm_to_vmem [thread:$0]  %s95, 256, %s97, [#allocation5], 128, 128, 8
    $region13: #{_gears_forward_jit.2} parent=1 // pred_fallthru
      _
    // Predicated region
    $region14: #{_gears_forward_jit.2} parent=1 // pred_check
      _
    $region15: #{_gears_forward_jit.2} parent=1 // pred_check_branch
      %104 = sbr.rel (0) target = $region17
    $region16: #{_gears_forward_jit.2} parent=1 // pred_region
      _
    $region17: #{_gears_forward_jit.2} parent=1 // pred_fallthru
      _
    // Predicated region
    $region18: #{_gears_forward_jit.2} parent=1 // pred_check
      _
    $region19: #{_gears_forward_jit.2} parent=1 // pred_check_branch
      %106 = sbr.rel (0) target = $region21
    $region20: #{_gears_forward_jit.2} parent=1 // pred_region
      _
    $region21: #{_gears_forward_jit.2} parent=1 // pred_fallthru
      _
    // Predicated region
    $region22: #{_gears_forward_jit.2} parent=1 // pred_check
      _
    $region23: #{_gears_forward_jit.2} parent=1 // pred_check_branch
      %108 = sbr.rel (0) target = $region25
    $region24: #{_gears_forward_jit.2} parent=1 // pred_region
      _
    $region25: #{_gears_forward_jit.2} parent=1 // pred_fallthru
      _
    // Predicated region
    $region26: #{_gears_forward_jit.2} parent=1 // pred_check
      _
    $region27: #{_gears_forward_jit.2} parent=1 // pred_check_branch
      %110 = sbr.rel (0) target = $region29
    $region28: #{_gears_forward_jit.2} parent=1 // pred_region
      _
    $region29: #{_gears_forward_jit.2} parent=1 // pred_fallthru
      _
    // Predicated region
    $region30: #{_gears_forward_jit.2} parent=1 // pred_check
      _
    $region31: #{_gears_forward_jit.2} parent=1 // pred_check_branch
      %112 = sbr.rel (0) target = $region33
    $region32: #{_gears_forward_jit.2} parent=1 // pred_region
      %114 = vsyncadd [#allocation5], 0
      %s115 = sshll.u32 %s15, 4
      %s116 = int_to_ptr.hbm [resolvable:$true] %s115
      %s117 = sshll.u32 [#allocation6], 4
      %s118 = int_to_ptr.vmem [resolvable:$true] %s117
      %123 = dma.hbm_to_vmem [thread:$0]  %s116, 512, %s118, [#allocation5], 128, 128, 8
    $region33: #{_gears_forward_jit.2} parent=1 // pred_fallthru
      _
    // Predicated region
    $region34: #{_gears_forward_jit.2} parent=1 // pred_check
      _
    $region35: #{_gears_forward_jit.2} parent=1 // pred_check_branch
      %125 = sbr.rel (0) target = $region37
    $region36: #{_gears_forward_jit.2} parent=1 // pred_region
      _
    $region37: #{_gears_forward_jit.2} parent=1 // pred_fallthru
      _
    // Predicated region
    $region38: #{_gears_forward_jit.2} parent=1 // pred_check
      _
    $region39: #{_gears_forward_jit.2} parent=1 // pred_check_branch
      %127 = sbr.rel (0) target = $region41
    $region40: #{_gears_forward_jit.2} parent=1 // pred_region
      _
    $region41: #{_gears_forward_jit.2} parent=1 // pred_fallthru
      _
    // Predicated region
    $region42: #{_gears_forward_jit.2} parent=1 // pred_check
      _
    $region43: #{_gears_forward_jit.2} parent=1 // pred_check_branch
      %129 = sbr.rel (0) target = $region45
    $region44: #{_gears_forward_jit.2} parent=1 // pred_region
      %131 = vsyncadd [#allocation8], 0
      %s133 = sshll.u32 %s21, 4
      %s134 = int_to_ptr.hbm [resolvable:$true] %s133
      %s135 = sshll.u32 [#allocation7], 4
      %s136 = int_to_ptr.vmem [resolvable:$true] %s135
      %138 = dma.hbm_to_vmem [thread:$0]  %s134, 16, %s136, [#allocation8]
    $region45: #{_gears_forward_jit.2} parent=1 // pred_fallthru
      _
    // Predicated region
    $region46: #{_gears_forward_jit.2} parent=1 // pred_check
      _
    $region47: #{_gears_forward_jit.2} parent=1 // pred_check_branch
      %140 = sbr.rel (0) target = $region49
    $region48: #{_gears_forward_jit.2} parent=1 // pred_region
      %142 = vsyncadd [#allocation8], 0
      %s143 = sshll.u32 %s23, 4
      %s144 = int_to_ptr.hbm [resolvable:$true] %s143
      %s145 = sshll.u32 [#allocation9], 4
      %s146 = int_to_ptr.vmem [resolvable:$true] %s145
      %151 = dma.hbm_to_vmem [thread:$0]  %s144, 512, %s146, [#allocation8], 128, 128, 8
    $region49: #{_gears_forward_jit.2} parent=1 // pred_fallthru
      _
    // Predicated region
    $region50: #{_gears_forward_jit.2} parent=1 // pred_check
      _
    $region51: #{_gears_forward_jit.2} parent=1 // pred_check_branch
      %153 = sbr.rel (0) target = $region53
    $region52: #{_gears_forward_jit.2} parent=1 // pred_region
      %155 = vsyncadd [#allocation11], 0
      %s157 = sshll.u32 %s25, 4
      %s158 = int_to_ptr.hbm [resolvable:$true] %s157
      %s159 = sshll.u32 [#allocation10], 4
      %s160 = int_to_ptr.vmem [resolvable:$true] %s159
      %162 = dma.hbm_to_vmem [thread:$0]  %s158, 16, %s160, [#allocation11]
    $region53: #{_gears_forward_jit.2} parent=1 // pred_fallthru
      _
    // Predicated region
    $region54: #{_gears_forward_jit.2} parent=1 // pred_check
      _
    $region55: #{_gears_forward_jit.2} parent=1 // pred_check_branch
      %164 = sbr.rel (0) target = $region57
    $region56: #{_gears_forward_jit.2} parent=1 // pred_region
      %166 = vsyncadd [#allocation11], 0
      %s168 = sshll.u32 %s27, 4
      %s169 = int_to_ptr.hbm [resolvable:$true] %s168
      %s170 = sshll.u32 [#allocation12], 4
      %s171 = int_to_ptr.vmem [resolvable:$true] %s170
      %173 = dma.hbm_to_vmem [thread:$0]  %s169, 16, %s171, [#allocation11]
    $region57: #{_gears_forward_jit.2} parent=1 // pred_fallthru
      _
    // Predicated region
    $region58: #{_gears_forward_jit.2} parent=1 // pred_check
      _
    $region59: #{_gears_forward_jit.2} parent=1 // pred_check_branch
      %175 = sbr.rel (0) target = $region61
    $region60: #{_gears_forward_jit.2} parent=1 // pred_region
      %177 = vsyncadd [#allocation14], 0
      %s179 = sshll.u32 %s29, 4
      %s180 = int_to_ptr.hbm [resolvable:$true] %s179
      %s181 = sshll.u32 [#allocation13], 4
      %s182 = int_to_ptr.vmem [resolvable:$true] %s181
      %184 = dma.hbm_to_vmem [thread:$0]  %s180, 16, %s182, [#allocation14]
    $region61: #{_gears_forward_jit.2} parent=1 // pred_fallthru
      _
    // Predicated region
    $region62: #{_gears_forward_jit.2} parent=1 // pred_check
      _
    $region63: #{_gears_forward_jit.2} parent=1 // pred_check_branch
      %186 = sbr.rel (0) target = $region65
    $region64: #{_gears_forward_jit.2} parent=1 // pred_region
      %188 = vsyncadd [#allocation14], 0
      %s190 = sshll.u32 %s31, 4
      %s191 = int_to_ptr.hbm [resolvable:$true] %s190
      %s192 = sshll.u32 [#allocation15], 4
      %s193 = int_to_ptr.vmem [resolvable:$true] %s192
      %195 = dma.hbm_to_vmem [thread:$0]  %s191, 128, %s193, [#allocation14]
    $region65: #{_gears_forward_jit.2} parent=1 // pred_fallthru
      _
    // Predicated region
    $region66: #{_gears_forward_jit.2} parent=1 // pred_check
      _
    $region67: #{_gears_forward_jit.2} parent=1 // pred_check_branch
      %197 = sbr.rel (0) target = $region69
    $region68: #{_gears_forward_jit.2} parent=1 // pred_region
      %199 = vsyncadd [#allocation17], 0
      %s201 = sshll.u32 %s33, 4
      %s202 = int_to_ptr.hbm [resolvable:$true] %s201
      %s203 = sshll.u32 [#allocation16], 4
      %s204 = int_to_ptr.vmem [resolvable:$true] %s203
      %206 = dma.hbm_to_vmem [thread:$0]  %s202, 128, %s204, [#allocation17]
    $region69: #{_gears_forward_jit.2} parent=1 // pred_fallthru
      _
    // Predicated region
    $region70: #{_gears_forward_jit.2} parent=1 // pred_check
      _
    $region71: #{_gears_forward_jit.2} parent=1 // pred_check_branch
      %208 = sbr.rel (0) target = $region73
    $region72: #{_gears_forward_jit.2} parent=1 // pred_region
      _
    $region73: #{_gears_forward_jit.2} parent=1 // pred_fallthru
      _
    // Predicated region
    $region74: #{_gears_forward_jit.2} parent=1 // pred_check
      _
    $region75: #{_gears_forward_jit.2} parent=1 // pred_check_branch
      %210 = sbr.rel (0) target = $region77
    $region76: #{_gears_forward_jit.2} parent=1 // pred_region
      _
    $region77: #{_gears_forward_jit.2} parent=1 // pred_fallthru
      _
    // Predicated region
    $region78: #{_gears_forward_jit.2} parent=1 // pred_check
      _
    $region79: #{_gears_forward_jit.2} parent=1 // pred_check_branch
      %212 = sbr.rel (0) target = $region81
    $region80: #{_gears_forward_jit.2} parent=1 // pred_region
      _
    $region81: #{_gears_forward_jit.2} parent=1 // pred_fallthru
      _
    // Predicated region
    $region82: #{_gears_forward_jit.2} parent=1 // pred_check
      _
    $region83: #{_gears_forward_jit.2} parent=1 // pred_check_branch
      %214 = sbr.rel (0) target = $region85
    $region84: #{_gears_forward_jit.2} parent=1 // pred_region
      %216 = vsyncadd [#allocation17], 0
      %s217 = sshll.u32 %s41, 4
      %s218 = int_to_ptr.hbm [resolvable:$true] %s217
      %s219 = sshll.u32 [#allocation18], 4
      %s220 = int_to_ptr.vmem [resolvable:$true] %s219
      %225 = dma.hbm_to_vmem [thread:$0]  %s218, 512, %s220, [#allocation17], 128, 128, 8
    $region85: #{_gears_forward_jit.2} parent=1 // pred_fallthru
      _
    // Predicated region
    $region86: #{_gears_forward_jit.2} parent=1 // pred_check
      _
    $region87: #{_gears_forward_jit.2} parent=1 // pred_check_branch
      %227 = sbr.rel (0) target = $region89
    $region88: #{_gears_forward_jit.2} parent=1 // pred_region
      %229 = vsyncadd [#allocation20], 0
      %s231 = sshll.u32 %s43, 4
      %s232 = int_to_ptr.hbm [resolvable:$true] %s231
      %s233 = sshll.u32 [#allocation19], 4
      %s234 = int_to_ptr.vmem [resolvable:$true] %s233
      %236 = dma.hbm_to_vmem [thread:$0]  %s232, 16, %s234, [#allocation20]
    $region89: #{_gears_forward_jit.2} parent=1 // pred_fallthru
      _
    // Predicated region
    $region90: #{_gears_forward_jit.2} parent=1 // pred_check
      _
    $region91: #{_gears_forward_jit.2} parent=1 // pred_check_branch
      %238 = sbr.rel (0) target = $region93
    $region92: #{_gears_forward_jit.2} parent=1 // pred_region
      %240 = vsyncadd [#allocation20], 0
      %s242 = sshll.u32 %s45, 4
      %s243 = int_to_ptr.hbm [resolvable:$true] %s242
      %s244 = sshll.u32 [#allocation21], 4
      %s245 = int_to_ptr.vmem [resolvable:$true] %s244
      %247 = dma.hbm_to_vmem [thread:$0]  %s243, 16, %s245, [#allocation20]
    $region93: #{_gears_forward_jit.2} parent=1 // pred_fallthru
      _
    // Predicated region
    $region94: #{_gears_forward_jit.2} parent=1 // pred_check
      _
    $region95: #{_gears_forward_jit.2} parent=1 // pred_check_branch
      %249 = sbr.rel (0) target = $region97
    $region96: #{_gears_forward_jit.2} parent=1 // pred_region
      %251 = vsyncadd [#allocation23], 0
      %s253 = sshll.u32 %s47, 4
      %s254 = int_to_ptr.hbm [resolvable:$true] %s253
      %s255 = sshll.u32 [#allocation22], 4
      %s256 = int_to_ptr.vmem [resolvable:$true] %s255
      %258 = dma.hbm_to_vmem [thread:$0]  %s254, 16, %s256, [#allocation23]
    $region97: #{_gears_forward_jit.2} parent=1 // pred_fallthru
      _
    // Predicated region
    $region98: #{_gears_forward_jit.2} parent=1 // pred_check
      _
    $region99: #{_gears_forward_jit.2} parent=1 // pred_check_branch
      %260 = sbr.rel (0) target = $region101
    $region100: #{_gears_forward_jit.2} parent=1 // pred_region
      %262 = vsyncadd [#allocation23], 0
      %s263 = sshll.u32 %s49, 4
      %s264 = int_to_ptr.hbm [resolvable:$true] %s263
      %s265 = sshll.u32 [#allocation24], 4
      %s266 = int_to_ptr.vmem [resolvable:$true] %s265
      %271 = dma.hbm_to_vmem [thread:$0]  %s264, 512, %s266, [#allocation23], 128, 128, 8
    $region101: #{_gears_forward_jit.2} parent=1 // pred_fallthru
      _
    // Predicated region
    $region102: #{_gears_forward_jit.2} parent=1 // pred_check
      _
    $region103: #{_gears_forward_jit.2} parent=1 // pred_check_branch
      %273 = sbr.rel (0) target = $region105
    $region104: #{_gears_forward_jit.2} parent=1 // pred_region
      %275 = vsyncadd [#allocation26], 0
      %s277 = sshll.u32 %s51, 4
      %s278 = int_to_ptr.hbm [resolvable:$true] %s277
      %s279 = sshll.u32 [#allocation25], 4
      %s280 = int_to_ptr.vmem [resolvable:$true] %s279
      %282 = dma.hbm_to_vmem [thread:$0]  %s278, 16, %s280, [#allocation26]
    $region105: #{_gears_forward_jit.2} parent=1 // pred_fallthru
      _
    // Predicated region
    $region106: #{_gears_forward_jit.2} parent=1 // pred_check
      _
    $region107: #{_gears_forward_jit.2} parent=1 // pred_check_branch
      %284 = sbr.rel (0) target = $region109
    $region108: #{_gears_forward_jit.2} parent=1 // pred_region
      %286 = vsyncadd [#allocation26], 0
      %s288 = sshll.u32 %s53, 4
      %s289 = int_to_ptr.hbm [resolvable:$true] %s288
      %s290 = sshll.u32 [#allocation27], 4
      %s291 = int_to_ptr.vmem [resolvable:$true] %s290
      %293 = dma.hbm_to_vmem [thread:$0]  %s289, 16, %s291, [#allocation26]
    $region109: #{_gears_forward_jit.2} parent=1 // pred_fallthru
      _
    // Predicated region
    $region110: #{_gears_forward_jit.2} parent=1 // pred_check
      _
    $region111: #{_gears_forward_jit.2} parent=1 // pred_check_branch
      %295 = sbr.rel (0) target = $region113
    $region112: #{_gears_forward_jit.2} parent=1 // pred_region
      %297 = vsyncadd [#allocation29], 0
      %s299 = sshll.u32 %s55, 4
      %s300 = int_to_ptr.hbm [resolvable:$true] %s299
      %s301 = sshll.u32 [#allocation28], 4
      %s302 = int_to_ptr.vmem [resolvable:$true] %s301
      %304 = dma.hbm_to_vmem [thread:$0]  %s300, 16, %s302, [#allocation29]
    $region113: #{_gears_forward_jit.2} parent=1 // pred_fallthru
      _
    // Predicated region
    $region114: #{_gears_forward_jit.2} parent=1 // pred_check
      _
    $region115: #{_gears_forward_jit.2} parent=1 // pred_check_branch
      %306 = sbr.rel (0) target = $region117
    $region116: #{_gears_forward_jit.2} parent=1 // pred_region
      %308 = dma.done [#allocation3], 256
    $region117: #{_gears_forward_jit.2} parent=1 // pred_fallthru
      _
    // Predicated region
    $region118: #{_gears_forward_jit.2} parent=1 // pred_check
      _
    $region119: #{_gears_forward_jit.2} parent=1 // pred_check_branch
      %310 = sbr.rel (0) target = $region121
    $region120: #{_gears_forward_jit.2} parent=1 // pred_region
      %312 = dma.done [#allocation5], 256
    $region121: #{_gears_forward_jit.2} parent=1 // pred_fallthru
      _
    // Predicated region
    $region122: #{_gears_forward_jit.2} parent=1 // pred_check
      _
    $region123: #{_gears_forward_jit.2} parent=1 // pred_check_branch
      %314 = sbr.rel (0) target = $region125
    $region124: #{_gears_forward_jit.2} parent=1 // pred_region
      %316 = dma.done [#allocation5], 512
    $region125: #{_gears_forward_jit.2} parent=1 // pred_fallthru
      _
    // Predicated region
    $region126: #{_gears_forward_jit.2} parent=1 // pred_check
      _
    $region127: #{_gears_forward_jit.2} parent=1 // pred_check_branch
      %318 = sbr.rel (0) target = $region129
    $region128: #{_gears_forward_jit.2} parent=1 // pred_region
      %320 = dma.done [#allocation8], 16
    $region129: #{_gears_forward_jit.2} parent=1 // pred_fallthru
      _
    // Predicated region
    $region130: #{_gears_forward_jit.2} parent=1 // pred_check
      _
    $region131: #{_gears_forward_jit.2} parent=1 // pred_check_branch
      %322 = sbr.rel (0) target = $region133
    $region132: #{_gears_forward_jit.2} parent=1 // pred_region
      %324 = dma.done [#allocation8], 512
    $region133: #{_gears_forward_jit.2} parent=1 // pred_fallthru
      _
    // Predicated region
    $region134: #{_gears_forward_jit.2} parent=1 // pred_check
      _
    $region135: #{_gears_forward_jit.2} parent=1 // pred_check_branch
      %326 = sbr.rel (0) target = $region137
    $region136: #{_gears_forward_jit.2} parent=1 // pred_region
      %328 = dma.done [#allocation11], 16
    $region137: #{_gears_forward_jit.2} parent=1 // pred_fallthru
      _
    // Predicated region
    $region138: #{_gears_forward_jit.2} parent=1 // pred_check
      _
    $region139: #{_gears_forward_jit.2} parent=1 // pred_check_branch
      %330 = sbr.rel (0) target = $region141
    $region140: #{_gears_forward_jit.2} parent=1 // pred_region
      %332 = dma.done [#allocation11], 16
    $region141: #{_gears_forward_jit.2} parent=1 // pred_fallthru
      _
    // Predicated region
    $region142: #{_gears_forward_jit.2} parent=1 // pred_check
      _
    $region143: #{_gears_forward_jit.2} parent=1 // pred_check_branch
      %334 = sbr.rel (0) target = $region145
    $region144: #{_gears_forward_jit.2} parent=1 // pred_region
      %336 = dma.done [#allocation14], 16
    $region145: #{_gears_forward_jit.2} parent=1 // pred_fallthru
      _
    // Predicated region
    $region146: #{_gears_forward_jit.2} parent=1 // pred_check
      _
    $region147: #{_gears_forward_jit.2} parent=1 // pred_check_branch
      %338 = sbr.rel (0) target = $region149
    $region148: #{_gears_forward_jit.2} parent=1 // pred_region
      %340 = dma.done [#allocation14], 128
    $region149: #{_gears_forward_jit.2} parent=1 // pred_fallthru
      _
    // Predicated region
    $region150: #{_gears_forward_jit.2} parent=1 // pred_check
      _
    $region151: #{_gears_forward_jit.2} parent=1 // pred_check_branch
      %342 = sbr.rel (0) target = $region153
    $region152: #{_gears_forward_jit.2} parent=1 // pred_region
      %344 = dma.done [#allocation17], 128
    $region153: #{_gears_forward_jit.2} parent=1 // pred_fallthru
      _
    // Predicated region
    $region154: #{_gears_forward_jit.2} parent=1 // pred_check
      _
    $region155: #{_gears_forward_jit.2} parent=1 // pred_check_branch
      %346 = sbr.rel (0) target = $region157
    $region156: #{_gears_forward_jit.2} parent=1 // pred_region
      %348 = dma.done [#allocation17], 512
    $region157: #{_gears_forward_jit.2} parent=1 // pred_fallthru
      _
    // Predicated region
    $region158: #{_gears_forward_jit.2} parent=1 // pred_check
      _
    $region159: #{_gears_forward_jit.2} parent=1 // pred_check_branch
      %350 = sbr.rel (0) target = $region161
    $region160: #{_gears_forward_jit.2} parent=1 // pred_region
      %352 = dma.done [#allocation20], 16
    $region161: #{_gears_forward_jit.2} parent=1 // pred_fallthru
      _
    // Predicated region
    $region162: #{_gears_forward_jit.2} parent=1 // pred_check
      _
    $region163: #{_gears_forward_jit.2} parent=1 // pred_check_branch
      %354 = sbr.rel (0) target = $region165
    $region164: #{_gears_forward_jit.2} parent=1 // pred_region
      %356 = dma.done [#allocation20], 16
    $region165: #{_gears_forward_jit.2} parent=1 // pred_fallthru
      _
    // Predicated region
    $region166: #{_gears_forward_jit.2} parent=1 // pred_check
      _
    $region167: #{_gears_forward_jit.2} parent=1 // pred_check_branch
      %358 = sbr.rel (0) target = $region169
    $region168: #{_gears_forward_jit.2} parent=1 // pred_region
      %360 = dma.done [#allocation23], 16
    $region169: #{_gears_forward_jit.2} parent=1 // pred_fallthru
      _
    // Predicated region
    $region170: #{_gears_forward_jit.2} parent=1 // pred_check
      _
    $region171: #{_gears_forward_jit.2} parent=1 // pred_check_branch
      %362 = sbr.rel (0) target = $region173
    $region172: #{_gears_forward_jit.2} parent=1 // pred_region
      %364 = dma.done [#allocation23], 512
    $region173: #{_gears_forward_jit.2} parent=1 // pred_fallthru
      _
    // Predicated region
    $region174: #{_gears_forward_jit.2} parent=1 // pred_check
      _
    $region175: #{_gears_forward_jit.2} parent=1 // pred_check_branch
      %366 = sbr.rel (0) target = $region177
    $region176: #{_gears_forward_jit.2} parent=1 // pred_region
      %368 = dma.done [#allocation26], 16
    $region177: #{_gears_forward_jit.2} parent=1 // pred_fallthru
      _
    // Predicated region
    $region178: #{_gears_forward_jit.2} parent=1 // pred_check
      _
    $region179: #{_gears_forward_jit.2} parent=1 // pred_check_branch
      %370 = sbr.rel (0) target = $region181
    $region180: #{_gears_forward_jit.2} parent=1 // pred_region
      %372 = dma.done [#allocation26], 16
    $region181: #{_gears_forward_jit.2} parent=1 // pred_fallthru
      _
    // Predicated region
    $region182: #{_gears_forward_jit.2} parent=1 // pred_check
      _
    $region183: #{_gears_forward_jit.2} parent=1 // pred_check_branch
      %374 = sbr.rel (0) target = $region185
    $region184: #{_gears_forward_jit.2} parent=1 // pred_region
      %376 = dma.done [#allocation29], 16
    $region185: #{_gears_forward_jit.2} parent=1 // pred_fallthru
      _
    %v377 = vld [vmem:[%s1] sm:$0xff]
    %v378 = vld [vmem:[%s1 + $0x8] sm:$0xff]
    %v379 = vmul.f32 %v377, %v377
    %v380 = vmul.f32 %v378, %v378
    %vm381 = vcmask 261120
    %v382 = vsel %vm381, %v379, 0.0
    %383 = vadd.xlane.f32.xlu0 %v382
    %v384 = vpop.xlane.xlu0 %383
    %v385 = vsel %vm381, %v380, 0.0
    %386 = vadd.xlane.f32.xlu0 %v385
    %v387 = vpop.xlane.xlu0 %386
    %v388 = vrsqrt.pop %v384
    %v389 = vmul.f32 %v388, %v384
    %v390 = vmul.f32 %v389, %v388
    %v391 = vmul.f32 0.5, %v390
    %v392 = vsub.f32 1.5, %v391
    %v393 = vmul.f32 %v388, %v392
    %v394 = vmul.f32 %v384, %v393
    %vm395 = vcmp.eq.f32.partialorder %v384, inf
    %v396 = vsel %vm395, %v384, %v394
    %vm397 = vcmp.eq.f32.partialorder %v384, 0.0
    %v398 = vand.u32 %v384, 2147483648
    %v399 = vsel %vm397, %v398, %v396
    %v400 = vrsqrt.pop %v387
    %v401 = vmul.f32 %v400, %v387
    %v402 = vmul.f32 %v401, %v400
    %v403 = vmul.f32 0.5, %v402
    %v404 = vsub.f32 1.5, %v403
    %v405 = vmul.f32 %v400, %v404
    %v406 = vmul.f32 %v387, %v405
    %vm407 = vcmp.eq.f32.partialorder %v387, inf
    %v408 = vsel %vm407, %v387, %v406
    %vm409 = vcmp.eq.f32.partialorder %v387, 0.0
    %v410 = vand.u32 %v387, 2147483648
    %v411 = vsel %vm409, %v410, %v408
    %vm412 = vcmp.gt.f32.partialorder %v399, 1.0
    %vm413 = vcmp.gt.f32.partialorder %v411, 1.0
    %v414 = vadd.f32 %v399, 1e-07
    %v415 = vadd.f32 %v411, 1e-07
    %v416 = vrcp.pop %v414
    %v417 = vmul.f32 %v414, %v416
    %v418 = vsub.f32 1.0, %v417
    %v419 = vmul.f32 %v416, %v418
    %v420 = vadd.f32 %v416, %v419
    %vm421 = vweird.f32 %v414
    %vm422 = vweird.f32 %v416
    %vm423 = vmor %vm421, %vm422
    %v424 = vsel %vm423, %v416, %v420
    %v425 = vand.u32 2147483647, %v414
    %vm426 = vcmp.eq.f32.partialorder %v425, 8.507059e+37
    %v427 = vand.u32 %v414, 2147483648
    %v428 = vor.u32 1.1754944e-38, %v427
    %v429 = vsel %vm426, %v428, %v424
    %v430 = vmul.f32 1.0, %v429
    %v431 = vrcp.pop %v415
    %v432 = vmul.f32 %v415, %v431
    %v433 = vsub.f32 1.0, %v432
    %v434 = vmul.f32 %v431, %v433
    %v435 = vadd.f32 %v431, %v434
    %vm436 = vweird.f32 %v415
    %vm437 = vweird.f32 %v431
    %vm438 = vmor %vm436, %vm437
    %v439 = vsel %vm438, %v431, %v435
    %v440 = vand.u32 2147483647, %v415
    %vm441 = vcmp.eq.f32.partialorder %v440, 8.507059e+37
    %v442 = vand.u32 %v415, 2147483648
    %v443 = vor.u32 1.1754944e-38, %v442
    %v444 = vsel %vm441, %v443, %v439
    %v445 = vmul.f32 1.0, %v444
    %v446 = vsel %vm412, %v430, 1.0
    %v447 = vsel %vm413, %v445, 1.0
    %v448 = vmul.f32 %v377, %v446
    %v449 = vmul.f32 %v378, %v447
    %v450 = vld [vmem:[%s11] sm:$0x1]
    %v451 = vld [vmem:[%s13] sm:$0x1]
    %v452 = vsel %vm381, %v448, 0.0
    %v453 = vsel %vm381, %v449, 0.0
    %v454 = vadd.f32 %v452, %v453
    %v455 = vrot.slane %v454, 4
    %v456 = vadd.f32 %v454, %v455
    %v457 = vrot.slane %v456, 2
    %v458 = vadd.f32 %v456, %v457
    %v459 = vrot.slane %v458, 1
    %v460 = vadd.f32 %v458, %v459
    %v461 = vrcp.pop 16.0
    %v462 = vmul.f32 16.0, %v461
    %v463 = vsub.f32 1.0, %v462
    %v464 = vmul.f32 %v461, %v463
    %v465 = vadd.f32 %v461, %v464
    %vm466 = vweird.f32 %v461
    %v467 = vsel %vm466, %v461, %v465
    %v468 = vmul.f32 %v460, %v467
    %v469 = vsub.f32 %v448, %v468
    %v470 = vsub.f32 %v449, %v468
    %v471 = vmul.f32 %v469, %v469
    %v472 = vmul.f32 %v470, %v470
    %v473 = vsel %vm381, %v471, 0.0
    %v474 = vsel %vm381, %v472, 0.0
    %v475 = vadd.f32 %v473, %v474
    %v476 = vrot.slane %v475, 4
    %v477 = vadd.f32 %v475, %v476
    %v478 = vrot.slane %v477, 2
    %v479 = vadd.f32 %v477, %v478
    %v480 = vrot.slane %v479, 1
    %v481 = vadd.f32 %v479, %v480
    %v482 = vmul.f32 %v481, %v467
    %v483 = vadd.f32 %v482, 1e-05
    %v484 = vrsqrt.pop %v483
    %v485 = vmul.f32 %v484, %v483
    %v486 = vmul.f32 %v485, %v484
    %v487 = vmul.f32 0.5, %v486
    %v488 = vsub.f32 1.5, %v487
    %v489 = vmul.f32 %v484, %v488
    %vm490 = vweird.f32 %v483
    %vm491 = vweird.f32 %v484
    %vm492 = vmor %vm490, %vm491
    %v493 = vsel %vm492, %v484, %v489
    %v494 = vmul.f32 %v469, %v493
    %v495 = vmul.f32 %v470, %v493
    %v497 = vperm.slane %v450, 0
    %v499 = vmul.f32 %v494, %v497
    %v500 = vmul.f32 %v495, %v497
    %v502 = vperm.slane %v451, 0
    %v504 = vadd.f32 %v499, %v502
    %v505 = vadd.f32 %v500, %v502
    %v506 = vmax.f32 %v504, 0.0
    %v507 = vmax.f32 %v505, 0.0
    %v508 = vld [vmem:[#allocation2] sm:$0xff]
    %v509 = vld [vmem:[#allocation2 + $0x8] sm:$0xff]
    %v510 = vmul.f32 %v508, %v508
    %v511 = vmul.f32 %v509, %v509
    %v512 = vsel %vm381, %v510, 0.0
    %513 = vadd.xlane.f32.xlu0 %v512
    %v514 = vpop.xlane.xlu0 %513
    %v515 = vsel %vm381, %v511, 0.0
    %516 = vadd.xlane.f32.xlu0 %v515
    %v517 = vpop.xlane.xlu0 %516
    %v518 = vrsqrt.pop %v514
    %v519 = vmul.f32 %v518, %v514
    %v520 = vmul.f32 %v519, %v518
    %v521 = vmul.f32 0.5, %v520
    %v522 = vsub.f32 1.5, %v521
    %v523 = vmul.f32 %v518, %v522
    %v524 = vmul.f32 %v514, %v523
    %vm525 = vcmp.eq.f32.partialorder %v514, inf
    %v526 = vsel %vm525, %v514, %v524
    %vm527 = vcmp.eq.f32.partialorder %v514, 0.0
    %v528 = vand.u32 %v514, 2147483648
    %v529 = vsel %vm527, %v528, %v526
    %v530 = vrsqrt.pop %v517
    %v531 = vmul.f32 %v530, %v517
    %v532 = vmul.f32 %v531, %v530
    %v533 = vmul.f32 0.5, %v532
    %v534 = vsub.f32 1.5, %v533
    %v535 = vmul.f32 %v530, %v534
    %v536 = vmul.f32 %v517, %v535
    %vm537 = vcmp.eq.f32.partialorder %v517, inf
    %v538 = vsel %vm537, %v517, %v536
    %vm539 = vcmp.eq.f32.partialorder %v517, 0.0
    %v540 = vand.u32 %v517, 2147483648
    %v541 = vsel %vm539, %v540, %v538
    %vm542 = vcmp.gt.f32.partialorder %v529, 1.0
    %vm543 = vcmp.gt.f32.partialorder %v541, 1.0
    %v544 = vadd.f32 %v529, 1e-07
    %v545 = vadd.f32 %v541, 1e-07
    %v546 = vrcp.pop %v544
    %v547 = vmul.f32 %v544, %v546
    %v548 = vsub.f32 1.0, %v547
    %v549 = vmul.f32 %v546, %v548
    %v550 = vadd.f32 %v546, %v549
    %vm551 = vweird.f32 %v544
    %vm552 = vweird.f32 %v546
    %vm553 = vmor %vm551, %vm552
    %v554 = vsel %vm553, %v546, %v550
    %v555 = vand.u32 2147483647, %v544
    %vm556 = vcmp.eq.f32.partialorder %v555, 8.507059e+37
    %v557 = vand.u32 %v544, 2147483648
    %v558 = vor.u32 1.1754944e-38, %v557
    %v559 = vsel %vm556, %v558, %v554
    %v560 = vmul.f32 1.0, %v559
    %v561 = vrcp.pop %v545
    %v562 = vmul.f32 %v545, %v561
    %v563 = vsub.f32 1.0, %v562
    %v564 = vmul.f32 %v561, %v563
    %v565 = vadd.f32 %v561, %v564
    %vm566 = vweird.f32 %v545
    %vm567 = vweird.f32 %v561
    %vm568 = vmor %vm566, %vm567
    %v569 = vsel %vm568, %v561, %v565
    %v570 = vand.u32 2147483647, %v545
    %vm571 = vcmp.eq.f32.partialorder %v570, 8.507059e+37
    %v572 = vand.u32 %v545, 2147483648
    %v573 = vor.u32 1.1754944e-38, %v572
    %v574 = vsel %vm571, %v573, %v569
    %v575 = vmul.f32 1.0, %v574
    %v576 = vsel %vm542, %v560, 1.0
    %v577 = vsel %vm543, %v575, 1.0
    %v578 = vmul.f32 %v508, %v576
    %v579 = vmul.f32 %v509, %v577
    %v580 = vld [vmem:[#allocation4] sm:$0xff]
    %v581 = vld [vmem:[#allocation4 + $0x8] sm:$0xff]
    %v582 = vld [vmem:[%s7] sm:$0xff]
    %v583 = vld [vmem:[%s7 + $0x8] sm:$0xff]
    %v584 = vld [vmem:[%s7 + $0x10] sm:$0xff]
    %v585 = vld [vmem:[%s7 + $0x18] sm:$0xff]
    %v586 = vld [vmem:[%s9] sm:$0x1]
    %vm587 = vcmask 130048
    %v589 = vsel %vm587, %v580, 0
    %v592 = vsel %vm587, %v581, 0
    %594 = vmatpush.msra.mxu0 0.0
    %595 = vmatpush.msra.mxu0 0.0
    %596 = vmatpush.msra.mxu0 0.0
    %597 = vmatpush.msra.mxu0 0.0
    %598 = vmatpush.msra.mxu0 0.0
    %599 = vmatpush.msra.mxu0 0.0
    %600 = vmatpush.msra.mxu0 0.0
    %601 = vmatpush.msra.mxu0 0.0
    %602 = vmatpush.msra.mxu0 0.0
    %603 = vmatpush.msra.mxu0 0.0
    %604 = vmatpush.msra.mxu0 0.0
    %605 = vmatpush.msra.mxu0 0.0
    %606 = vmatpush.msra.mxu0 0.0
    %607 = vmatpush.msra.mxu0 0.0
    %608 = vmatpush.msra.mxu0 %v579
    %609 = vmatpush.msra.mxu0 %v578
    %610 = vmatmul.f32.gmra.mxu0 %v589
    %v611 = vpop.f32.mrf.mxu0
    %v612 = vadd.f32 0.0, %v611
    %613 = vmatmul.f32.gmra.mxu0 %v592
    %v614 = vpop.f32.mrf.mxu0
    %v615 = vadd.f32 0.0, %v614
    %616 = vdwg.mxu0
    %v618 = vperm.slane %v586, 0
    %v621 = vsel %vm381, %v612, 0
    %v624 = vsel %vm381, %v615, 0
    %626 = vmatpush.msra.mxu0 0.0
    %627 = vmatpush.msra.mxu0 0.0
    %628 = vmatpush.msra.mxu0 0.0
    %629 = vmatpush.msra.mxu0 0.0
    %630 = vmatpush.msra.mxu0 0.0
    %631 = vmatpush.msra.mxu0 0.0
    %632 = vmatpush.msra.mxu0 0.0
    %633 = vmatpush.msra.mxu0 0.0
    %634 = vmatpush.msra.mxu0 0.0
    %635 = vmatpush.msra.mxu0 0.0
    %636 = vmatpush.msra.mxu0 0.0
    %637 = vmatpush.msra.mxu0 0.0
    %638 = vmatpush.msra.mxu0 %v585
    %639 = vmatpush.msra.mxu0 %v584
    %640 = vmatpush.msra.mxu0 %v583
    %641 = vmatpush.msra.mxu0 %v582
    %642 = vmatmul.f32.gmra.mxu0 %v621
    %v643 = vpop.f32.mrf.mxu0
    %v644 = vadd.f32 %v618, %v643
    %645 = vmatmul.f32.gmra.mxu0 %v624
    %v646 = vpop.f32.mrf.mxu0
    %v647 = vadd.f32 %v618, %v646
    %648 = vdwg.mxu0
    %v650 = vsel %vm381, %v578, 0
    %v653 = vsel %vm381, %v579, 0
    %655 = vmatpush.msra.mxu0 0.0
    %656 = vmatpush.msra.mxu0 0.0
    %657 = vmatpush.msra.mxu0 0.0
    %658 = vmatpush.msra.mxu0 0.0
    %659 = vmatpush.msra.mxu0 0.0
    %660 = vmatpush.msra.mxu0 0.0
    %661 = vmatpush.msra.mxu0 0.0
    %662 = vmatpush.msra.mxu0 0.0
    %663 = vmatpush.msra.mxu0 0.0
    %664 = vmatpush.msra.mxu0 0.0
    %665 = vmatpush.msra.mxu0 0.0
    %666 = vmatpush.msra.mxu0 0.0
    %667 = vmatpush.msra.mxu0 %v585
    %668 = vmatpush.msra.mxu0 %v584
    %669 = vmatpush.msra.mxu0 %v583
    %670 = vmatpush.msra.mxu0 %v582
    %671 = vmatmul.f32.gmra.mxu0 %v650
    %v672 = vpop.f32.mrf.mxu0
    %v673 = vadd.f32 %v618, %v672
    %674 = vmatmul.f32.gmra.mxu0 %v653
    %v675 = vpop.f32.mrf.mxu0
    %v676 = vadd.f32 %v618, %v675
    %677 = vdwg.mxu0
    %v678 = vmul.f32 %v644, 0.2
    %v679 = vmul.f32 %v647, 0.2
    %v680 = vadd.f32 %v506, %v678
    %v681 = vadd.f32 %v507, %v679
    %v682 = vmul.f32 %v673, 0.2
    %v683 = vmul.f32 %v676, 0.2
    %v684 = vadd.f32 %v506, %v682
    %v685 = vadd.f32 %v507, %v683
    %v686 = vld [vmem:[#allocation6] sm:$0xff]
    %v687 = vld [vmem:[#allocation6 + $0x8] sm:$0xff]
    %v688 = vld [vmem:[#allocation6 + $0x10] sm:$0xff]
    %v689 = vld [vmem:[#allocation6 + $0x18] sm:$0xff]
    %v690 = vld [vmem:[%s17] sm:$0x1]
    %v692 = vperm.slane %v690, 0
    %v695 = vsel %vm381, %v680, 0
    %v698 = vsel %vm381, %v681, 0
    %700 = vmatpush.msra.mxu0 0.0
    %701 = vmatpush.msra.mxu0 0.0
    %702 = vmatpush.msra.mxu0 0.0
    %703 = vmatpush.msra.mxu0 0.0
    %704 = vmatpush.msra.mxu0 0.0
    %705 = vmatpush.msra.mxu0 0.0
    %706 = vmatpush.msra.mxu0 0.0
    %707 = vmatpush.msra.mxu0 0.0
    %708 = vmatpush.msra.mxu0 0.0
    %709 = vmatpush.msra.mxu0 0.0
    %710 = vmatpush.msra.mxu0 0.0
    %711 = vmatpush.msra.mxu0 0.0
    %712 = vmatpush.msra.mxu0 %v689
    %713 = vmatpush.msra.mxu0 %v688
    %714 = vmatpush.msra.mxu0 %v687
    %715 = vmatpush.msra.mxu0 %v686
    %716 = vmatmul.f32.gmra.mxu0 %v695
    %v717 = vpop.f32.mrf.mxu0
    %v718 = vadd.f32 %v692, %v717
    %719 = vmatmul.f32.gmra.mxu0 %v698
    %v720 = vpop.f32.mrf.mxu0
    %v721 = vadd.f32 %v692, %v720
    %722 = vdwg.mxu0
    %v724 = vsel %vm381, %v684, 0
    %v727 = vsel %vm381, %v685, 0
    %729 = vmatpush.msra.mxu0 0.0
    %730 = vmatpush.msra.mxu0 0.0
    %731 = vmatpush.msra.mxu0 0.0
    %732 = vmatpush.msra.mxu0 0.0
    %733 = vmatpush.msra.mxu0 0.0
    %734 = vmatpush.msra.mxu0 0.0
    %735 = vmatpush.msra.mxu0 0.0
    %736 = vmatpush.msra.mxu0 0.0
    %737 = vmatpush.msra.mxu0 0.0
    %738 = vmatpush.msra.mxu0 0.0
    %739 = vmatpush.msra.mxu0 0.0
    %740 = vmatpush.msra.mxu0 0.0
    %741 = vmatpush.msra.mxu0 %v689
    %742 = vmatpush.msra.mxu0 %v688
    %743 = vmatpush.msra.mxu0 %v687
    %744 = vmatpush.msra.mxu0 %v686
    %745 = vmatmul.f32.gmra.mxu0 %v724
    %v746 = vpop.f32.mrf.mxu0
    %v747 = vadd.f32 %v692, %v746
    %748 = vmatmul.f32.gmra.mxu0 %v727
    %v749 = vpop.f32.mrf.mxu0
    %v750 = vadd.f32 %v692, %v749
    %751 = vdwg.mxu0
    %v752 = vld [vmem:[%s19] sm:$0x1]
    %v753 = vld [vmem:[#allocation7] sm:$0x1]
    %v754 = vsel %vm381, %v718, 0.0
    %v755 = vsel %vm381, %v721, 0.0
    %v756 = vadd.f32 %v754, %v755
    %v757 = vrot.slane %v756, 4
    %v758 = vadd.f32 %v756, %v757
    %v759 = vrot.slane %v758, 2
    %v760 = vadd.f32 %v758, %v759
    %v761 = vrot.slane %v760, 1
    %v762 = vadd.f32 %v760, %v761
    %v763 = vsel %vm381, %v747, 0.0
    %v764 = vsel %vm381, %v750, 0.0
    %v765 = vadd.f32 %v763, %v764
    %v766 = vrot.slane %v765, 4
    %v767 = vadd.f32 %v765, %v766
    %v768 = vrot.slane %v767, 2
    %v769 = vadd.f32 %v767, %v768
    %v770 = vrot.slane %v769, 1
    %v771 = vadd.f32 %v769, %v770
    %v772 = vadd.f32 %v762, %v771
    %v773 = vrcp.pop 32.0
    %v774 = vmul.f32 32.0, %v773
    %v775 = vsub.f32 1.0, %v774
    %v776 = vmul.f32 %v773, %v775
    %v777 = vadd.f32 %v773, %v776
    %vm778 = vweird.f32 %v773
    %v779 = vsel %vm778, %v773, %v777
    %v780 = vmul.f32 %v772, %v779
    %v781 = vsub.f32 %v718, %v780
    %v782 = vsub.f32 %v721, %v780
    %v783 = vmul.f32 %v781, %v781
    %v784 = vmul.f32 %v782, %v782
    %v785 = vsel %vm381, %v783, 0.0
    %v786 = vsel %vm381, %v784, 0.0
    %v787 = vadd.f32 %v785, %v786
    %v788 = vrot.slane %v787, 4
    %v789 = vadd.f32 %v787, %v788
    %v790 = vrot.slane %v789, 2
    %v791 = vadd.f32 %v789, %v790
    %v792 = vrot.slane %v791, 1
    %v793 = vadd.f32 %v791, %v792
    %v794 = vsub.f32 %v747, %v780
    %v795 = vsub.f32 %v750, %v780
    %v796 = vmul.f32 %v794, %v794
    %v797 = vmul.f32 %v795, %v795
    %v798 = vsel %vm381, %v796, 0.0
    %v799 = vsel %vm381, %v797, 0.0
    %v800 = vadd.f32 %v798, %v799
    %v801 = vrot.slane %v800, 4
    %v802 = vadd.f32 %v800, %v801
    %v803 = vrot.slane %v802, 2
    %v804 = vadd.f32 %v802, %v803
    %v805 = vrot.slane %v804, 1
    %v806 = vadd.f32 %v804, %v805
    %v807 = vadd.f32 %v793, %v806
    %v808 = vmul.f32 %v807, %v779
    %v809 = vadd.f32 %v808, 1e-05
    %v810 = vrsqrt.pop %v809
    %v811 = vmul.f32 %v810, %v809
    %v812 = vmul.f32 %v811, %v810
    %v813 = vmul.f32 0.5, %v812
    %v814 = vsub.f32 1.5, %v813
    %v815 = vmul.f32 %v810, %v814
    %vm816 = vweird.f32 %v809
    %vm817 = vweird.f32 %v810
    %vm818 = vmor %vm816, %vm817
    %v819 = vsel %vm818, %v810, %v815
    %v820 = vmul.f32 %v819, %v752
    %v821 = vperm.slane %v820, 0
    %v822 = vmul.f32 %v781, %v821
    %v823 = vmul.f32 %v782, %v821
    %v825 = vperm.slane %v753, 0
    %v827 = vadd.f32 %v822, %v825
    %v828 = vadd.f32 %v823, %v825
    %v829 = vmul.f32 %v794, %v821
    %v830 = vmul.f32 %v795, %v821
    %v831 = vadd.f32 %v829, %v825
    %v832 = vadd.f32 %v830, %v825
    %v833 = vmax.f32 %v827, 0.0
    %v834 = vmax.f32 %v828, 0.0
    %v835 = vmax.f32 %v831, 0.0
    %v836 = vmax.f32 %v832, 0.0
    %v837 = vld [vmem:[#allocation9] sm:$0xff]
    %v838 = vld [vmem:[#allocation9 + $0x8] sm:$0xff]
    %v839 = vld [vmem:[#allocation9 + $0x10] sm:$0xff]
    %v840 = vld [vmem:[#allocation9 + $0x18] sm:$0xff]
    %v841 = vld [vmem:[#allocation10] sm:$0x1]
    %v843 = vperm.slane %v841, 0
    %v846 = vsel %vm381, %v833, 0
    %v849 = vsel %vm381, %v834, 0
    %851 = vmatpush.msra.mxu0 0.0
    %852 = vmatpush.msra.mxu0 0.0
    %853 = vmatpush.msra.mxu0 0.0
    %854 = vmatpush.msra.mxu0 0.0
    %855 = vmatpush.msra.mxu0 0.0
    %856 = vmatpush.msra.mxu0 0.0
    %857 = vmatpush.msra.mxu0 0.0
    %858 = vmatpush.msra.mxu0 0.0
    %859 = vmatpush.msra.mxu0 0.0
    %860 = vmatpush.msra.mxu0 0.0
    %861 = vmatpush.msra.mxu0 0.0
    %862 = vmatpush.msra.mxu0 0.0
    %863 = vmatpush.msra.mxu0 %v840
    %864 = vmatpush.msra.mxu0 %v839
    %865 = vmatpush.msra.mxu0 %v838
    %866 = vmatpush.msra.mxu0 %v837
    %867 = vmatmul.f32.gmra.mxu0 %v846
    %v868 = vpop.f32.mrf.mxu0
    %v869 = vadd.f32 %v843, %v868
    %870 = vmatmul.f32.gmra.mxu0 %v849
    %v871 = vpop.f32.mrf.mxu0
    %v872 = vadd.f32 %v843, %v871
    %873 = vdwg.mxu0
    %v875 = vsel %vm381, %v835, 0
    %v878 = vsel %vm381, %v836, 0
    %880 = vmatpush.msra.mxu0 0.0
    %881 = vmatpush.msra.mxu0 0.0
    %882 = vmatpush.msra.mxu0 0.0
    %883 = vmatpush.msra.mxu0 0.0
    %884 = vmatpush.msra.mxu0 0.0
    %885 = vmatpush.msra.mxu0 0.0
    %886 = vmatpush.msra.mxu0 0.0
    %887 = vmatpush.msra.mxu0 0.0
    %888 = vmatpush.msra.mxu0 0.0
    %889 = vmatpush.msra.mxu0 0.0
    %890 = vmatpush.msra.mxu0 0.0
    %891 = vmatpush.msra.mxu0 0.0
    %892 = vmatpush.msra.mxu0 %v840
    %893 = vmatpush.msra.mxu0 %v839
    %894 = vmatpush.msra.mxu0 %v838
    %895 = vmatpush.msra.mxu0 %v837
    %896 = vmatmul.f32.gmra.mxu0 %v875
    %v897 = vpop.f32.mrf.mxu0
    %v898 = vadd.f32 %v843, %v897
    %899 = vmatmul.f32.gmra.mxu0 %v878
    %v900 = vpop.f32.mrf.mxu0
    %v901 = vadd.f32 %v843, %v900
    %902 = vdwg.mxu0
    %v903 = vld [vmem:[#allocation12] sm:$0x1]
    %v904 = vld [vmem:[#allocation13] sm:$0x1]
    %v905 = vsel %vm381, %v869, 0.0
    %v906 = vsel %vm381, %v872, 0.0
    %v907 = vadd.f32 %v905, %v906
    %v908 = vrot.slane %v907, 4
    %v909 = vadd.f32 %v907, %v908
    %v910 = vrot.slane %v909, 2
    %v911 = vadd.f32 %v909, %v910
    %v912 = vrot.slane %v911, 1
    %v913 = vadd.f32 %v911, %v912
    %v914 = vsel %vm381, %v898, 0.0
    %v915 = vsel %vm381, %v901, 0.0
    %v916 = vadd.f32 %v914, %v915
    %v917 = vrot.slane %v916, 4
    %v918 = vadd.f32 %v916, %v917
    %v919 = vrot.slane %v918, 2
    %v920 = vadd.f32 %v918, %v919
    %v921 = vrot.slane %v920, 1
    %v922 = vadd.f32 %v920, %v921
    %v923 = vadd.f32 %v913, %v922
    %v924 = vmul.f32 %v923, %v779
    %v925 = vsub.f32 %v869, %v924
    %v926 = vsub.f32 %v872, %v924
    %v927 = vmul.f32 %v925, %v925
    %v928 = vmul.f32 %v926, %v926
    %v929 = vsel %vm381, %v927, 0.0
    %v930 = vsel %vm381, %v928, 0.0
    %v931 = vadd.f32 %v929, %v930
    %v932 = vrot.slane %v931, 4
    %v933 = vadd.f32 %v931, %v932
    %v934 = vrot.slane %v933, 2
    %v935 = vadd.f32 %v933, %v934
    %v936 = vrot.slane %v935, 1
    %v937 = vadd.f32 %v935, %v936
    %v938 = vsub.f32 %v898, %v924
    %v939 = vsub.f32 %v901, %v924
    %v940 = vmul.f32 %v938, %v938
    %v941 = vmul.f32 %v939, %v939
    %v942 = vsel %vm381, %v940, 0.0
    %v943 = vsel %vm381, %v941, 0.0
    %v944 = vadd.f32 %v942, %v943
    %v945 = vrot.slane %v944, 4
    %v946 = vadd.f32 %v944, %v945
    %v947 = vrot.slane %v946, 2
    %v948 = vadd.f32 %v946, %v947
    %v949 = vrot.slane %v948, 1
    %v950 = vadd.f32 %v948, %v949
    %v951 = vadd.f32 %v937, %v950
    %v952 = vmul.f32 %v951, %v779
    %v953 = vadd.f32 %v952, 1e-05
    %v954 = vrsqrt.pop %v953
    %v955 = vmul.f32 %v954, %v953
    %v956 = vmul.f32 %v955, %v954
    %v957 = vmul.f32 0.5, %v956
    %v958 = vsub.f32 1.5, %v957
    %v959 = vmul.f32 %v954, %v958
    %vm960 = vweird.f32 %v953
    %vm961 = vweird.f32 %v954
    %vm962 = vmor %vm960, %vm961
    %v963 = vsel %vm962, %v954, %v959
    %v964 = vmul.f32 %v963, %v903
    %v965 = vperm.slane %v964, 0
    %v966 = vmul.f32 %v925, %v965
    %v967 = vmul.f32 %v926, %v965
    %v969 = vperm.slane %v904, 0
    %v971 = vadd.f32 %v966, %v969
    %v972 = vadd.f32 %v967, %v969
    %v973 = vmul.f32 %v938, %v965
    %v974 = vmul.f32 %v939, %v965
    %v975 = vadd.f32 %v973, %v969
    %v976 = vadd.f32 %v974, %v969
    %977 = vst.msk [vmem:[%s57] sm:$0xff] %vm381, %v971
    %978 = vst.msk [vmem:[%s57 + $0x8] sm:$0xff] %vm381, %v972
    %s979 = scalar_lea.vmem %s57, 16
    %980 = vst.msk [vmem:[%s979] sm:$0xff] %vm381, %v975
    %981 = vst.msk [vmem:[%s979 + $0x8] sm:$0xff] %vm381, %v976
    %v982 = vld [vmem:[#allocation15] sm:$0xff]
    %v983 = vmul.f32 %v982, %v982
    %v984 = vsel %vm381, %v983, 0.0
    %985 = vadd.xlane.f32.xlu0 %v984
    %v986 = vpop.xlane.xlu0 %985
    %v987 = vrsqrt.pop %v986
    %v988 = vmul.f32 %v987, %v986
    %v989 = vmul.f32 %v988, %v987
    %v990 = vmul.f32 0.5, %v989
    %v991 = vsub.f32 1.5, %v990
    %v992 = vmul.f32 %v987, %v991
    %v993 = vmul.f32 %v986, %v992
    %vm994 = vcmp.eq.f32.partialorder %v986, inf
    %v995 = vsel %vm994, %v986, %v993
    %vm996 = vcmp.eq.f32.partialorder %v986, 0.0
    %v997 = vand.u32 %v986, 2147483648
    %v998 = vsel %vm996, %v997, %v995
    %vm999 = vcmp.gt.f32.partialorder %v998, 1.0
    %v1000 = vadd.f32 %v998, 1e-07
    %v1001 = vrcp.pop %v1000
    %v1002 = vmul.f32 %v1000, %v1001
    %v1003 = vsub.f32 1.0, %v1002
    %v1004 = vmul.f32 %v1001, %v1003
    %v1005 = vadd.f32 %v1001, %v1004
    %vm1006 = vweird.f32 %v1000
    %vm1007 = vweird.f32 %v1001
    %vm1008 = vmor %vm1006, %vm1007
    %v1009 = vsel %vm1008, %v1001, %v1005
    %v1010 = vand.u32 2147483647, %v1000
    %vm1011 = vcmp.eq.f32.partialorder %v1010, 8.507059e+37
    %v1012 = vand.u32 %v1000, 2147483648
    %v1013 = vor.u32 1.1754944e-38, %v1012
    %v1014 = vsel %vm1011, %v1013, %v1009
    %v1015 = vmul.f32 1.0, %v1014
    %v1016 = vsel %vm999, %v1015, 1.0
    %v1017 = vmul.f32 %v982, %v1016
    %v1018 = vld [vmem:[#allocation16] sm:$0xff]
    %vm1019 = vcmask 64512
    %v1021 = vsel %vm1019, %v1018, 0
    %1023 = vmatpush.msra.mxu0 0.0
    %1024 = vmatpush.msra.mxu0 0.0
    %1025 = vmatpush.msra.mxu0 0.0
    %1026 = vmatpush.msra.mxu0 0.0
    %1027 = vmatpush.msra.mxu0 0.0
    %1028 = vmatpush.msra.mxu0 0.0
    %1029 = vmatpush.msra.mxu0 0.0
    %1030 = vmatpush.msra.mxu0 0.0
    %1031 = vmatpush.msra.mxu0 0.0
    %1032 = vmatpush.msra.mxu0 0.0
    %1033 = vmatpush.msra.mxu0 0.0
    %1034 = vmatpush.msra.mxu0 0.0
    %1035 = vmatpush.msra.mxu0 0.0
    %1036 = vmatpush.msra.mxu0 0.0
    %1037 = vmatpush.msra.mxu0 0.0
    %1038 = vmatpush.msra.mxu0 %v1017
    %1039 = vmatmul.f32.gmra.mxu0 %v1021
    %v1040 = vpop.f32.mrf.mxu0
    %v1041 = vadd.f32 0.0, %v1040
    %1042 = vdwg.mxu0
    %v1043 = vld [vmem:[%s35] sm:$0xff]
    %v1044 = vld [vmem:[%s35 + $0x8] sm:$0xff]
    %v1045 = vld [vmem:[%s35 + $0x10] sm:$0xff]
    %v1046 = vld [vmem:[%s35 + $0x18] sm:$0xff]
    %v1047 = vld [vmem:[%s37] sm:$0x1]
    %v1049 = vperm.slane %v1047, 0
    %v1052 = vsel %vm381, %v1041, 0
    %1054 = vmatpush.msra.mxu0 0.0
    %1055 = vmatpush.msra.mxu0 0.0
    %1056 = vmatpush.msra.mxu0 0.0
    %1057 = vmatpush.msra.mxu0 0.0
    %1058 = vmatpush.msra.mxu0 0.0
    %1059 = vmatpush.msra.mxu0 0.0
    %1060 = vmatpush.msra.mxu0 0.0
    %1061 = vmatpush.msra.mxu0 0.0
    %1062 = vmatpush.msra.mxu0 0.0
    %1063 = vmatpush.msra.mxu0 0.0
    %1064 = vmatpush.msra.mxu0 0.0
    %1065 = vmatpush.msra.mxu0 0.0
    %1066 = vmatpush.msra.mxu0 %v1046
    %1067 = vmatpush.msra.mxu0 %v1045
    %1068 = vmatpush.msra.mxu0 %v1044
    %1069 = vmatpush.msra.mxu0 %v1043
    %1070 = vmatmul.f32.gmra.mxu0 %v1052
    %v1071 = vpop.f32.mrf.mxu0
    %v1072 = vadd.f32 %v1049, %v1071
    %1073 = vdwg.mxu0
    %v1074 = vld [vmem:[%s39] sm:$0x3]
    %v1076 = vsel %vm1019, %v1074, 0
    %1078 = vmatpush.msra.mxu0 0.0
    %1079 = vmatpush.msra.mxu0 0.0
    %1080 = vmatpush.msra.mxu0 0.0
    %1081 = vmatpush.msra.mxu0 0.0
    %1082 = vmatpush.msra.mxu0 0.0
    %1083 = vmatpush.msra.mxu0 0.0
    %1084 = vmatpush.msra.mxu0 0.0
    %1085 = vmatpush.msra.mxu0 0.0
    %1086 = vmatpush.msra.mxu0 0.0
    %1087 = vmatpush.msra.mxu0 0.0
    %1088 = vmatpush.msra.mxu0 0.0
    %1089 = vmatpush.msra.mxu0 0.0
    %1090 = vmatpush.msra.mxu0 0.0
    %1091 = vmatpush.msra.mxu0 0.0
    %1092 = vmatpush.msra.mxu0 0.0
    %1093 = vmatpush.msra.mxu0 %v1072
    %1094 = vmatmul.f32.gmra.mxu0 %v1076
    %v1095 = vpop.f32.mrf.mxu0
    %v1096 = vadd.f32 0.0, %v1095
    %1097 = vdwg.mxu0
    %v1098 = vld [vmem:[#allocation18] sm:$0xff]
    %v1099 = vld [vmem:[#allocation18 + $0x8] sm:$0xff]
    %v1100 = vld [vmem:[#allocation18 + $0x10] sm:$0xff]
    %v1101 = vld [vmem:[#allocation18 + $0x18] sm:$0xff]
    %v1102 = vld [vmem:[#allocation19] sm:$0x1]
    %v1103 = vld [vmem:[#allocation21] sm:$0x1]
    %v1104 = vld [vmem:[#allocation22] sm:$0x1]
    %v1105 = vld [vmem:[#allocation24] sm:$0xff]
    %v1106 = vld [vmem:[#allocation24 + $0x8] sm:$0xff]
    %v1107 = vld [vmem:[#allocation24 + $0x10] sm:$0xff]
    %v1108 = vld [vmem:[#allocation24 + $0x18] sm:$0xff]
    %v1109 = vld [vmem:[#allocation25] sm:$0x1]
    %v1110 = vld [vmem:[#allocation27] sm:$0x1]
    %v1111 = vld [vmem:[#allocation28] sm:$0x1]
    %v1113 = vperm.slane %v1102, 0
    %v1116 = vsel %vm381, %v1096, 0
    %1118 = vmatpush.msra.mxu0 0.0
    %1119 = vmatpush.msra.mxu0 0.0
    %1120 = vmatpush.msra.mxu0 0.0
    %1121 = vmatpush.msra.mxu0 0.0
    %1122 = vmatpush.msra.mxu0 0.0
    %1123 = vmatpush.msra.mxu0 0.0
    %1124 = vmatpush.msra.mxu0 0.0
    %1125 = vmatpush.msra.mxu0 0.0
    %1126 = vmatpush.msra.mxu0 0.0
    %1127 = vmatpush.msra.mxu0 0.0
    %1128 = vmatpush.msra.mxu0 0.0
    %1129 = vmatpush.msra.mxu0 0.0
    %1130 = vmatpush.msra.mxu0 %v1101
    %1131 = vmatpush.msra.mxu0 %v1100
    %1132 = vmatpush.msra.mxu0 %v1099
    %1133 = vmatpush.msra.mxu0 %v1098
    %1134 = vmatmul.f32.gmra.mxu0 %v1116
    %v1135 = vpop.f32.mrf.mxu0
    %v1136 = vadd.f32 %v1113, %v1135
    %1137 = vdwg.mxu0
    %vm1138 = vcmask 254976
    %v1139 = vsel %vm1138, %v1136, 0.0
    %v1140 = vrot.slane %v1139, 4
    %v1141 = vadd.f32 %v1139, %v1140
    %v1142 = vrot.slane %v1141, 2
    %v1143 = vadd.f32 %v1141, %v1142
    %v1144 = vrot.slane %v1143, 1
    %v1145 = vadd.f32 %v1143, %v1144
    %v1146 = vrcp.pop 2.0
    %v1147 = vmul.f32 2.0, %v1146
    %v1148 = vsub.f32 1.0, %v1147
    %v1149 = vmul.f32 %v1146, %v1148
    %v1150 = vadd.f32 %v1146, %v1149
    %vm1151 = vweird.f32 %v1146
    %v1152 = vsel %vm1151, %v1146, %v1150
    %v1153 = vmul.f32 %v1145, %v1152
    %v1154 = vsub.f32 %v1136, %v1153
    %v1155 = vmul.f32 %v1154, %v1154
    %v1156 = vsel %vm1138, %v1155, 0.0
    %v1157 = vrot.slane %v1156, 4
    %v1158 = vadd.f32 %v1156, %v1157
    %v1159 = vrot.slane %v1158, 2
    %v1160 = vadd.f32 %v1158, %v1159
    %v1161 = vrot.slane %v1160, 1
    %v1162 = vadd.f32 %v1160, %v1161
    %v1163 = vmul.f32 %v1162, %v1152
    %v1164 = vadd.f32 %v1163, 1e-05
    %v1165 = vrsqrt.pop %v1164
    %v1166 = vmul.f32 %v1165, %v1164
    %v1167 = vmul.f32 %v1166, %v1165
    %v1168 = vmul.f32 0.5, %v1167
    %v1169 = vsub.f32 1.5, %v1168
    %v1170 = vmul.f32 %v1165, %v1169
    %vm1171 = vweird.f32 %v1164
    %vm1172 = vweird.f32 %v1165
    %vm1173 = vmor %vm1171, %vm1172
    %v1174 = vsel %vm1173, %v1165, %v1170
    %v1175 = vmul.f32 %v1154, %v1174
    %v1177 = vperm.slane %v1103, 0
    %v1179 = vmul.f32 %v1175, %v1177
    %v1181 = vperm.slane %v1104, 0
    %v1183 = vadd.f32 %v1179, %v1181
    %v1184 = vmax.f32 %v1183, 0.0
    %v1186 = vperm.slane %v1109, 0
    %v1189 = vsel %vm381, %v1184, 0
    %1191 = vmatpush.msra.mxu0 0.0
    %1192 = vmatpush.msra.mxu0 0.0
    %1193 = vmatpush.msra.mxu0 0.0
    %1194 = vmatpush.msra.mxu0 0.0
    %1195 = vmatpush.msra.mxu0 0.0
    %1196 = vmatpush.msra.mxu0 0.0
    %1197 = vmatpush.msra.mxu0 0.0
    %1198 = vmatpush.msra.mxu0 0.0
    %1199 = vmatpush.msra.mxu0 0.0
    %1200 = vmatpush.msra.mxu0 0.0
    %1201 = vmatpush.msra.mxu0 0.0
    %1202 = vmatpush.msra.mxu0 0.0
    %1203 = vmatpush.msra.mxu0 %v1108
    %1204 = vmatpush.msra.mxu0 %v1107
    %1205 = vmatpush.msra.mxu0 %v1106
    %1206 = vmatpush.msra.mxu0 %v1105
    %1207 = vmatmul.f32.gmra.mxu0 %v1189
    %v1208 = vpop.f32.mrf.mxu0
    %v1209 = vadd.f32 %v1186, %v1208
    %1210 = vdwg.mxu0
    %v1211 = vsel %vm1138, %v1209, 0.0
    %v1212 = vrot.slane %v1211, 4
    %v1213 = vadd.f32 %v1211, %v1212
    %v1214 = vrot.slane %v1213, 2
    %v1215 = vadd.f32 %v1213, %v1214
    %v1216 = vrot.slane %v1215, 1
    %v1217 = vadd.f32 %v1215, %v1216
    %v1218 = vmul.f32 %v1217, %v1152
    %v1219 = vsub.f32 %v1209, %v1218
    %v1220 = vmul.f32 %v1219, %v1219
    %v1221 = vsel %vm1138, %v1220, 0.0
    %v1222 = vrot.slane %v1221, 4
    %v1223 = vadd.f32 %v1221, %v1222
    %v1224 = vrot.slane %v1223, 2
    %v1225 = vadd.f32 %v1223, %v1224
    %v1226 = vrot.slane %v1225, 1
    %v1227 = vadd.f32 %v1225, %v1226
    %v1228 = vmul.f32 %v1227, %v1152
    %v1229 = vadd.f32 %v1228, 1e-05
    %v1230 = vrsqrt.pop %v1229
    %v1231 = vmul.f32 %v1230, %v1229
    %v1232 = vmul.f32 %v1231, %v1230
    %v1233 = vmul.f32 0.5, %v1232
    %v1234 = vsub.f32 1.5, %v1233
    %v1235 = vmul.f32 %v1230, %v1234
    %vm1236 = vweird.f32 %v1229
    %vm1237 = vweird.f32 %v1230
    %vm1238 = vmor %vm1236, %vm1237
    %v1239 = vsel %vm1238, %v1230, %v1235
    %v1240 = vmul.f32 %v1219, %v1239
    %v1242 = vperm.slane %v1110, 0
    %v1244 = vmul.f32 %v1240, %v1242
    %v1246 = vperm.slane %v1111, 0
    %v1248 = vadd.f32 %v1244, %v1246
    %1249 = vst.msk [vmem:[%s59] sm:$0x3] %vm1138, %v1248
    // Predicated region
    $region186: #{_gears_forward_jit.2} parent=1 // pred_check
      _
    $region187: #{_gears_forward_jit.2} parent=1 // pred_check_branch
      %1251 = sbr.rel (0) target = $region189
    $region188: #{_gears_forward_jit.2} parent=1 // pred_region
      _
    $region189: #{_gears_forward_jit.2} parent=1 // pred_fallthru
      _
    // Predicated region
    $region190: #{_gears_forward_jit.2} parent=1 // pred_check
      _
    $region191: #{_gears_forward_jit.2} parent=1 // pred_check_branch
      %1253 = sbr.rel (0) target = $region193
    $region192: #{_gears_forward_jit.2} parent=1 // pred_region
      _
    $region193: #{_gears_forward_jit.2} parent=1 // pred_fallthru
      _
    // Predicated region
    $region194: #{_gears_forward_jit.2} parent=1 // pred_check
      _
    $region195: #{_gears_forward_jit.2} parent=1 // pred_check_branch
      %1255 = sbr.rel (0) target = $region197
    $region196: #{_gears_forward_jit.2} parent=1 // pred_region
      _
    $region197: #{_gears_forward_jit.2} parent=1 // pred_fallthru
      _
    // Predicated region
    $region198: #{_gears_forward_jit.2} parent=1 // pred_check
      _
    $region199: #{_gears_forward_jit.2} parent=1 // pred_check_branch
      %1257 = sbr.rel (0) target = $region201
    $region200: #{_gears_forward_jit.2} parent=1 // pred_region
      _
    $region201: #{_gears_forward_jit.2} parent=1 // pred_fallthru
      _
    %1258 = vsyncpa [#allocation3], 1
    %1259 = vsyncpa [#allocation5], 1
    %1260 = vsyncpa [#allocation8], 1
    %1261 = vsyncpa [#allocation11], 1
    %1262 = vsyncpa [#allocation14], 1
    %1263 = vsyncpa [#allocation17], 1
    %1264 = vsyncpa [#allocation20], 1
    %1265 = vsyncpa [#allocation23], 1
    %1266 = vsyncpa [#allocation26], 1
    %1267 = vsyncpa [#allocation29], 1

// kernel: _gears_forward_jit.3
$region0: #{_gears_forward_jit.3}
  #allocation0 [shape = 'u32[]', space=smem, size = 0x4, offset = 0x4, fixed_abs, tag = 'smem constant byte address 0x4 - core index']
  #allocation1 [shape = 'u32[72,128]{1,0:T(1,128)}', space=vmem, size = 0x9000, scoped, tag = 'internal scratch']
  %s0 = inlined_call_operand.vmem [shape: f32[2,16,32], index: 0, kind: input, shape index: {}]
  %s1 = inlined_call_operand.vmem [shape: f32[2,2], index: 1, kind: input, shape index: {}]
  %s2 = inlined_call_operand.vmem [shape: f32[2,32], index: 2, kind: input, shape index: {}]
  %s3 = inlined_call_operand.vmem [shape: f32[1,32], index: 3, kind: input, shape index: {}]
  %s4 = inlined_call_operand.vmem [shape: f32[1,32], index: 4, kind: input, shape index: {}]
  %s5 = inlined_call_operand.vmem [shape: f32[32,64], index: 5, kind: input, shape index: {}]
  %s6 = inlined_call_operand.vmem [shape: f32[1,64], index: 6, kind: input, shape index: {}]
  %s7 = inlined_call_operand.vmem [shape: f32[1,64], index: 7, kind: input, shape index: {}]
  %s8 = inlined_call_operand.vmem [shape: f32[1,64], index: 8, kind: input, shape index: {}]
  %s9 = inlined_call_operand.vmem [shape: f32[64,32], index: 9, kind: input, shape index: {}]
  %s10 = inlined_call_operand.vmem [shape: f32[1,32], index: 10, kind: input, shape index: {}]
  %s11 = inlined_call_operand.vmem [shape: f32[1,32], index: 11, kind: input, shape index: {}]
  %s12 = inlined_call_operand.vmem [shape: f32[1,32], index: 12, kind: input, shape index: {}]
  %s13 = inlined_call_operand.vmem [shape: f32[32,16], index: 13, kind: input, shape index: {}]
  %s14 = inlined_call_operand.vmem [shape: f32[1,16], index: 14, kind: input, shape index: {}]
  %s15 = inlined_call_operand.vmem [shape: f32[16,32], index: 15, kind: input, shape index: {}]
  %s16 = inlined_call_operand.vmem [shape: f32[1,32], index: 16, kind: input, shape index: {}]
  %s17 = inlined_call_operand.vmem [shape: f32[1,32], index: 17, kind: input, shape index: {}]
  %s18 = inlined_call_operand.vmem [shape: f32[1,32], index: 18, kind: input, shape index: {}]
  %s19 = inlined_call_operand.vmem [shape: f32[32,32], index: 19, kind: input, shape index: {}]
  %s20 = inlined_call_operand.vmem [shape: f32[1,32], index: 20, kind: input, shape index: {}]
  %s21 = inlined_call_operand.vmem [shape: f32[1,32], index: 21, kind: input, shape index: {}]
  %s22 = inlined_call_operand.vmem [shape: f32[1,32], index: 22, kind: input, shape index: {}]
  %s23 = inlined_call_operand.vmem [shape: f32[1,16], index: 23, kind: input, shape index: {}]
  %s24 = inlined_call_operand.vmem [shape: f32[32,16], index: 24, kind: input, shape index: {}]
  %s25 = inlined_call_operand.vmem [shape: f32[1,16], index: 25, kind: input, shape index: {}]
  %s26 = inlined_call_operand.vmem [shape: f32[2,16], index: 26, kind: input, shape index: {}]
  %s27 = inlined_call_operand.hbm [shape: f32[2,16], index: 27, kind: output, shape index: {}]
  %s28 = sld [smem:[#allocation0]]
  $region118: #{_gears_forward_jit.3} parent=0
    _
  %s30 = ssub.s32 1, %s28
  %s31 = scalar_select 0, %s30, %s28
  $region1: #{_gears_forward_jit.3} parent=0
    #allocation2 [shape = 'u8[1024]{0}', space=vmem, size = 0x400, scoped, tag = 'output window, operand 0, single buffered']
    #allocation3 [shape = 's32[1]{0}', space=sflag, size = 0x4, scoped, tag = 'scoped memory for _gears_forward_jit.3']
    %32 = vsyncpa [#allocation3], 0
    // Predicated region
    $region2: #{_gears_forward_jit.3} parent=1 // pred_check
      _
    $region3: #{_gears_forward_jit.3} parent=1 // pred_check_branch
      %34 = sbr.rel (0) target = $region5
    $region4: #{_gears_forward_jit.3} parent=1 // pred_region
      _
    $region5: #{_gears_forward_jit.3} parent=1 // pred_fallthru
      _
    // Predicated region
    $region6: #{_gears_forward_jit.3} parent=1 // pred_check
      _
    $region7: #{_gears_forward_jit.3} parent=1 // pred_check_branch
      %36 = sbr.rel (0) target = $region9
    $region8: #{_gears_forward_jit.3} parent=1 // pred_region
      _
    $region9: #{_gears_forward_jit.3} parent=1 // pred_fallthru
      _
    // Predicated region
    $region10: #{_gears_forward_jit.3} parent=1 // pred_check
      _
    $region11: #{_gears_forward_jit.3} parent=1 // pred_check_branch
      %38 = sbr.rel (0) target = $region13
    $region12: #{_gears_forward_jit.3} parent=1 // pred_region
      _
    $region13: #{_gears_forward_jit.3} parent=1 // pred_fallthru
      _
    // Predicated region
    $region14: #{_gears_forward_jit.3} parent=1 // pred_check
      _
    $region15: #{_gears_forward_jit.3} parent=1 // pred_check_branch
      %40 = sbr.rel (0) target = $region17
    $region16: #{_gears_forward_jit.3} parent=1 // pred_region
      _
    $region17: #{_gears_forward_jit.3} parent=1 // pred_fallthru
      _
    // Predicated region
    $region18: #{_gears_forward_jit.3} parent=1 // pred_check
      _
    $region19: #{_gears_forward_jit.3} parent=1 // pred_check_branch
      %42 = sbr.rel (0) target = $region21
    $region20: #{_gears_forward_jit.3} parent=1 // pred_region
      _
    $region21: #{_gears_forward_jit.3} parent=1 // pred_fallthru
      _
    // Predicated region
    $region22: #{_gears_forward_jit.3} parent=1 // pred_check
      _
    $region23: #{_gears_forward_jit.3} parent=1 // pred_check_branch
      %44 = sbr.rel (0) target = $region25
    $region24: #{_gears_forward_jit.3} parent=1 // pred_region
      _
    $region25: #{_gears_forward_jit.3} parent=1 // pred_fallthru
      _
    // Predicated region
    $region26: #{_gears_forward_jit.3} parent=1 // pred_check
      _
    $region27: #{_gears_forward_jit.3} parent=1 // pred_check_branch
      %46 = sbr.rel (0) target = $region29
    $region28: #{_gears_forward_jit.3} parent=1 // pred_region
      _
    $region29: #{_gears_forward_jit.3} parent=1 // pred_fallthru
      _
    // Predicated region
    $region30: #{_gears_forward_jit.3} parent=1 // pred_check
      _
    $region31: #{_gears_forward_jit.3} parent=1 // pred_check_branch
      %48 = sbr.rel (0) target = $region33
    $region32: #{_gears_forward_jit.3} parent=1 // pred_region
      _
    $region33: #{_gears_forward_jit.3} parent=1 // pred_fallthru
      _
    // Predicated region
    $region34: #{_gears_forward_jit.3} parent=1 // pred_check
      _
    $region35: #{_gears_forward_jit.3} parent=1 // pred_check_branch
      %50 = sbr.rel (0) target = $region37
    $region36: #{_gears_forward_jit.3} parent=1 // pred_region
      _
    $region37: #{_gears_forward_jit.3} parent=1 // pred_fallthru
      _
    // Predicated region
    $region38: #{_gears_forward_jit.3} parent=1 // pred_check
      _
    $region39: #{_gears_forward_jit.3} parent=1 // pred_check_branch
      %52 = sbr.rel (0) target = $region41
    $region40: #{_gears_forward_jit.3} parent=1 // pred_region
      _
    $region41: #{_gears_forward_jit.3} parent=1 // pred_fallthru
      _
    // Predicated region
    $region42: #{_gears_forward_jit.3} parent=1 // pred_check
      _
    $region43: #{_gears_forward_jit.3} parent=1 // pred_check_branch
      %54 = sbr.rel (0) target = $region45
    $region44: #{_gears_forward_jit.3} parent=1 // pred_region
      _
    $region45: #{_gears_forward_jit.3} parent=1 // pred_fallthru
      _
    // Predicated region
    $region46: #{_gears_forward_jit.3} parent=1 // pred_check
      _
    $region47: #{_gears_forward_jit.3} parent=1 // pred_check_branch
      %56 = sbr.rel (0) target = $region49
    $region48: #{_gears_forward_jit.3} parent=1 // pred_region
      _
    $region49: #{_gears_forward_jit.3} parent=1 // pred_fallthru
      _
    // Predicated region
    $region50: #{_gears_forward_jit.3} parent=1 // pred_check
      _
    $region51: #{_gears_forward_jit.3} parent=1 // pred_check_branch
      %58 = sbr.rel (0) target = $region53
    $region52: #{_gears_forward_jit.3} parent=1 // pred_region
      _
    $region53: #{_gears_forward_jit.3} parent=1 // pred_fallthru
      _
    // Predicated region
    $region54: #{_gears_forward_jit.3} parent=1 // pred_check
      _
    $region55: #{_gears_forward_jit.3} parent=1 // pred_check_branch
      %60 = sbr.rel (0) target = $region57
    $region56: #{_gears_forward_jit.3} parent=1 // pred_region
      _
    $region57: #{_gears_forward_jit.3} parent=1 // pred_fallthru
      _
    // Predicated region
    $region58: #{_gears_forward_jit.3} parent=1 // pred_check
      _
    $region59: #{_gears_forward_jit.3} parent=1 // pred_check_branch
      %62 = sbr.rel (0) target = $region61
    $region60: #{_gears_forward_jit.3} parent=1 // pred_region
      _
    $region61: #{_gears_forward_jit.3} parent=1 // pred_fallthru
      _
    // Predicated region
    $region62: #{_gears_forward_jit.3} parent=1 // pred_check
      _
    $region63: #{_gears_forward_jit.3} parent=1 // pred_check_branch
      %64 = sbr.rel (0) target = $region65
    $region64: #{_gears_forward_jit.3} parent=1 // pred_region
      _
    $region65: #{_gears_forward_jit.3} parent=1 // pred_fallthru
      _
    // Predicated region
    $region66: #{_gears_forward_jit.3} parent=1 // pred_check
      _
    $region67: #{_gears_forward_jit.3} parent=1 // pred_check_branch
      %66 = sbr.rel (0) target = $region69
    $region68: #{_gears_forward_jit.3} parent=1 // pred_region
      _
    $region69: #{_gears_forward_jit.3} parent=1 // pred_fallthru
      _
    // Predicated region
    $region70: #{_gears_forward_jit.3} parent=1 // pred_check
      _
    $region71: #{_gears_forward_jit.3} parent=1 // pred_check_branch
      %68 = sbr.rel (0) target = $region73
    $region72: #{_gears_forward_jit.3} parent=1 // pred_region
      _
    $region73: #{_gears_forward_jit.3} parent=1 // pred_fallthru
      _
    // Predicated region
    $region74: #{_gears_forward_jit.3} parent=1 // pred_check
      _
    $region75: #{_gears_forward_jit.3} parent=1 // pred_check_branch
      %70 = sbr.rel (0) target = $region77
    $region76: #{_gears_forward_jit.3} parent=1 // pred_region
      _
    $region77: #{_gears_forward_jit.3} parent=1 // pred_fallthru
      _
    // Predicated region
    $region78: #{_gears_forward_jit.3} parent=1 // pred_check
      _
    $region79: #{_gears_forward_jit.3} parent=1 // pred_check_branch
      %72 = sbr.rel (0) target = $region81
    $region80: #{_gears_forward_jit.3} parent=1 // pred_region
      _
    $region81: #{_gears_forward_jit.3} parent=1 // pred_fallthru
      _
    // Predicated region
    $region82: #{_gears_forward_jit.3} parent=1 // pred_check
      _
    $region83: #{_gears_forward_jit.3} parent=1 // pred_check_branch
      %74 = sbr.rel (0) target = $region85
    $region84: #{_gears_forward_jit.3} parent=1 // pred_region
      _
    $region85: #{_gears_forward_jit.3} parent=1 // pred_fallthru
      _
    // Predicated region
    $region86: #{_gears_forward_jit.3} parent=1 // pred_check
      _
    $region87: #{_gears_forward_jit.3} parent=1 // pred_check_branch
      %76 = sbr.rel (0) target = $region89
    $region88: #{_gears_forward_jit.3} parent=1 // pred_region
      _
    $region89: #{_gears_forward_jit.3} parent=1 // pred_fallthru
      _
    // Predicated region
    $region90: #{_gears_forward_jit.3} parent=1 // pred_check
      _
    $region91: #{_gears_forward_jit.3} parent=1 // pred_check_branch
      %78 = sbr.rel (0) target = $region93
    $region92: #{_gears_forward_jit.3} parent=1 // pred_region
      _
    $region93: #{_gears_forward_jit.3} parent=1 // pred_fallthru
      _
    // Predicated region
    $region94: #{_gears_forward_jit.3} parent=1 // pred_check
      _
    $region95: #{_gears_forward_jit.3} parent=1 // pred_check_branch
      %80 = sbr.rel (0) target = $region97
    $region96: #{_gears_forward_jit.3} parent=1 // pred_region
      _
    $region97: #{_gears_forward_jit.3} parent=1 // pred_fallthru
      _
    // Predicated region
    $region98: #{_gears_forward_jit.3} parent=1 // pred_check
      _
    $region99: #{_gears_forward_jit.3} parent=1 // pred_check_branch
      %82 = sbr.rel (0) target = $region101
    $region100: #{_gears_forward_jit.3} parent=1 // pred_region
      _
    $region101: #{_gears_forward_jit.3} parent=1 // pred_fallthru
      _
    // Predicated region
    $region102: #{_gears_forward_jit.3} parent=1 // pred_check
      _
    $region103: #{_gears_forward_jit.3} parent=1 // pred_check_branch
      %84 = sbr.rel (0) target = $region105
    $region104: #{_gears_forward_jit.3} parent=1 // pred_region
      _
    $region105: #{_gears_forward_jit.3} parent=1 // pred_fallthru
      _
    // Predicated region
    $region106: #{_gears_forward_jit.3} parent=1 // pred_check
      _
    $region107: #{_gears_forward_jit.3} parent=1 // pred_check_branch
      %86 = sbr.rel (0) target = $region109
    $region108: #{_gears_forward_jit.3} parent=1 // pred_region
      _
    $region109: #{_gears_forward_jit.3} parent=1 // pred_fallthru
      _
    %v87 = vld [vmem:[%s1] sm:$0x3]
    %v88 = vld [vmem:[%s2] sm:$0x3]
    %vm89 = vcmask 15360
    %v91 = vsel %vm89, %v87, 0
    %vm93 = vcmask 1041408
    %v95 = vsel %vm93, %v88, 0
    %97 = vmatpush.msra.mxu0 0.0
    %98 = vmatpush.msra.mxu0 0.0
    %99 = vmatpush.msra.mxu0 0.0
    %100 = vmatpush.msra.mxu0 0.0
    %101 = vmatpush.msra.mxu0 0.0
    %102 = vmatpush.msra.mxu0 0.0
    %103 = vmatpush.msra.mxu0 0.0
    %104 = vmatpush.msra.mxu0 0.0
    %105 = vmatpush.msra.mxu0 0.0
    %106 = vmatpush.msra.mxu0 0.0
    %107 = vmatpush.msra.mxu0 0.0
    %108 = vmatpush.msra.mxu0 0.0
    %109 = vmatpush.msra.mxu0 0.0
    %110 = vmatpush.msra.mxu0 0.0
    %111 = vmatpush.msra.mxu0 0.0
    %112 = vmatpush.msra.mxu0 %v95
    %113 = vmatmul.f32.gmra.mxu0 %v91
    %v114 = vpop.f32.mrf.mxu0
    %v115 = vadd.f32 0.0, %v114
    %116 = vdwg.mxu0
    %v117 = vld [vmem:[%s0] sm:$0xff]
    %v118 = vld [vmem:[%s0 + $0x8] sm:$0xff]
    %s119 = scalar_lea.vmem %s0, 16
    %v120 = vld [vmem:[%s119] sm:$0xff]
    %v121 = vld [vmem:[%s119 + $0x8] sm:$0xff]
    %v122 = vperm.slane %v115, 0
    %v123 = vadd.f32 %v117, %v122
    %v124 = vadd.f32 %v118, %v122
    %v125 = vperm.slane %v115, 1
    %v126 = vadd.f32 %v120, %v125
    %v127 = vadd.f32 %v121, %v125
    %v128 = vld [vmem:[%s3] sm:$0x1]
    %v129 = vld [vmem:[%s4] sm:$0x1]
    %vm130 = vcmask 261120
    %v131 = vsel %vm130, %v123, 0.0
    %v132 = vsel %vm130, %v124, 0.0
    %v133 = vadd.f32 %v131, %v132
    %v134 = vsel %vm130, %v126, 0.0
    %v135 = vadd.f32 %v133, %v134
    %v136 = vsel %vm130, %v127, 0.0
    %v137 = vadd.f32 %v135, %v136
    %v138 = vrot.slane %v137, 4
    %v139 = vadd.f32 %v137, %v138
    %v140 = vrot.slane %v139, 2
    %v141 = vadd.f32 %v139, %v140
    %v142 = vrot.slane %v141, 1
    %v143 = vadd.f32 %v141, %v142
    %v144 = vrcp.pop 32.0
    %v145 = vmul.f32 32.0, %v144
    %v146 = vsub.f32 1.0, %v145
    %v147 = vmul.f32 %v144, %v146
    %v148 = vadd.f32 %v144, %v147
    %vm149 = vweird.f32 %v144
    %v150 = vsel %vm149, %v144, %v148
    %v151 = vmul.f32 %v143, %v150
    %v152 = vsub.f32 %v123, %v151
    %v153 = vsub.f32 %v124, %v151
    %v154 = vsub.f32 %v126, %v151
    %v155 = vsub.f32 %v127, %v151
    %v156 = vmul.f32 %v152, %v152
    %v157 = vmul.f32 %v153, %v153
    %v158 = vmul.f32 %v154, %v154
    %v159 = vmul.f32 %v155, %v155
    %v160 = vsel %vm130, %v156, 0.0
    %v161 = vsel %vm130, %v157, 0.0
    %v162 = vadd.f32 %v160, %v161
    %v163 = vsel %vm130, %v158, 0.0
    %v164 = vadd.f32 %v162, %v163
    %v165 = vsel %vm130, %v159, 0.0
    %v166 = vadd.f32 %v164, %v165
    %v167 = vrot.slane %v166, 4
    %v168 = vadd.f32 %v166, %v167
    %v169 = vrot.slane %v168, 2
    %v170 = vadd.f32 %v168, %v169
    %v171 = vrot.slane %v170, 1
    %v172 = vadd.f32 %v170, %v171
    %v173 = vmul.f32 %v172, %v150
    %v174 = vadd.f32 %v173, 1e-05
    %v175 = vrsqrt.pop %v174
    %v176 = vmul.f32 %v175, %v174
    %v177 = vmul.f32 %v176, %v175
    %v178 = vmul.f32 0.5, %v177
    %v179 = vsub.f32 1.5, %v178
    %v180 = vmul.f32 %v175, %v179
    %vm181 = vweird.f32 %v174
    %vm182 = vweird.f32 %v175
    %vm183 = vmor %vm181, %vm182
    %v184 = vsel %vm183, %v175, %v180
    %v185 = vmul.f32 %v152, %v184
    %v186 = vmul.f32 %v153, %v184
    %v187 = vmul.f32 %v154, %v184
    %v188 = vmul.f32 %v155, %v184
    %v190 = vperm.slane %v128, 0
    %v192 = vmul.f32 %v185, %v190
    %v193 = vmul.f32 %v186, %v190
    %v194 = vmul.f32 %v187, %v190
    %v195 = vmul.f32 %v188, %v190
    %v197 = vperm.slane %v129, 0
    %v199 = vadd.f32 %v192, %v197
    %v200 = vadd.f32 %v193, %v197
    %v201 = vadd.f32 %v194, %v197
    %v202 = vadd.f32 %v195, %v197
    %v203 = vmax.f32 %v199, 0.0
    %v204 = vmax.f32 %v200, 0.0
    %v205 = vmax.f32 %v201, 0.0
    %v206 = vmax.f32 %v202, 0.0
    %v207 = vld [vmem:[%s5] sm:$0xff]
    %v208 = vld [vmem:[%s5 + $0x8] sm:$0xff]
    %v209 = vld [vmem:[%s5 + $0x10] sm:$0xff]
    %v210 = vld [vmem:[%s5 + $0x18] sm:$0xff]
    %v211 = vld [vmem:[%s6] sm:$0x1]
    %v212 = vld [vmem:[%s7] sm:$0x1]
    %v213 = vld [vmem:[%s8] sm:$0x1]
    %v214 = vld [vmem:[%s9] sm:$0xff]
    %v215 = vld [vmem:[%s9 + $0x8] sm:$0xff]
    %v216 = vld [vmem:[%s9 + $0x10] sm:$0xff]
    %v217 = vld [vmem:[%s9 + $0x18] sm:$0xff]
    %v218 = vld [vmem:[%s9 + $0x20] sm:$0xff]
    %v219 = vld [vmem:[%s9 + $0x28] sm:$0xff]
    %v220 = vld [vmem:[%s9 + $0x30] sm:$0xff]
    %v221 = vld [vmem:[%s9 + $0x38] sm:$0xff]
    %v222 = vld [vmem:[%s10] sm:$0x1]
    %v223 = vld [vmem:[%s11] sm:$0x1]
    %v224 = vld [vmem:[%s12] sm:$0x1]
    %v226 = vperm.slane %v211, 0
    %v229 = vsel %vm130, %v203, 0
    %v232 = vsel %vm130, %v204, 0
    %v235 = vsel %vm130, %v205, 0
    %v238 = vsel %vm130, %v206, 0
    %240 = vmatpush.msra.mxu0 0.0
    %241 = vmatpush.msra.mxu0 0.0
    %242 = vmatpush.msra.mxu0 0.0
    %243 = vmatpush.msra.mxu0 0.0
    %244 = vmatpush.msra.mxu0 0.0
    %245 = vmatpush.msra.mxu0 0.0
    %246 = vmatpush.msra.mxu0 0.0
    %247 = vmatpush.msra.mxu0 0.0
    %248 = vmatpush.msra.mxu0 0.0
    %249 = vmatpush.msra.mxu0 0.0
    %250 = vmatpush.msra.mxu0 0.0
    %251 = vmatpush.msra.mxu0 0.0
    %252 = vmatpush.msra.mxu0 %v210
    %253 = vmatpush.msra.mxu0 %v209
    %254 = vmatpush.msra.mxu0 %v208
    %255 = vmatpush.msra.mxu0 %v207
    %256 = vmatmul.f32.gmra.mxu0 %v229
    %v257 = vpop.f32.mrf.mxu0
    %v258 = vadd.f32 %v226, %v257
    %259 = vmatmul.f32.gmra.mxu0 %v232
    %v260 = vpop.f32.mrf.mxu0
    %v261 = vadd.f32 %v226, %v260
    %262 = vmatmul.f32.gmra.mxu0 %v235
    %v263 = vpop.f32.mrf.mxu0
    %v264 = vadd.f32 %v226, %v263
    %265 = vmatmul.f32.gmra.mxu0 %v238
    %v266 = vpop.f32.mrf.mxu0
    %v267 = vadd.f32 %v226, %v266
    %268 = vdwg.mxu0
    %vm269 = vcmask 523264
    %v270 = vsel %vm269, %v258, 0.0
    %v271 = vsel %vm269, %v261, 0.0
    %v272 = vadd.f32 %v270, %v271
    %v273 = vsel %vm269, %v264, 0.0
    %v274 = vadd.f32 %v272, %v273
    %v275 = vsel %vm269, %v267, 0.0
    %v276 = vadd.f32 %v274, %v275
    %v277 = vrot.slane %v276, 4
    %v278 = vadd.f32 %v276, %v277
    %v279 = vrot.slane %v278, 2
    %v280 = vadd.f32 %v278, %v279
    %v281 = vrot.slane %v280, 1
    %v282 = vadd.f32 %v280, %v281
    %v283 = vmul.f32 %v282, %v150
    %v284 = vsub.f32 %v258, %v283
    %v285 = vsub.f32 %v261, %v283
    %v286 = vsub.f32 %v264, %v283
    %v287 = vsub.f32 %v267, %v283
    %v288 = vmul.f32 %v284, %v284
    %v289 = vmul.f32 %v285, %v285
    %v290 = vmul.f32 %v286, %v286
    %v291 = vmul.f32 %v287, %v287
    %v292 = vsel %vm269, %v288, 0.0
    %v293 = vsel %vm269, %v289, 0.0
    %v294 = vadd.f32 %v292, %v293
    %v295 = vsel %vm269, %v290, 0.0
    %v296 = vadd.f32 %v294, %v295
    %v297 = vsel %vm269, %v291, 0.0
    %v298 = vadd.f32 %v296, %v297
    %v299 = vrot.slane %v298, 4
    %v300 = vadd.f32 %v298, %v299
    %v301 = vrot.slane %v300, 2
    %v302 = vadd.f32 %v300, %v301
    %v303 = vrot.slane %v302, 1
    %v304 = vadd.f32 %v302, %v303
    %v305 = vmul.f32 %v304, %v150
    %v306 = vadd.f32 %v305, 1e-05
    %v307 = vrsqrt.pop %v306
    %v308 = vmul.f32 %v307, %v306
    %v309 = vmul.f32 %v308, %v307
    %v310 = vmul.f32 0.5, %v309
    %v311 = vsub.f32 1.5, %v310
    %v312 = vmul.f32 %v307, %v311
    %vm313 = vweird.f32 %v306
    %vm314 = vweird.f32 %v307
    %vm315 = vmor %vm313, %vm314
    %v316 = vsel %vm315, %v307, %v312
    %v317 = vmul.f32 %v284, %v316
    %v318 = vmul.f32 %v285, %v316
    %v319 = vmul.f32 %v286, %v316
    %v320 = vmul.f32 %v287, %v316
    %v322 = vperm.slane %v212, 0
    %v324 = vmul.f32 %v317, %v322
    %v325 = vmul.f32 %v318, %v322
    %v326 = vmul.f32 %v319, %v322
    %v327 = vmul.f32 %v320, %v322
    %v329 = vperm.slane %v213, 0
    %v331 = vadd.f32 %v324, %v329
    %v332 = vadd.f32 %v325, %v329
    %v333 = vadd.f32 %v326, %v329
    %v334 = vadd.f32 %v327, %v329
    %v335 = vmax.f32 %v331, 0.0
    %v336 = vmax.f32 %v332, 0.0
    %v337 = vmax.f32 %v333, 0.0
    %v338 = vmax.f32 %v334, 0.0
    %v340 = vperm.slane %v222, 0
    %v343 = vsel %vm269, %v335, 0
    %v346 = vsel %vm269, %v336, 0
    %v349 = vsel %vm269, %v337, 0
    %v352 = vsel %vm269, %v338, 0
    %354 = vmatpush.msra.mxu0 0.0
    %355 = vmatpush.msra.mxu0 0.0
    %356 = vmatpush.msra.mxu0 0.0
    %357 = vmatpush.msra.mxu0 0.0
    %358 = vmatpush.msra.mxu0 0.0
    %359 = vmatpush.msra.mxu0 0.0
    %360 = vmatpush.msra.mxu0 0.0
    %361 = vmatpush.msra.mxu0 0.0
    %362 = vmatpush.msra.mxu0 %v221
    %363 = vmatpush.msra.mxu0 %v220
    %364 = vmatpush.msra.mxu0 %v219
    %365 = vmatpush.msra.mxu0 %v218
    %366 = vmatpush.msra.mxu0 %v217
    %367 = vmatpush.msra.mxu0 %v216
    %368 = vmatpush.msra.mxu0 %v215
    %369 = vmatpush.msra.mxu0 %v214
    %370 = vmatmul.f32.gmra.mxu0 %v343
    %v371 = vpop.f32.mrf.mxu0
    %v372 = vadd.f32 %v340, %v371
    %373 = vmatmul.f32.gmra.mxu0 %v346
    %v374 = vpop.f32.mrf.mxu0
    %v375 = vadd.f32 %v340, %v374
    %376 = vmatmul.f32.gmra.mxu0 %v349
    %v377 = vpop.f32.mrf.mxu0
    %v378 = vadd.f32 %v340, %v377
    %379 = vmatmul.f32.gmra.mxu0 %v352
    %v380 = vpop.f32.mrf.mxu0
    %v381 = vadd.f32 %v340, %v380
    %382 = vdwg.mxu0
    %v383 = vsel %vm130, %v372, 0.0
    %v384 = vsel %vm130, %v375, 0.0
    %v385 = vadd.f32 %v383, %v384
    %v386 = vsel %vm130, %v378, 0.0
    %v387 = vadd.f32 %v385, %v386
    %v388 = vsel %vm130, %v381, 0.0
    %v389 = vadd.f32 %v387, %v388
    %v390 = vrot.slane %v389, 4
    %v391 = vadd.f32 %v389, %v390
    %v392 = vrot.slane %v391, 2
    %v393 = vadd.f32 %v391, %v392
    %v394 = vrot.slane %v393, 1
    %v395 = vadd.f32 %v393, %v394
    %v396 = vmul.f32 %v395, %v150
    %v397 = vsub.f32 %v372, %v396
    %v398 = vsub.f32 %v375, %v396
    %v399 = vsub.f32 %v378, %v396
    %v400 = vsub.f32 %v381, %v396
    %v401 = vmul.f32 %v397, %v397
    %v402 = vmul.f32 %v398, %v398
    %v403 = vmul.f32 %v399, %v399
    %v404 = vmul.f32 %v400, %v400
    %v405 = vsel %vm130, %v401, 0.0
    %v406 = vsel %vm130, %v402, 0.0
    %v407 = vadd.f32 %v405, %v406
    %v408 = vsel %vm130, %v403, 0.0
    %v409 = vadd.f32 %v407, %v408
    %v410 = vsel %vm130, %v404, 0.0
    %v411 = vadd.f32 %v409, %v410
    %v412 = vrot.slane %v411, 4
    %v413 = vadd.f32 %v411, %v412
    %v414 = vrot.slane %v413, 2
    %v415 = vadd.f32 %v413, %v414
    %v416 = vrot.slane %v415, 1
    %v417 = vadd.f32 %v415, %v416
    %v418 = vmul.f32 %v417, %v150
    %v419 = vadd.f32 %v418, 1e-05
    %v420 = vrsqrt.pop %v419
    %v421 = vmul.f32 %v420, %v419
    %v422 = vmul.f32 %v421, %v420
    %v423 = vmul.f32 0.5, %v422
    %v424 = vsub.f32 1.5, %v423
    %v425 = vmul.f32 %v420, %v424
    %vm426 = vweird.f32 %v419
    %vm427 = vweird.f32 %v420
    %vm428 = vmor %vm426, %vm427
    %v429 = vsel %vm428, %v420, %v425
    %v430 = vmul.f32 %v397, %v429
    %v431 = vmul.f32 %v398, %v429
    %v432 = vmul.f32 %v399, %v429
    %v433 = vmul.f32 %v400, %v429
    %v435 = vperm.slane %v223, 0
    %v437 = vmul.f32 %v430, %v435
    %v438 = vmul.f32 %v431, %v435
    %v439 = vmul.f32 %v432, %v435
    %v440 = vmul.f32 %v433, %v435
    %v442 = vperm.slane %v224, 0
    %v444 = vadd.f32 %v437, %v442
    %v445 = vadd.f32 %v438, %v442
    %v446 = vadd.f32 %v439, %v442
    %v447 = vadd.f32 %v440, %v442
    %v448 = vld [vmem:[%s13] sm:$0xff]
    %v449 = vld [vmem:[%s13 + $0x8] sm:$0xff]
    %v450 = vld [vmem:[%s13 + $0x10] sm:$0xff]
    %v451 = vld [vmem:[%s13 + $0x18] sm:$0xff]
    %v452 = vld [vmem:[%s14] sm:$0x1]
    %453 = vxpose.xlu0.b32.start [1/16] %v444, 128
    %454 = vxpose.xlu0.b32.cont [2/16] %v445, 128
    %455 = vxpose.xlu0.b32.cont [3/16] 0.0, 128
    %456 = vxpose.xlu0.b32.cont [4/16] 0.0, 128
    %457 = vxpose.xlu0.b32.cont [5/16] 0.0, 128
    %458 = vxpose.xlu0.b32.cont [6/16] 0.0, 128
    %459 = vxpose.xlu0.b32.cont [7/16] 0.0, 128
    %460 = vxpose.xlu0.b32.cont [8/16] 0.0, 128
    %461 = vxpose.xlu0.b32.cont [9/16] 0.0, 128
    %462 = vxpose.xlu0.b32.cont [10/16] 0.0, 128
    %463 = vxpose.xlu0.b32.cont [11/16] 0.0, 128
    %464 = vxpose.xlu0.b32.cont [12/16] 0.0, 128
    %465 = vxpose.xlu0.b32.cont [13/16] 0.0, 128
    %466 = vxpose.xlu0.b32.cont [14/16] 0.0, 128
    %467 = vxpose.xlu0.b32.cont [15/16] 0.0, 128
    %468 = vxpose.xlu0.b32.end [16/16] 0.0, 128
    %v469 = vpop.trf.xlu0
    %v470 = vpop.trf.xlu0
    %v471 = vpop.trf.xlu0
    %v472 = vpop.trf.xlu0
    %v473 = vpop.trf.xlu0
    %v474 = vpop.trf.xlu0
    %v475 = vpop.trf.xlu0
    %v476 = vpop.trf.xlu0
    %v477 = vpop.trf.xlu0
    %v478 = vpop.trf.xlu0
    %v479 = vpop.trf.xlu0
    %v480 = vpop.trf.xlu0
    %v481 = vpop.trf.xlu0
    %v482 = vpop.trf.xlu0
    %v483 = vpop.trf.xlu0
    %v484 = vpop.trf.xlu0
    %v485 = vmul.f32 %v469, %v448
    %v486 = vmul.f32 %v470, %v449
    %v487 = vmul.f32 %v471, %v450
    %v488 = vmul.f32 %v472, %v451
    %vm489 = vcmask 130048
    %v490 = vsel %vm489, %v485, 0.0
    %v491 = vsel %vm489, %v486, 0.0
    %v492 = vadd.f32 %v490, %v491
    %v493 = vsel %vm489, %v487, 0.0
    %v494 = vadd.f32 %v492, %v493
    %v495 = vsel %vm489, %v488, 0.0
    %v496 = vadd.f32 %v494, %v495
    %v497 = vrot.slane %v496, 4
    %v498 = vadd.f32 %v496, %v497
    %v499 = vrot.slane %v498, 2
    %v500 = vadd.f32 %v498, %v499
    %v501 = vrot.slane %v500, 1
    %v502 = vadd.f32 %v500, %v501
    %v503 = vadd.f32 %v502, %v452
    %504 = vxpose.xlu0.b32.start [1/16] %v446, 128
    %505 = vxpose.xlu0.b32.cont [2/16] %v447, 128
    %506 = vxpose.xlu0.b32.cont [3/16] 0.0, 128
    %507 = vxpose.xlu0.b32.cont [4/16] 0.0, 128
    %508 = vxpose.xlu0.b32.cont [5/16] 0.0, 128
    %509 = vxpose.xlu0.b32.cont [6/16] 0.0, 128
    %510 = vxpose.xlu0.b32.cont [7/16] 0.0, 128
    %511 = vxpose.xlu0.b32.cont [8/16] 0.0, 128
    %512 = vxpose.xlu0.b32.cont [9/16] 0.0, 128
    %513 = vxpose.xlu0.b32.cont [10/16] 0.0, 128
    %514 = vxpose.xlu0.b32.cont [11/16] 0.0, 128
    %515 = vxpose.xlu0.b32.cont [12/16] 0.0, 128
    %516 = vxpose.xlu0.b32.cont [13/16] 0.0, 128
    %517 = vxpose.xlu0.b32.cont [14/16] 0.0, 128
    %518 = vxpose.xlu0.b32.cont [15/16] 0.0, 128
    %519 = vxpose.xlu0.b32.end [16/16] 0.0, 128
    %v520 = vpop.trf.xlu0
    %v521 = vpop.trf.xlu0
    %v522 = vpop.trf.xlu0
    %v523 = vpop.trf.xlu0
    %v524 = vpop.trf.xlu0
    %v525 = vpop.trf.xlu0
    %v526 = vpop.trf.xlu0
    %v527 = vpop.trf.xlu0
    %v528 = vpop.trf.xlu0
    %v529 = vpop.trf.xlu0
    %v530 = vpop.trf.xlu0
    %v531 = vpop.trf.xlu0
    %v532 = vpop.trf.xlu0
    %v533 = vpop.trf.xlu0
    %v534 = vpop.trf.xlu0
    %v535 = vpop.trf.xlu0
    %v536 = vmul.f32 %v520, %v448
    %v537 = vmul.f32 %v521, %v449
    %v538 = vmul.f32 %v522, %v450
    %v539 = vmul.f32 %v523, %v451
    %v540 = vsel %vm489, %v536, 0.0
    %v541 = vsel %vm489, %v537, 0.0
    %v542 = vadd.f32 %v540, %v541
    %v543 = vsel %vm489, %v538, 0.0
    %v544 = vadd.f32 %v542, %v543
    %v545 = vsel %vm489, %v539, 0.0
    %v546 = vadd.f32 %v544, %v545
    %v547 = vrot.slane %v546, 4
    %v548 = vadd.f32 %v546, %v547
    %v549 = vrot.slane %v548, 2
    %v550 = vadd.f32 %v548, %v549
    %v551 = vrot.slane %v550, 1
    %v552 = vadd.f32 %v550, %v551
    %v553 = vadd.f32 %v552, %v452
    %v555 = vrot.slane %v553, 7
    %vm557 = vcmask 1040384
    %v558 = vsel %vm557, %v503, %v555
    %v559 = vld [vmem:[%s15] sm:$0xff]
    %v560 = vld [vmem:[%s15 + $0x8] sm:$0xff]
    %v561 = vld [vmem:[%s16] sm:$0x1]
    %v562 = vld [vmem:[%s17] sm:$0x1]
    %v563 = vld [vmem:[%s18] sm:$0x1]
    %v564 = vld [vmem:[%s19] sm:$0xff]
    %v565 = vld [vmem:[%s19 + $0x8] sm:$0xff]
    %v566 = vld [vmem:[%s19 + $0x10] sm:$0xff]
    %v567 = vld [vmem:[%s19 + $0x18] sm:$0xff]
    %v568 = vld [vmem:[%s20] sm:$0x1]
    %v569 = vld [vmem:[%s21] sm:$0x1]
    %v570 = vld [vmem:[%s22] sm:$0x1]
    %v572 = vperm.slane %v561, 0
    %v575 = vsel %vm489, %v558, 0
    %577 = vmatpush.msra.mxu0 0.0
    %578 = vmatpush.msra.mxu0 0.0
    %579 = vmatpush.msra.mxu0 0.0
    %580 = vmatpush.msra.mxu0 0.0
    %581 = vmatpush.msra.mxu0 0.0
    %582 = vmatpush.msra.mxu0 0.0
    %583 = vmatpush.msra.mxu0 0.0
    %584 = vmatpush.msra.mxu0 0.0
    %585 = vmatpush.msra.mxu0 0.0
    %586 = vmatpush.msra.mxu0 0.0
    %587 = vmatpush.msra.mxu0 0.0
    %588 = vmatpush.msra.mxu0 0.0
    %589 = vmatpush.msra.mxu0 0.0
    %590 = vmatpush.msra.mxu0 0.0
    %591 = vmatpush.msra.mxu0 %v560
    %592 = vmatpush.msra.mxu0 %v559
    %593 = vmatmul.f32.gmra.mxu0 %v575
    %v594 = vpop.f32.mrf.mxu0
    %v595 = vadd.f32 %v572, %v594
    %596 = vdwg.mxu0
    %vm597 = vcmask 254976
    %v598 = vsel %vm597, %v595, 0.0
    %v599 = vrot.slane %v598, 4
    %v600 = vadd.f32 %v598, %v599
    %v601 = vrot.slane %v600, 2
    %v602 = vadd.f32 %v600, %v601
    %v603 = vrot.slane %v602, 1
    %v604 = vadd.f32 %v602, %v603
    %v605 = vrcp.pop 2.0
    %v606 = vmul.f32 2.0, %v605
    %v607 = vsub.f32 1.0, %v606
    %v608 = vmul.f32 %v605, %v607
    %v609 = vadd.f32 %v605, %v608
    %vm610 = vweird.f32 %v605
    %v611 = vsel %vm610, %v605, %v609
    %v612 = vmul.f32 %v604, %v611
    %v613 = vsub.f32 %v595, %v612
    %v614 = vmul.f32 %v613, %v613
    %v615 = vsel %vm597, %v614, 0.0
    %v616 = vrot.slane %v615, 4
    %v617 = vadd.f32 %v615, %v616
    %v618 = vrot.slane %v617, 2
    %v619 = vadd.f32 %v617, %v618
    %v620 = vrot.slane %v619, 1
    %v621 = vadd.f32 %v619, %v620
    %v622 = vmul.f32 %v621, %v611
    %v623 = vadd.f32 %v622, 1e-05
    %v624 = vrsqrt.pop %v623
    %v625 = vmul.f32 %v624, %v623
    %v626 = vmul.f32 %v625, %v624
    %v627 = vmul.f32 0.5, %v626
    %v628 = vsub.f32 1.5, %v627
    %v629 = vmul.f32 %v624, %v628
    %vm630 = vweird.f32 %v623
    %vm631 = vweird.f32 %v624
    %vm632 = vmor %vm630, %vm631
    %v633 = vsel %vm632, %v624, %v629
    %v634 = vmul.f32 %v613, %v633
    %v636 = vperm.slane %v562, 0
    %v638 = vmul.f32 %v634, %v636
    %v640 = vperm.slane %v563, 0
    %v642 = vadd.f32 %v638, %v640
    %v643 = vmax.f32 %v642, 0.0
    %v645 = vperm.slane %v568, 0
    %v648 = vsel %vm130, %v643, 0
    %650 = vmatpush.msra.mxu0 0.0
    %651 = vmatpush.msra.mxu0 0.0
    %652 = vmatpush.msra.mxu0 0.0
    %653 = vmatpush.msra.mxu0 0.0
    %654 = vmatpush.msra.mxu0 0.0
    %655 = vmatpush.msra.mxu0 0.0
    %656 = vmatpush.msra.mxu0 0.0
    %657 = vmatpush.msra.mxu0 0.0
    %658 = vmatpush.msra.mxu0 0.0
    %659 = vmatpush.msra.mxu0 0.0
    %660 = vmatpush.msra.mxu0 0.0
    %661 = vmatpush.msra.mxu0 0.0
    %662 = vmatpush.msra.mxu0 %v567
    %663 = vmatpush.msra.mxu0 %v566
    %664 = vmatpush.msra.mxu0 %v565
    %665 = vmatpush.msra.mxu0 %v564
    %666 = vmatmul.f32.gmra.mxu0 %v648
    %v667 = vpop.f32.mrf.mxu0
    %v668 = vadd.f32 %v645, %v667
    %669 = vdwg.mxu0
    %v670 = vsel %vm597, %v668, 0.0
    %v671 = vrot.slane %v670, 4
    %v672 = vadd.f32 %v670, %v671
    %v673 = vrot.slane %v672, 2
    %v674 = vadd.f32 %v672, %v673
    %v675 = vrot.slane %v674, 1
    %v676 = vadd.f32 %v674, %v675
    %v677 = vmul.f32 %v676, %v611
    %v678 = vsub.f32 %v668, %v677
    %v679 = vmul.f32 %v678, %v678
    %v680 = vsel %vm597, %v679, 0.0
    %v681 = vrot.slane %v680, 4
    %v682 = vadd.f32 %v680, %v681
    %v683 = vrot.slane %v682, 2
    %v684 = vadd.f32 %v682, %v683
    %v685 = vrot.slane %v684, 1
    %v686 = vadd.f32 %v684, %v685
    %v687 = vmul.f32 %v686, %v611
    %v688 = vadd.f32 %v687, 1e-05
    %v689 = vrsqrt.pop %v688
    %v690 = vmul.f32 %v689, %v688
    %v691 = vmul.f32 %v690, %v689
    %v692 = vmul.f32 0.5, %v691
    %v693 = vsub.f32 1.5, %v692
    %v694 = vmul.f32 %v689, %v693
    %vm695 = vweird.f32 %v688
    %vm696 = vweird.f32 %v689
    %vm697 = vmor %vm695, %vm696
    %v698 = vsel %vm697, %v689, %v694
    %v699 = vmul.f32 %v678, %v698
    %v701 = vperm.slane %v569, 0
    %v703 = vmul.f32 %v699, %v701
    %v705 = vperm.slane %v570, 0
    %v707 = vadd.f32 %v703, %v705
    %v708 = vld [vmem:[%s23] sm:$0x1]
    %v710 = vperm.slane %v708, 0
    %v712 = vmul.f32 %v558, %v710
    %v713 = vld [vmem:[%s24] sm:$0xff]
    %v714 = vld [vmem:[%s24 + $0x8] sm:$0xff]
    %v715 = vld [vmem:[%s24 + $0x10] sm:$0xff]
    %v716 = vld [vmem:[%s24 + $0x18] sm:$0xff]
    %v718 = vsel %vm130, %v707, 0
    %720 = vmatpush.msra.mxu0 0.0
    %721 = vmatpush.msra.mxu0 0.0
    %722 = vmatpush.msra.mxu0 0.0
    %723 = vmatpush.msra.mxu0 0.0
    %724 = vmatpush.msra.mxu0 0.0
    %725 = vmatpush.msra.mxu0 0.0
    %726 = vmatpush.msra.mxu0 0.0
    %727 = vmatpush.msra.mxu0 0.0
    %728 = vmatpush.msra.mxu0 0.0
    %729 = vmatpush.msra.mxu0 0.0
    %730 = vmatpush.msra.mxu0 0.0
    %731 = vmatpush.msra.mxu0 0.0
    %732 = vmatpush.msra.mxu0 %v716
    %733 = vmatpush.msra.mxu0 %v715
    %734 = vmatpush.msra.mxu0 %v714
    %735 = vmatpush.msra.mxu0 %v713
    %736 = vmatmul.f32.gmra.mxu0 %v718
    %v737 = vpop.f32.mrf.mxu0
    %v738 = vadd.f32 0.0, %v737
    %739 = vdwg.mxu0
    %v740 = vadd.f32 %v712, %v738
    %v741 = vld [vmem:[%s25] sm:$0x1]
    %v743 = vperm.slane %v741, 0
    %v745 = vadd.f32 %v740, %v743
    %v746 = vld [vmem:[%s26] sm:$0x3]
    %v747 = vadd.f32 %v745, %v746
    %vm748 = vcmask 123904
    %749 = vst.msk [vmem:[#allocation2] sm:$0x3] %vm748, %v747
    // Predicated region
    $region110: #{_gears_forward_jit.3} parent=1 // pred_check
      _
    $region111: #{_gears_forward_jit.3} parent=1 // pred_check_branch
      %751 = sbr.rel (0) target = $region113
    $region112: #{_gears_forward_jit.3} parent=1 // pred_region
      %753 = vsyncadd [#allocation3], 0
      %s755 = sshll.u32 [#allocation2], 4
      %s756 = int_to_ptr.vmem [resolvable:$true] %s755
      %s757 = sshll.u32 %s27, 4
      %s758 = int_to_ptr.hbm [resolvable:$true] %s757
      %760 = dma.vmem_to_hbm [thread:$0]  %s756, 32, %s758, [#allocation3]
    $region113: #{_gears_forward_jit.3} parent=1 // pred_fallthru
      _
    // Predicated region
    $region114: #{_gears_forward_jit.3} parent=1 // pred_check
      _
    $region115: #{_gears_forward_jit.3} parent=1 // pred_check_branch
      %762 = sbr.rel (0) target = $region117
    $region116: #{_gears_forward_jit.3} parent=1 // pred_region
      %764 = dma.done [#allocation3], 32
    $region117: #{_gears_forward_jit.3} parent=1 // pred_fallthru
      _
    %765 = vsyncpa [#allocation3], 1

</llo_original>
